<compile_context>
chip_gen: v6e
topology: v6e:2x2x1
jax: 0.10.0
libtpu: 0.0.40
codegen_flags: <defaults>
</compile_context>

<pallas_src>
import jax
import jax.numpy as jnp
import numpy as np
from jax.experimental import pallas as pl
from jax.experimental.pallas import tpu as pltpu

ALPHA = 0.2       # LeakyReLU negative slope
NEG_BIG = -9e15   # must stay in f32 (overflows bf16)


def _round_up(x, m):
    return ((x + m - 1) // m) * m


def gat_forward(x, A, a, *, block_nt=256):
    """x: (N, C, T, V) float32, A: (K, V, V), a: (2C, 1). Returns (N, C, T, V)."""
    N, C, T, V = x.shape
    NT, VC, VV = N * T, V * C, V * V
    dtype = x.dtype

    # ---- wrapper-side preprocessing (tiny, done once) ------------------------
    x_p = jnp.transpose(x, (0, 2, 3, 1)).reshape(NT, VC)     # lane-dense slab

    A_sum = jnp.sum(A, axis=0)                               # (V, V)
    # additive mask bias: 0 where edge present, -9e15 otherwise
    bias = jnp.where(A_sum > 0, 0.0, NEG_BIG).astype(jnp.float32).reshape(1, VV)

    a1 = a[:C, 0].astype(jnp.float32)                        # (C,)
    a2 = a[C:, 0].astype(jnp.float32)                        # (C,)
    eye_v = jnp.eye(V, dtype=jnp.float32)
    # M[v*C+c, i*V+j] = a1[c]*[v==i] + a2[c]*[v==j]
    #   => (x_flat @ M)[b, i*V+j] = f[b,i] + g[b,j]
    m_mat = (eye_v[:, None, :, None] * a1[None, :, None, None]
             + eye_v[:, None, None, :] * a2[None, :, None, None]).reshape(VC, VV)

    # ---- batching / padding ---------------------------------------------------
    tb = _round_up(min(block_nt, NT), 8)       # TB tiles per grid step
    nt_pad = _round_up(NT, tb)
    if nt_pad != NT:
        x_p = jnp.pad(x_p, ((0, nt_pad - NT), (0, 0)))
    grid = (nt_pad // tb,)

    def _gat_kernel(x_ref, m_ref, bias_ref, o_ref):
        # x_ref:    (tb, V*C)  lane-dense batch of node-feature tiles
        # m_ref:    (V*C, V*V) fused projection matrix (f_i + g_j in one matmul)
        # bias_ref: (1, V*V)   additive adjacency mask
        # o_ref:    (tb, V*C)
        x2d = x_ref[...]                                                    # (tb, VC)

        # e[b, i*V+j] = f[b,i] + g[b,j]  -- single 2-D MXU matmul
        e = jnp.dot(x2d, m_ref[...], preferred_element_type=jnp.float32)    # (tb, VV)
        e = jnp.where(e > 0, e, ALPHA * e)                                  # LeakyReLU
        e = e + bias_ref[...]                                               # mask as bias

        # softmax over j (per (b, i) row), un-normalized
        e3 = e.reshape(tb, V, V)
        m = jnp.max(e3, axis=-1, keepdims=True)                             # (tb, V, 1)
        p = jnp.exp(e3 - m)                                                 # (tb, V, V)
        l = jnp.sum(p, axis=-1, keepdims=True)                              # (tb, V, 1)

        # batched att @ x, then flash-style normalization of the (V, C) output
        x3 = x2d.reshape(tb, V, C)
        o3 = jnp.einsum('bij,bjc->bic', p, x3,
                        preferred_element_type=jnp.float32)                 # (tb, V, C)
        o3 = o3 * pl.reciprocal(l, approx=False)   # approx=True trades a few ulps for EUP

        o_ref[...] = o3.reshape(tb, VC).astype(o_ref.dtype)

    out = pl.pallas_call(
        _gat_kernel,
        out_shape=jax.ShapeDtypeStruct((nt_pad, VC), dtype),
        grid_spec=pltpu.PrefetchScalarGridSpec(
            num_scalar_prefetch=0,
            grid=grid,
            in_specs=[
                pl.BlockSpec((tb, VC), lambda i: (i, 0)),
                pl.BlockSpec((VC, VV), lambda i: (0, 0)),
                pl.BlockSpec((1, VV), lambda i: (0, 0)),
            ],
            out_specs=pl.BlockSpec((tb, VC), lambda i: (i, 0)),
        ),
        compiler_params=pltpu.CompilerParams(
            dimension_semantics=("parallel",),
        ),
    )(x_p, m_mat, bias)

    out = out[:NT].reshape(N, T, V, C)
    return jnp.transpose(out, (0, 3, 1, 2))


def gat_reference(x, A, a):
    """Pure-JAX reference mirroring the PyTorch forward."""
    N, C, T, V = x.shape
    xp = jnp.transpose(x, (0, 2, 3, 1))                 # (N, T, V, C)
    A_sum = jnp.sum(A, axis=0)                          # (V, V)
    f = xp @ a[:C]                                      # (N, T, V, 1)
    g = xp @ a[C:]                                      # (N, T, V, 1)
    e = f + jnp.swapaxes(g, -1, -2)                     # (N, T, V, V)
    e = jnp.where(e > 0, e, ALPHA * e)
    e = jnp.where(A_sum[None, None] > 0, e, NEG_BIG)
    att = jax.nn.softmax(e, axis=-1)
    out = att @ xp                                      # (N, T, V, C)
    return jnp.transpose(out, (0, 3, 1, 2))


if __name__ == "__main__":
    key = jax.random.PRNGKey(0)
    N, C, T, V, K = 2, 8, 12, 16, 3

    k_x, k_A, k_a = jax.random.split(key, 3)
    x = jax.random.normal(k_x, (N, C, T, V), dtype=jnp.float32)
    # adjacency-like tensor with some zeros so the mask matters
    A = (jax.random.uniform(k_A, (K, V, V)) > 0.5).astype(jnp.float32)

    # xavier_uniform_ with gain=1.414 on shape (2C, 1): fan_in=1, fan_out=2C
    bound = 1.414 * np.sqrt(6.0 / (2 * C + 1))
    a = jax.random.uniform(k_a, (2 * C, 1), minval=-bound, maxval=bound,
                           dtype=jnp.float32)

    # block_nt=16 exercises a multi-step parallel grid plus row padding
    # (N*T = 24 -> padded to 32, grid = 2); real workloads use the default 256.
    out = gat_forward(x, A, a, block_nt=16)
    out = jax.block_until_ready(out)

    ref = gat_reference(x, A, a)
    np.testing.assert_allclose(np.asarray(out), np.asarray(ref),
                               rtol=1e-4, atol=1e-4)

    print("KERNEL_OK")
</pallas_src>

<mosaic_0001>
module attributes {stable_mosaic.version = 11 : i64} {
  func.func @_gat_kernel(%arg0: i32, %arg1: memref<16x128xf32, #tpu.memory_space<vmem>>, %arg2: memref<128x256xf32, #tpu.memory_space<vmem>>, %arg3: memref<1x256xf32, #tpu.memory_space<vmem>>, %arg4: memref<16x128xf32, #tpu.memory_space<vmem>>) attributes {dimension_semantics = [#tpu.dimension_semantics<parallel>], iteration_bounds = array<i64: 2>, scalar_prefetch = 0 : i64, scratch_operands = 0 : i64, tpu.core_type = #tpu.core_type<tc>, window_params = [{transform_indices = @transform_0, window_bounds = array<i64: 16, 128>}, {pipeline_mode = #tpu.pipeline_mode<synchronous>, transform_indices = @transform_1, window_bounds = array<i64: 128, 256>}, {pipeline_mode = #tpu.pipeline_mode<synchronous>, transform_indices = @transform_2, window_bounds = array<i64: 1, 256>}, {transform_indices = @transform_3, window_bounds = array<i64: 16, 128>}]} {
    %c0 = arith.constant 0 : index
    %c0_0 = arith.constant 0 : index
    %0 = vector.load %arg1[%c0, %c0_0] : memref<16x128xf32, #tpu.memory_space<vmem>>, vector<16x128xf32>
    %c0_1 = arith.constant 0 : index
    %c0_2 = arith.constant 0 : index
    %1 = vector.load %arg2[%c0_1, %c0_2] : memref<128x256xf32, #tpu.memory_space<vmem>>, vector<128x256xf32>
    %cst = arith.constant dense<0.000000e+00> : vector<16x256xf32>
    %2 = tpu.matmul %0, %1, %cst {dimension_numbers = #tpu.dot_dimension_numbers<[1], [0], [0], [1], [0, 0, 1, 1], [], []>} : vector<16x128xf32>, vector<128x256xf32>, vector<16x256xf32> -> vector<16x256xf32>
    %cst_3 = arith.constant 0.000000e+00 : f32
    %3 = vector.broadcast %cst_3 : f32 to vector<16x256xf32>
    %4 = arith.cmpf ogt, %2, %3 : vector<16x256xf32>
    %cst_4 = arith.constant 2.000000e-01 : f32
    %5 = vector.broadcast %cst_4 : f32 to vector<16x256xf32>
    %6 = arith.mulf %5, %2 : vector<16x256xf32>
    %7 = arith.select %4, %2, %6 : vector<16x256xi1>, vector<16x256xf32>
    %c0_5 = arith.constant 0 : index
    %c0_6 = arith.constant 0 : index
    %8 = vector.load %arg3[%c0_5, %c0_6] : memref<1x256xf32, #tpu.memory_space<vmem>>, vector<1x256xf32>
    %9 = vector.broadcast %8 : vector<1x256xf32> to vector<16x256xf32>
    %10 = arith.addf %7, %9 : vector<16x256xf32>
    %11 = vector.shape_cast %10 : vector<16x256xf32> to vector<16x16x16xf32>
    %cst_7 = arith.constant dense<0xFF800000> : vector<16x16xf32>
    %12 = vector.multi_reduction <maximumf>, %11, %cst_7 [2] : vector<16x16x16xf32> to vector<16x16xf32>
    %13 = vector.shape_cast %12 : vector<16x16xf32> to vector<16x16x1xf32>
    %14 = vector.broadcast %13 : vector<16x16x1xf32> to vector<16x16x16xf32>
    %15 = arith.subf %11, %14 : vector<16x16x16xf32>
    %16 = math.exp %15 : vector<16x16x16xf32>
    %cst_8 = arith.constant dense<0.000000e+00> : vector<16x16xf32>
    %17 = vector.multi_reduction <add>, %16, %cst_8 [2] : vector<16x16x16xf32> to vector<16x16xf32>
    %18 = vector.shape_cast %17 : vector<16x16xf32> to vector<16x16x1xf32>
    %19 = vector.shape_cast %0 : vector<16x128xf32> to vector<16x16x8xf32>
    "tpu.trace_start"() <{level = 10 : i32, message = "bij,bjc->bic"}> : () -> ()
    %cst_9 = arith.constant dense<0.000000e+00> : vector<16x16x8xf32>
    %20 = tpu.matmul %16, %19, %cst_9 {dimension_numbers = #tpu.dot_dimension_numbers<[2], [1], [1], [2], [0, 0, 0, 1, 1, 2], [0], [0]>} : vector<16x16x16xf32>, vector<16x16x8xf32>, vector<16x16x8xf32> -> vector<16x16x8xf32>
    "tpu.trace_stop"() : () -> ()
    %21 = tpu.reciprocal %18 : vector<16x16x1xf32> -> vector<16x16x1xf32>
    %22 = vector.broadcast %21 : vector<16x16x1xf32> to vector<16x16x8xf32>
    %23 = arith.mulf %20, %22 : vector<16x16x8xf32>
    %24 = vector.shape_cast %23 : vector<16x16x8xf32> to vector<16x128xf32>
    %c0_10 = arith.constant 0 : index
    %c0_11 = arith.constant 0 : index
    %25 = vector.load %arg4[%c0_10, %c0_11] : memref<16x128xf32, #tpu.memory_space<vmem>>, vector<16x128xf32>
    tpu.vector_store %arg4[%c0_10, %c0_11], %24 {strides = array<i32>} : memref<16x128xf32, #tpu.memory_space<vmem>>, vector<16x128xf32>,
    return
  }
  func.func @transform_0(%arg0: i32) -> (i32, i32) {
    %c0_i32 = arith.constant 0 : i32
    %c0_i32_0 = arith.constant 0 : i32
    return %arg0, %c0_i32 : i32, i32
  }
  func.func @transform_1(%arg0: i32) -> (i32, i32) {
    %c0_i32 = arith.constant 0 : i32
    %c0_i32_0 = arith.constant 0 : i32
    %c0_i32_1 = arith.constant 0 : i32
    return %c0_i32, %c0_i32_0 : i32, i32
  }
  func.func @transform_2(%arg0: i32) -> (i32, i32) {
    %c0_i32 = arith.constant 0 : i32
    %c0_i32_0 = arith.constant 0 : i32
    %c0_i32_1 = arith.constant 0 : i32
    return %c0_i32, %c0_i32_0 : i32, i32
  }
  func.func @transform_3(%arg0: i32) -> (i32, i32) {
    %c0_i32 = arith.constant 0 : i32
    %c0_i32_0 = arith.constant 0 : i32
    return %arg0, %c0_i32 : i32, i32
  }
}

</mosaic_0001>

<llo_original>
// kernel: tpu_custom_call.1
$region0: #{tpu_custom_call.1}
  #allocation0 [shape = 'u32[]', space=smem, size = 0x4, offset = 0x4, fixed_abs, tag = 'smem constant byte address 0x4 - core index']
  #allocation1 [shape = 'u32[144,128]{1,0:T(1,128)}', space=vmem, size = 0x12000, scoped, tag = 'internal scratch']
  %s0 = inlined_call_operand.hbm [shape: f32[32,128], index: 0, kind: input, shape index: {}]
  %s1 = inlined_call_operand.hbm [shape: f32[128,256], index: 1, kind: input, shape index: {}]
  %s2 = inlined_call_operand.vmem [shape: f32[1,256], index: 2, kind: input, shape index: {}]
  %s3 = inlined_call_operand.hbm [shape: f32[32,128], index: 3, kind: output, shape index: {}]
  %s4 = sld [smem:[#allocation0]]
  $region53: #{tpu_custom_call.1} parent=0
    _
  %s6 = ssub.s32 1, %s4
  %s7 = scalar_select 0, %s6, %s4
  $region1: #{tpu_custom_call.1} parent=0
    #allocation2 [shape = 'u8[16384]{0}', space=vmem, size = 0x4000, scoped, tag = 'input window, operand 0']
    #allocation3 [shape = 's32[2]{0}', space=sflag, size = 0x8, scoped, tag = 'scoped memory for tpu_custom_call.1']
    #allocation4 [shape = 's32[2]{0}', space=sflag, size = 0x8, scoped, tag = 'scoped memory for tpu_custom_call.1']
    #allocation5 [shape = 'u8[131072]{0}', space=vmem, size = 0x20000, scoped, tag = 'input window, operand 1, single buffered']
    #allocation6 [shape = 's32[1]{0}', space=sflag, size = 0x4, scoped, tag = 'scoped memory for tpu_custom_call.1']
    #allocation7 [shape = 'u8[16384]{0}', space=vmem, size = 0x4000, scoped, tag = 'output window, operand 0']
    %8 = vsyncpa [#allocation3], 0
    %s9 = scalar_lea.sflag [#allocation3], 1
    %10 = vsyncpa %s9, 0
    %11 = vsyncpa [#allocation6], 0
    %12 = vsyncpa [#allocation4], 0
    %s13 = scalar_lea.sflag [#allocation4], 1
    %14 = vsyncpa %s13, 0
    loop: start=0, step=1, limit=4
    $region2: #{tpu_custom_call.1} parent=1 // loop_pre_header
      _
    $region3: #{tpu_custom_call.1} parent=1 // loop_header
      %s16 = sphi 0, %s20
      %p17 = scmp.ge.s32.totalorder %s16, 4
      %s26 = sphi 0, %s28
      %s29 = sphi 0, %s26
      %s30 = sphi 0, %s29
      %s46 = sphi 0, %s30
      %s50 = sphi 0, %s50
      %s52 = sphi 0, %s50
      %s53 = sphi 0, %s52
      %s67 = sphi 0, %s53
      %s71 = sphi 0, %s71
      %s73 = sphi 0, %s71
      %s74 = sphi 0, %s73
      %s88 = sphi 0, %s74
      %s94 = sphi 0, %s96
      %s97 = sphi 0, %s94
      %s98 = sphi 0, %s97
      %s114 = sphi 0, %s98
    $region4: #{tpu_custom_call.1} parent=1 // loop_header_branch
      %19 = sbr.rel (%p17) target = $region8
    $region5: #{tpu_custom_call.1} parent=1 // loop_body
      %s21 = ssub.s32 %s16, 1
      %s22 = ssub.s32 %s16, 2
      %s23 = sadd.s32 %s16, 1
      %s24 = ssub.s32 %s16, %s23
      %p25 = scmp.eq.s32.totalorder %s24, 0
      %s27 = sadd.s32 %s26, 1
      %s28 = scalar_select %p25, %s26, %s27
      %p31 = pneg %p25
      %p32 = scmp.eq.s32.totalorder %s16, 1
      %p33 = por %p31, %p32
      %p34 = scmp.ne.s32.totalorder %s26, %s29
      %p35 = scmp.eq.s32.totalorder %s16, 0
      %p36 = por %p34, %p35
      %p37 = scmp.ne.s32.totalorder %s26, %s29
      %p38 = scmp.eq.s32.totalorder %s21, 1
      %p39 = por %p37, %p38
      %p40 = scmp.ne.s32.totalorder %s29, %s30
      %p41 = scmp.eq.s32.totalorder %s21, 0
      %p42 = por %p40, %p41
      %p43 = scmp.ne.s32.totalorder %s29, %s30
      %p44 = scmp.eq.s32.totalorder %s22, 1
      %p45 = por %p43, %p44
      %p47 = scmp.ne.s32.totalorder %s30, %s46
      %p48 = scmp.eq.s32.totalorder %s22, 0
      %p49 = por %p47, %p48
      %s51 = sadd.s32 %s50, 1
      %p54 = scmp.eq.s32.totalorder %s16, 1
      %p55 = scmp.ne.s32.totalorder %s50, %s52
      %p56 = scmp.eq.s32.totalorder %s16, 0
      %p57 = por %p55, %p56
      %p58 = scmp.ne.s32.totalorder %s50, %s52
      %p59 = scmp.eq.s32.totalorder %s21, 1
      %p60 = por %p58, %p59
      %p61 = scmp.ne.s32.totalorder %s52, %s53
      %p62 = scmp.eq.s32.totalorder %s21, 0
      %p63 = por %p61, %p62
      %p64 = scmp.ne.s32.totalorder %s52, %s53
      %p65 = scmp.eq.s32.totalorder %s22, 1
      %p66 = por %p64, %p65
      %p68 = scmp.ne.s32.totalorder %s53, %s67
      %p69 = scmp.eq.s32.totalorder %s22, 0
      %p70 = por %p68, %p69
      %s72 = sadd.s32 %s71, 1
      %p75 = scmp.eq.s32.totalorder %s16, 1
      %p76 = scmp.ne.s32.totalorder %s71, %s73
      %p77 = scmp.eq.s32.totalorder %s16, 0
      %p78 = por %p76, %p77
      %p79 = scmp.ne.s32.totalorder %s71, %s73
      %p80 = scmp.eq.s32.totalorder %s21, 1
      %p81 = por %p79, %p80
      %p82 = scmp.ne.s32.totalorder %s73, %s74
      %p83 = scmp.eq.s32.totalorder %s21, 0
      %p84 = por %p82, %p83
      %p85 = scmp.ne.s32.totalorder %s73, %s74
      %p86 = scmp.eq.s32.totalorder %s22, 1
      %p87 = por %p85, %p86
      %p89 = scmp.ne.s32.totalorder %s74, %s88
      %p90 = scmp.eq.s32.totalorder %s22, 0
      %p91 = por %p89, %p90
      %s92 = ssub.s32 %s16, %s23
      %p93 = scmp.eq.s32.totalorder %s92, 0
      %s95 = sadd.s32 %s94, 1
      %s96 = scalar_select %p93, %s94, %s95
      %p99 = pneg %p93
      %p100 = scmp.eq.s32.totalorder %s16, 1
      %p101 = por %p99, %p100
      %p102 = scmp.ne.s32.totalorder %s94, %s97
      %p103 = scmp.eq.s32.totalorder %s16, 0
      %p104 = por %p102, %p103
      %p105 = scmp.ne.s32.totalorder %s94, %s97
      %p106 = scmp.eq.s32.totalorder %s21, 1
      %p107 = por %p105, %p106
      %p108 = scmp.ne.s32.totalorder %s97, %s98
      %p109 = scmp.eq.s32.totalorder %s21, 0
      %p110 = por %p108, %p109
      %p111 = scmp.ne.s32.totalorder %s97, %s98
      %p112 = scmp.eq.s32.totalorder %s22, 1
      %p113 = por %p111, %p112
      %p115 = scmp.ne.s32.totalorder %s98, %s114
      %p116 = scmp.eq.s32.totalorder %s22, 0
      %p117 = por %p115, %p116
      %p118 = scmp.le.s32.totalorder 1, %s16
      %p119 = scmp.lt.s32.totalorder %s16, 3
      %p120 = pnand %p118, %p119
      %p121 = pneg %p120
      // Predicated region
      $region9: #{tpu_custom_call.1} parent=5 // pred_check
        _
      $region10: #{tpu_custom_call.1} parent=5 // pred_check_branch
        %123 = sbr.rel (%p120) target = $region12
      $region11: #{tpu_custom_call.1} parent=5 // pred_region
        %s124 = ssub.s32 %s16, 1
        // Predicated region
        $region13: #{tpu_custom_call.1} parent=11 // pred_check
          %p125 = pneg %p63
        $region14: #{tpu_custom_call.1} parent=11 // pred_check_branch
          %127 = sbr.rel (%p125) target = $region16
        $region15: #{tpu_custom_call.1} parent=11 // pred_region
          %s129 = ssub.s32 4096, 4096
          %130 = vsyncadd [#allocation6], %s129
          %s131 = sshll.u32 [#allocation5], 4
          %s132 = int_to_ptr.vmem [resolvable:$true] %s131
          %137 = dma.hbm_to_vmem [thread:$0]  %s1, 4096, %s132, [#allocation6], 256, 256, 16
        $region16: #{tpu_custom_call.1} parent=11 // pred_fallthru
          _
        // Predicated region
        $region17: #{tpu_custom_call.1} parent=11 // pred_check
          %p138 = pneg %p84
        $region18: #{tpu_custom_call.1} parent=11 // pred_check_branch
          %140 = sbr.rel (%p138) target = $region20
        $region19: #{tpu_custom_call.1} parent=11 // pred_region
          _
        $region20: #{tpu_custom_call.1} parent=11 // pred_fallthru
          _
      $region12: #{tpu_custom_call.1} parent=5 // pred_fallthru
        _
      %p141 = scmp.lt.s32.totalorder %s16, 2
      // Predicated region
      $region21: #{tpu_custom_call.1} parent=5 // pred_check
        %p142 = pneg %p141
      $region22: #{tpu_custom_call.1} parent=5 // pred_check_branch
        %144 = sbr.rel (%p142) target = $region24
      $region23: #{tpu_custom_call.1} parent=5 // pred_region
        // Predicated region
        $region25: #{tpu_custom_call.1} parent=23 // pred_check
          %p145 = pneg %p36
        $region26: #{tpu_custom_call.1} parent=23 // pred_check_branch
          %147 = sbr.rel (%p145) target = $region28
        $region27: #{tpu_custom_call.1} parent=23 // pred_region
          %s148 = sand.u32 %s26, 1
          %s149 = scalar_lea.sflag [#allocation3], %s148
          %s150 = sand.u32 %s26, 1
          %s151 = smul.addr %s150, 16
          %s152 = scalar_lea.vmem [#allocation2], %s151
          %s153 = smul.u32 2, %s16
          %s155 = ssub.s32 256, 256
          %156 = vsyncadd %s149, %s155
          %s157 = smul.addr %s153, 128
          %s158 = scalar_lea.hbm %s0, %s157
          %s159 = sshll.u32 %s152, 4
          %s160 = int_to_ptr.vmem [resolvable:$true] %s159
          %165 = dma.hbm_to_vmem [thread:$0]  %s158, 256, %s160, %s149, 128, 128, 8
        $region28: #{tpu_custom_call.1} parent=23 // pred_fallthru
          _
      $region24: #{tpu_custom_call.1} parent=5 // pred_fallthru
        _
      %p166 = scmp.le.s32.totalorder 1, %s16
      %p167 = scmp.lt.s32.totalorder %s16, 3
      %p168 = pnand %p166, %p167
      %p169 = pneg %p168
      // Predicated region
      $region29: #{tpu_custom_call.1} parent=5 // pred_check
        _
      $region30: #{tpu_custom_call.1} parent=5 // pred_check_branch
        %171 = sbr.rel (%p168) target = $region32
      $region31: #{tpu_custom_call.1} parent=5 // pred_region
        %s172 = ssub.s32 %s16, 1
        %s173 = sand.u32 %s29, 1
        %s174 = scalar_lea.sflag [#allocation3], %s173
        %s175 = sand.u32 %s29, 1
        %s176 = smul.addr %s175, 16
        %s177 = scalar_lea.vmem [#allocation2], %s176
        // Predicated region
        $region33: #{tpu_custom_call.1} parent=31 // pred_check
          %p178 = pneg %p42
        $region34: #{tpu_custom_call.1} parent=31 // pred_check_branch
          %180 = sbr.rel (%p178) target = $region36
        $region35: #{tpu_custom_call.1} parent=31 // pred_region
          %181 = dma.done %s174, 256
        $region36: #{tpu_custom_call.1} parent=31 // pred_fallthru
          _
        // Predicated region
        $region37: #{tpu_custom_call.1} parent=31 // pred_check
          %p182 = pneg %p63
        $region38: #{tpu_custom_call.1} parent=31 // pred_check_branch
          %184 = sbr.rel (%p182) target = $region40
        $region39: #{tpu_custom_call.1} parent=31 // pred_region
          %185 = dma.done [#allocation6], 4096
        $region40: #{tpu_custom_call.1} parent=31 // pred_fallthru
          _
        %s186 = sand.u32 %s29, 1
        %s187 = scalar_lea.sflag [#allocation3], %s186
        %s188 = sand.u32 %s29, 1
        %s189 = smul.addr %s188, 16
        %s190 = scalar_lea.vmem [#allocation2], %s189
        %p191 = pneg %p42
        %p192 = pneg %p39
        %p193 = pneg %p63
        %p194 = pneg %p60
        %p195 = pneg %p84
        %p196 = pneg %p81
        %p197 = pneg %p110
        %p198 = pneg %p107
        %s199 = sand.u32 %s97, 1
        %s200 = scalar_lea.sflag [#allocation4], %s199
        %s201 = sand.u32 %s97, 1
        %s202 = smul.addr %s201, 16
        %s203 = scalar_lea.vmem [#allocation7], %s202
        %s204 = smul.u32 2, %s21
        %s205 = smul.u32 2, %s21
        %v206 = vld [vmem:[%s177] sm:$0xff]
        %v207 = vld [vmem:[%s177 + $0x8] sm:$0xff]
        %v208 = vld [vmem:[#allocation5] sm:$0xff]
        %v209 = vld [vmem:[#allocation5 + $0x8] sm:$0xff]
        %v210 = vld [vmem:[#allocation5 + $0x10] sm:$0xff]
        %v211 = vld [vmem:[#allocation5 + $0x18] sm:$0xff]
        %v212 = vld [vmem:[#allocation5 + $0x20] sm:$0xff]
        %v213 = vld [vmem:[#allocation5 + $0x28] sm:$0xff]
        %v214 = vld [vmem:[#allocation5 + $0x30] sm:$0xff]
        %v215 = vld [vmem:[#allocation5 + $0x38] sm:$0xff]
        %v216 = vld [vmem:[#allocation5 + $0x40] sm:$0xff]
        %v217 = vld [vmem:[#allocation5 + $0x48] sm:$0xff]
        %v218 = vld [vmem:[#allocation5 + $0x50] sm:$0xff]
        %v219 = vld [vmem:[#allocation5 + $0x58] sm:$0xff]
        %v220 = vld [vmem:[#allocation5 + $0x60] sm:$0xff]
        %v221 = vld [vmem:[#allocation5 + $0x68] sm:$0xff]
        %v222 = vld [vmem:[#allocation5 + $0x70] sm:$0xff]
        %v223 = vld [vmem:[#allocation5 + $0x78] sm:$0xff]
        %v224 = vld [vmem:[#allocation5 + $0x80] sm:$0xff]
        %v225 = vld [vmem:[#allocation5 + $0x88] sm:$0xff]
        %v226 = vld [vmem:[#allocation5 + $0x90] sm:$0xff]
        %v227 = vld [vmem:[#allocation5 + $0x98] sm:$0xff]
        %v228 = vld [vmem:[#allocation5 + $0xa0] sm:$0xff]
        %v229 = vld [vmem:[#allocation5 + $0xa8] sm:$0xff]
        %v230 = vld [vmem:[#allocation5 + $0xb0] sm:$0xff]
        %v231 = vld [vmem:[#allocation5 + $0xb8] sm:$0xff]
        %v232 = vld [vmem:[#allocation5 + $0xc0] sm:$0xff]
        %v233 = vld [vmem:[#allocation5 + $0xc8] sm:$0xff]
        %v234 = vld [vmem:[#allocation5 + $0xd0] sm:$0xff]
        %v235 = vld [vmem:[#allocation5 + $0xd8] sm:$0xff]
        %v236 = vld [vmem:[#allocation5 + $0xe0] sm:$0xff]
        %v237 = vld [vmem:[#allocation5 + $0xe8] sm:$0xff]
        %v238 = vld [vmem:[#allocation5 + $0xf0] sm:$0xff]
        %v239 = vld [vmem:[#allocation5 + $0xf8] sm:$0xff]
        %240 = vmatprep.subr.mxu0 %v239
        %241 = vmatpush1.msra.mxu0 %v238
        %242 = vmatprep.subr.mxu0 %v237
        %243 = vmatpush1.msra.mxu0 %v236
        %244 = vmatprep.subr.mxu0 %v235
        %245 = vmatpush1.msra.mxu0 %v234
        %246 = vmatprep.subr.mxu0 %v233
        %247 = vmatpush1.msra.mxu0 %v232
        %248 = vmatprep.subr.mxu0 %v231
        %249 = vmatpush1.msra.mxu0 %v230
        %250 = vmatprep.subr.mxu0 %v229
        %251 = vmatpush1.msra.mxu0 %v228
        %252 = vmatprep.subr.mxu0 %v227
        %253 = vmatpush1.msra.mxu0 %v226
        %254 = vmatprep.subr.mxu0 %v225
        %255 = vmatpush1.msra.mxu0 %v224
        %256 = vmatprep.subr.mxu0 %v223
        %257 = vmatpush1.msra.mxu0 %v222
        %258 = vmatprep.subr.mxu0 %v221
        %259 = vmatpush1.msra.mxu0 %v220
        %260 = vmatprep.subr.mxu0 %v219
        %261 = vmatpush1.msra.mxu0 %v218
        %262 = vmatprep.subr.mxu0 %v217
        %263 = vmatpush1.msra.mxu0 %v216
        %264 = vmatprep.subr.mxu0 %v215
        %265 = vmatpush1.msra.mxu0 %v214
        %266 = vmatprep.subr.mxu0 %v213
        %267 = vmatpush1.msra.mxu0 %v212
        %268 = vmatprep.subr.mxu0 %v211
        %269 = vmatpush1.msra.mxu0 %v210
        %270 = vmatprep.subr.mxu0 %v209
        %271 = vmatpush1.msra.mxu0 %v208
        %272 = vmatprep.subr.mxu0 0.0
        %273 = vmatpush2.msra.mxu0 0.0
        %274 = vmatprep.subr.mxu0 0.0
        %275 = vmatpush2.msra.mxu0 0.0
        %276 = vmatprep.subr.mxu0 0.0
        %277 = vmatpush2.msra.mxu0 0.0
        %278 = vmatprep.subr.mxu0 0.0
        %279 = vmatpush2.msra.mxu0 0.0
        %280 = vmatprep.subr.mxu0 0.0
        %281 = vmatpush2.msra.mxu0 0.0
        %282 = vmatprep.subr.mxu0 0.0
        %283 = vmatpush2.msra.mxu0 0.0
        %284 = vmatprep.subr.mxu0 0.0
        %285 = vmatpush2.msra.mxu0 0.0
        %286 = vmatprep.subr.mxu0 0.0
        %287 = vmatpush2.msra.mxu0 0.0
        %288 = vmatprep.subr.mxu0 0.0
        %289 = vmatpush2.msra.mxu0 0.0
        %290 = vmatprep.subr.mxu0 0.0
        %291 = vmatpush2.msra.mxu0 0.0
        %292 = vmatprep.subr.mxu0 0.0
        %293 = vmatpush2.msra.mxu0 0.0
        %294 = vmatprep.subr.mxu0 0.0
        %295 = vmatpush2.msra.mxu0 0.0
        %296 = vmatprep.subr.mxu0 0.0
        %297 = vmatpush2.msra.mxu0 0.0
        %298 = vmatprep.subr.mxu0 0.0
        %299 = vmatpush2.msra.mxu0 0.0
        %300 = vmatprep.subr.mxu0 0.0
        %301 = vmatpush2.msra.mxu0 0.0
        %302 = vmatprep.subr.mxu0 0.0
        %303 = vmatpush2.msra.mxu0 0.0
        %304 = vmatprep.mubr.f32.mxu0 0.0
        %305 = vmatmul.mubr.f32.gmra.mxu0 %v206
        %v306 = vpop.f32.mrf.mxu0
        %v307 = vadd.f32 0.0, %v306
        %v308 = vpop.f32.mrf.mxu0
        %v309 = vadd.f32 0.0, %v308
        %310 = vmatprep.mubr.f32.mxu0 0.0
        %311 = vmatmul.mubr.f32.gmra.mxu0 %v207
        %v312 = vpop.f32.mrf.mxu0
        %v313 = vadd.f32 0.0, %v312
        %v314 = vpop.f32.mrf.mxu0
        %v315 = vadd.f32 0.0, %v314
        %316 = vdwg.mxu0
        %vm317 = vcmp.gt.f32.partialorder %v307, 0.0
        %vm318 = vcmp.gt.f32.partialorder %v309, 0.0
        %vm319 = vcmp.gt.f32.partialorder %v313, 0.0
        %vm320 = vcmp.gt.f32.partialorder %v315, 0.0
        %v321 = vmul.f32 %v307, 0.2
        %v322 = vmul.f32 %v309, 0.2
        %v323 = vmul.f32 %v313, 0.2
        %v324 = vmul.f32 %v315, 0.2
        %v325 = vsel %vm317, %v307, %v321
        %v326 = vsel %vm318, %v309, %v322
        %v327 = vsel %vm319, %v313, %v323
        %v328 = vsel %vm320, %v315, %v324
        %v329 = vld [vmem:[%s2] sm:$0x3]
        %v331 = vlaneseq
        %v332 = vshrl.u32 %v331, 7
        %v333 = vsub.s32 0, %v332
        %v334 = vrot.slane %v329, %v333
        %v335 = vlaneseq
        %v336 = vshrl.u32 %v335, 7
        %v337 = vsub.s32 1, %v336
        %v338 = vrot.slane %v329, %v337
        %v341 = vadd.f32 %v325, %v334
        %v342 = vadd.f32 %v326, %v338
        %v343 = vadd.f32 %v327, %v334
        %v344 = vadd.f32 %v328, %v338
        %347 = vrot.lane.b32.xlu0 %v341, 112
        %v348 = vpop.permute.xlu0 %347
        %349 = vrot.lane.b32.xlu0 %v343, 112
        %v350 = vpop.permute.xlu0 %349
        %353 = vrot.lane.b32.xlu0 %v341, 96
        %v354 = vpop.permute.xlu0 %353
        %355 = vrot.lane.b32.xlu0 %v343, 96
        %v356 = vpop.permute.xlu0 %355
        %359 = vrot.lane.b32.xlu0 %v341, 80
        %v360 = vpop.permute.xlu0 %359
        %361 = vrot.lane.b32.xlu0 %v343, 80
        %v362 = vpop.permute.xlu0 %361
        %365 = vrot.lane.b32.xlu0 %v341, 64
        %v366 = vpop.permute.xlu0 %365
        %367 = vrot.lane.b32.xlu0 %v343, 64
        %v368 = vpop.permute.xlu0 %367
        %371 = vrot.lane.b32.xlu0 %v341, 48
        %v372 = vpop.permute.xlu0 %371
        %373 = vrot.lane.b32.xlu0 %v343, 48
        %v374 = vpop.permute.xlu0 %373
        %377 = vrot.lane.b32.xlu0 %v341, 32
        %v378 = vpop.permute.xlu0 %377
        %379 = vrot.lane.b32.xlu0 %v343, 32
        %v380 = vpop.permute.xlu0 %379
        %383 = vrot.lane.b32.xlu0 %v341, 16
        %v384 = vpop.permute.xlu0 %383
        %385 = vrot.lane.b32.xlu0 %v343, 16
        %v386 = vpop.permute.xlu0 %385
        %391 = vrot.lane.b32.xlu0 %v342, 112
        %v392 = vpop.permute.xlu0 %391
        %393 = vrot.lane.b32.xlu0 %v344, 112
        %v394 = vpop.permute.xlu0 %393
        %397 = vrot.lane.b32.xlu0 %v342, 96
        %v398 = vpop.permute.xlu0 %397
        %399 = vrot.lane.b32.xlu0 %v344, 96
        %v400 = vpop.permute.xlu0 %399
        %403 = vrot.lane.b32.xlu0 %v342, 80
        %v404 = vpop.permute.xlu0 %403
        %405 = vrot.lane.b32.xlu0 %v344, 80
        %v406 = vpop.permute.xlu0 %405
        %409 = vrot.lane.b32.xlu0 %v342, 64
        %v410 = vpop.permute.xlu0 %409
        %411 = vrot.lane.b32.xlu0 %v344, 64
        %v412 = vpop.permute.xlu0 %411
        %415 = vrot.lane.b32.xlu0 %v342, 48
        %v416 = vpop.permute.xlu0 %415
        %417 = vrot.lane.b32.xlu0 %v344, 48
        %v418 = vpop.permute.xlu0 %417
        %421 = vrot.lane.b32.xlu0 %v342, 32
        %v422 = vpop.permute.xlu0 %421
        %423 = vrot.lane.b32.xlu0 %v344, 32
        %v424 = vpop.permute.xlu0 %423
        %427 = vrot.lane.b32.xlu0 %v342, 16
        %v428 = vpop.permute.xlu0 %427
        %429 = vrot.lane.b32.xlu0 %v344, 16
        %v430 = vpop.permute.xlu0 %429
        %v433 = vcombine.low %v341, %v354
        %v434 = vcombine.high %v341, %v354
        %v436 = vunpack.c.l.s4 1983009808
        %v437 = vunpack.c.0.s8 %v436
        %v438 = vlaneseq
        %v439 = vshrl.u32 %v438, 7
        %v440 = vsub.s32 %v437, %v439
        %v441 = vrot.slane %v433, %v440
        %v443 = vunpack.c.l.s4 1983009808
        %v444 = vunpack.c.0.s8 %v443
        %v445 = vlaneseq
        %v446 = vshrl.u32 %v445, 7
        %v447 = vsub.s32 %v444, %v446
        %v448 = vrot.slane %v434, %v447
        %v449 = vcombine.low %v348, %v360
        %v450 = vcombine.high %v348, %v360
        %v452 = vunpack.c.l.s4 1983009808
        %v453 = vunpack.c.0.s8 %v452
        %v454 = vlaneseq
        %v455 = vshrl.u32 %v454, 7
        %v456 = vsub.s32 %v453, %v455
        %v457 = vrot.slane %v449, %v456
        %v459 = vunpack.c.l.s4 1983009808
        %v460 = vunpack.c.0.s8 %v459
        %v461 = vlaneseq
        %v462 = vshrl.u32 %v461, 7
        %v463 = vsub.s32 %v460, %v462
        %v464 = vrot.slane %v450, %v463
        %v465 = vcombine.low %v366, %v378
        %v466 = vcombine.high %v366, %v378
        %v468 = vunpack.c.l.s4 1983009808
        %v469 = vunpack.c.0.s8 %v468
        %v470 = vlaneseq
        %v471 = vshrl.u32 %v470, 7
        %v472 = vsub.s32 %v469, %v471
        %v473 = vrot.slane %v465, %v472
        %v475 = vunpack.c.l.s4 1983009808
        %v476 = vunpack.c.0.s8 %v475
        %v477 = vlaneseq
        %v478 = vshrl.u32 %v477, 7
        %v479 = vsub.s32 %v476, %v478
        %v480 = vrot.slane %v466, %v479
        %v481 = vcombine.low %v372, %v384
        %v482 = vcombine.high %v372, %v384
        %v484 = vunpack.c.l.s4 1983009808
        %v485 = vunpack.c.0.s8 %v484
        %v486 = vlaneseq
        %v487 = vshrl.u32 %v486, 7
        %v488 = vsub.s32 %v485, %v487
        %v489 = vrot.slane %v481, %v488
        %v491 = vunpack.c.l.s4 1983009808
        %v492 = vunpack.c.0.s8 %v491
        %v493 = vlaneseq
        %v494 = vshrl.u32 %v493, 7
        %v495 = vsub.s32 %v492, %v494
        %v496 = vrot.slane %v482, %v495
        %v497 = vcombine.low %v441, %v457
        %v498 = vcombine.high %v441, %v457
        %v500 = vunpack.c.l.s4 1934713408
        %v501 = vunpack.c.0.s8 %v500
        %v502 = vlaneseq
        %v503 = vshrl.u32 %v502, 7
        %v504 = vsub.s32 %v501, %v503
        %v505 = vrot.slane %v497, %v504
        %v507 = vunpack.c.l.s4 1934713408
        %v508 = vunpack.c.0.s8 %v507
        %v509 = vlaneseq
        %v510 = vshrl.u32 %v509, 7
        %v511 = vsub.s32 %v508, %v510
        %v512 = vrot.slane %v498, %v511
        %v513 = vcombine.low %v448, %v464
        %v514 = vcombine.high %v448, %v464
        %v516 = vunpack.c.l.s4 1934713408
        %v517 = vunpack.c.0.s8 %v516
        %v518 = vlaneseq
        %v519 = vshrl.u32 %v518, 7
        %v520 = vsub.s32 %v517, %v519
        %v521 = vrot.slane %v513, %v520
        %v523 = vunpack.c.l.s4 1934713408
        %v524 = vunpack.c.0.s8 %v523
        %v525 = vlaneseq
        %v526 = vshrl.u32 %v525, 7
        %v527 = vsub.s32 %v524, %v526
        %v528 = vrot.slane %v514, %v527
        %v529 = vcombine.low %v473, %v489
        %v530 = vcombine.high %v473, %v489
        %v532 = vunpack.c.l.s4 1934713408
        %v533 = vunpack.c.0.s8 %v532
        %v534 = vlaneseq
        %v535 = vshrl.u32 %v534, 7
        %v536 = vsub.s32 %v533, %v535
        %v537 = vrot.slane %v529, %v536
        %v539 = vunpack.c.l.s4 1934713408
        %v540 = vunpack.c.0.s8 %v539
        %v541 = vlaneseq
        %v542 = vshrl.u32 %v541, 7
        %v543 = vsub.s32 %v540, %v542
        %v544 = vrot.slane %v530, %v543
        %v545 = vcombine.low %v480, %v496
        %v546 = vcombine.high %v480, %v496
        %v548 = vunpack.c.l.s4 1934713408
        %v549 = vunpack.c.0.s8 %v548
        %v550 = vlaneseq
        %v551 = vshrl.u32 %v550, 7
        %v552 = vsub.s32 %v549, %v551
        %v553 = vrot.slane %v545, %v552
        %v555 = vunpack.c.l.s4 1934713408
        %v556 = vunpack.c.0.s8 %v555
        %v557 = vlaneseq
        %v558 = vshrl.u32 %v557, 7
        %v559 = vsub.s32 %v556, %v558
        %v560 = vrot.slane %v546, %v559
        %v561 = vcombine.low %v505, %v537
        %v562 = vcombine.high %v505, %v537
        %v563 = vcombine.low %v512, %v544
        %v564 = vcombine.high %v512, %v544
        %v565 = vcombine.low %v521, %v553
        %v566 = vcombine.high %v521, %v553
        %v567 = vcombine.low %v528, %v560
        %v568 = vcombine.high %v528, %v560
        %v569 = vcombine.low %v342, %v398
        %v570 = vcombine.high %v342, %v398
        %v572 = vunpack.c.l.s4 1983009808
        %v573 = vunpack.c.0.s8 %v572
        %v574 = vlaneseq
        %v575 = vshrl.u32 %v574, 7
        %v576 = vsub.s32 %v573, %v575
        %v577 = vrot.slane %v569, %v576
        %v579 = vunpack.c.l.s4 1983009808
        %v580 = vunpack.c.0.s8 %v579
        %v581 = vlaneseq
        %v582 = vshrl.u32 %v581, 7
        %v583 = vsub.s32 %v580, %v582
        %v584 = vrot.slane %v570, %v583
        %v585 = vcombine.low %v392, %v404
        %v586 = vcombine.high %v392, %v404
        %v588 = vunpack.c.l.s4 1983009808
        %v589 = vunpack.c.0.s8 %v588
        %v590 = vlaneseq
        %v591 = vshrl.u32 %v590, 7
        %v592 = vsub.s32 %v589, %v591
        %v593 = vrot.slane %v585, %v592
        %v595 = vunpack.c.l.s4 1983009808
        %v596 = vunpack.c.0.s8 %v595
        %v597 = vlaneseq
        %v598 = vshrl.u32 %v597, 7
        %v599 = vsub.s32 %v596, %v598
        %v600 = vrot.slane %v586, %v599
        %v601 = vcombine.low %v410, %v422
        %v602 = vcombine.high %v410, %v422
        %v604 = vunpack.c.l.s4 1983009808
        %v605 = vunpack.c.0.s8 %v604
        %v606 = vlaneseq
        %v607 = vshrl.u32 %v606, 7
        %v608 = vsub.s32 %v605, %v607
        %v609 = vrot.slane %v601, %v608
        %v611 = vunpack.c.l.s4 1983009808
        %v612 = vunpack.c.0.s8 %v611
        %v613 = vlaneseq
        %v614 = vshrl.u32 %v613, 7
        %v615 = vsub.s32 %v612, %v614
        %v616 = vrot.slane %v602, %v615
        %v617 = vcombine.low %v416, %v428
        %v618 = vcombine.high %v416, %v428
        %v620 = vunpack.c.l.s4 1983009808
        %v621 = vunpack.c.0.s8 %v620
        %v622 = vlaneseq
        %v623 = vshrl.u32 %v622, 7
        %v624 = vsub.s32 %v621, %v623
        %v625 = vrot.slane %v617, %v624
        %v627 = vunpack.c.l.s4 1983009808
        %v628 = vunpack.c.0.s8 %v627
        %v629 = vlaneseq
        %v630 = vshrl.u32 %v629, 7
        %v631 = vsub.s32 %v628, %v630
        %v632 = vrot.slane %v618, %v631
        %v633 = vcombine.low %v577, %v593
        %v634 = vcombine.high %v577, %v593
        %v636 = vunpack.c.l.s4 1934713408
        %v637 = vunpack.c.0.s8 %v636
        %v638 = vlaneseq
        %v639 = vshrl.u32 %v638, 7
        %v640 = vsub.s32 %v637, %v639
        %v641 = vrot.slane %v633, %v640
        %v643 = vunpack.c.l.s4 1934713408
        %v644 = vunpack.c.0.s8 %v643
        %v645 = vlaneseq
        %v646 = vshrl.u32 %v645, 7
        %v647 = vsub.s32 %v644, %v646
        %v648 = vrot.slane %v634, %v647
        %v649 = vcombine.low %v584, %v600
        %v650 = vcombine.high %v584, %v600
        %v652 = vunpack.c.l.s4 1934713408
        %v653 = vunpack.c.0.s8 %v652
        %v654 = vlaneseq
        %v655 = vshrl.u32 %v654, 7
        %v656 = vsub.s32 %v653, %v655
        %v657 = vrot.slane %v649, %v656
        %v659 = vunpack.c.l.s4 1934713408
        %v660 = vunpack.c.0.s8 %v659
        %v661 = vlaneseq
        %v662 = vshrl.u32 %v661, 7
        %v663 = vsub.s32 %v660, %v662
        %v664 = vrot.slane %v650, %v663
        %v665 = vcombine.low %v609, %v625
        %v666 = vcombine.high %v609, %v625
        %v668 = vunpack.c.l.s4 1934713408
        %v669 = vunpack.c.0.s8 %v668
        %v670 = vlaneseq
        %v671 = vshrl.u32 %v670, 7
        %v672 = vsub.s32 %v669, %v671
        %v673 = vrot.slane %v665, %v672
        %v675 = vunpack.c.l.s4 1934713408
        %v676 = vunpack.c.0.s8 %v675
        %v677 = vlaneseq
        %v678 = vshrl.u32 %v677, 7
        %v679 = vsub.s32 %v676, %v678
        %v680 = vrot.slane %v666, %v679
        %v681 = vcombine.low %v616, %v632
        %v682 = vcombine.high %v616, %v632
        %v684 = vunpack.c.l.s4 1934713408
        %v685 = vunpack.c.0.s8 %v684
        %v686 = vlaneseq
        %v687 = vshrl.u32 %v686, 7
        %v688 = vsub.s32 %v685, %v687
        %v689 = vrot.slane %v681, %v688
        %v691 = vunpack.c.l.s4 1934713408
        %v692 = vunpack.c.0.s8 %v691
        %v693 = vlaneseq
        %v694 = vshrl.u32 %v693, 7
        %v695 = vsub.s32 %v692, %v694
        %v696 = vrot.slane %v682, %v695
        %v697 = vcombine.low %v641, %v673
        %v698 = vcombine.high %v641, %v673
        %v699 = vcombine.low %v648, %v680
        %v700 = vcombine.high %v648, %v680
        %v701 = vcombine.low %v657, %v689
        %v702 = vcombine.high %v657, %v689
        %v703 = vcombine.low %v664, %v696
        %v704 = vcombine.high %v664, %v696
        %v705 = vcombine.low %v343, %v356
        %v706 = vcombine.high %v343, %v356
        %v708 = vunpack.c.l.s4 1983009808
        %v709 = vunpack.c.0.s8 %v708
        %v710 = vlaneseq
        %v711 = vshrl.u32 %v710, 7
        %v712 = vsub.s32 %v709, %v711
        %v713 = vrot.slane %v705, %v712
        %v715 = vunpack.c.l.s4 1983009808
        %v716 = vunpack.c.0.s8 %v715
        %v717 = vlaneseq
        %v718 = vshrl.u32 %v717, 7
        %v719 = vsub.s32 %v716, %v718
        %v720 = vrot.slane %v706, %v719
        %v721 = vcombine.low %v350, %v362
        %v722 = vcombine.high %v350, %v362
        %v724 = vunpack.c.l.s4 1983009808
        %v725 = vunpack.c.0.s8 %v724
        %v726 = vlaneseq
        %v727 = vshrl.u32 %v726, 7
        %v728 = vsub.s32 %v725, %v727
        %v729 = vrot.slane %v721, %v728
        %v731 = vunpack.c.l.s4 1983009808
        %v732 = vunpack.c.0.s8 %v731
        %v733 = vlaneseq
        %v734 = vshrl.u32 %v733, 7
        %v735 = vsub.s32 %v732, %v734
        %v736 = vrot.slane %v722, %v735
        %v737 = vcombine.low %v368, %v380
        %v738 = vcombine.high %v368, %v380
        %v740 = vunpack.c.l.s4 1983009808
        %v741 = vunpack.c.0.s8 %v740
        %v742 = vlaneseq
        %v743 = vshrl.u32 %v742, 7
        %v744 = vsub.s32 %v741, %v743
        %v745 = vrot.slane %v737, %v744
        %v747 = vunpack.c.l.s4 1983009808
        %v748 = vunpack.c.0.s8 %v747
        %v749 = vlaneseq
        %v750 = vshrl.u32 %v749, 7
        %v751 = vsub.s32 %v748, %v750
        %v752 = vrot.slane %v738, %v751
        %v753 = vcombine.low %v374, %v386
        %v754 = vcombine.high %v374, %v386
        %v756 = vunpack.c.l.s4 1983009808
        %v757 = vunpack.c.0.s8 %v756
        %v758 = vlaneseq
        %v759 = vshrl.u32 %v758, 7
        %v760 = vsub.s32 %v757, %v759
        %v761 = vrot.slane %v753, %v760
        %v763 = vunpack.c.l.s4 1983009808
        %v764 = vunpack.c.0.s8 %v763
        %v765 = vlaneseq
        %v766 = vshrl.u32 %v765, 7
        %v767 = vsub.s32 %v764, %v766
        %v768 = vrot.slane %v754, %v767
        %v769 = vcombine.low %v713, %v729
        %v770 = vcombine.high %v713, %v729
        %v772 = vunpack.c.l.s4 1934713408
        %v773 = vunpack.c.0.s8 %v772
        %v774 = vlaneseq
        %v775 = vshrl.u32 %v774, 7
        %v776 = vsub.s32 %v773, %v775
        %v777 = vrot.slane %v769, %v776
        %v779 = vunpack.c.l.s4 1934713408
        %v780 = vunpack.c.0.s8 %v779
        %v781 = vlaneseq
        %v782 = vshrl.u32 %v781, 7
        %v783 = vsub.s32 %v780, %v782
        %v784 = vrot.slane %v770, %v783
        %v785 = vcombine.low %v720, %v736
        %v786 = vcombine.high %v720, %v736
        %v788 = vunpack.c.l.s4 1934713408
        %v789 = vunpack.c.0.s8 %v788
        %v790 = vlaneseq
        %v791 = vshrl.u32 %v790, 7
        %v792 = vsub.s32 %v789, %v791
        %v793 = vrot.slane %v785, %v792
        %v795 = vunpack.c.l.s4 1934713408
        %v796 = vunpack.c.0.s8 %v795
        %v797 = vlaneseq
        %v798 = vshrl.u32 %v797, 7
        %v799 = vsub.s32 %v796, %v798
        %v800 = vrot.slane %v786, %v799
        %v801 = vcombine.low %v745, %v761
        %v802 = vcombine.high %v745, %v761
        %v804 = vunpack.c.l.s4 1934713408
        %v805 = vunpack.c.0.s8 %v804
        %v806 = vlaneseq
        %v807 = vshrl.u32 %v806, 7
        %v808 = vsub.s32 %v805, %v807
        %v809 = vrot.slane %v801, %v808
        %v811 = vunpack.c.l.s4 1934713408
        %v812 = vunpack.c.0.s8 %v811
        %v813 = vlaneseq
        %v814 = vshrl.u32 %v813, 7
        %v815 = vsub.s32 %v812, %v814
        %v816 = vrot.slane %v802, %v815
        %v817 = vcombine.low %v752, %v768
        %v818 = vcombine.high %v752, %v768
        %v820 = vunpack.c.l.s4 1934713408
        %v821 = vunpack.c.0.s8 %v820
        %v822 = vlaneseq
        %v823 = vshrl.u32 %v822, 7
        %v824 = vsub.s32 %v821, %v823
        %v825 = vrot.slane %v817, %v824
        %v827 = vunpack.c.l.s4 1934713408
        %v828 = vunpack.c.0.s8 %v827
        %v829 = vlaneseq
        %v830 = vshrl.u32 %v829, 7
        %v831 = vsub.s32 %v828, %v830
        %v832 = vrot.slane %v818, %v831
        %v833 = vcombine.low %v777, %v809
        %v834 = vcombine.high %v777, %v809
        %v835 = vcombine.low %v784, %v816
        %v836 = vcombine.high %v784, %v816
        %v837 = vcombine.low %v793, %v825
        %v838 = vcombine.high %v793, %v825
        %v839 = vcombine.low %v800, %v832
        %v840 = vcombine.high %v800, %v832
        %v841 = vcombine.low %v344, %v400
        %v842 = vcombine.high %v344, %v400
        %v844 = vunpack.c.l.s4 1983009808
        %v845 = vunpack.c.0.s8 %v844
        %v846 = vlaneseq
        %v847 = vshrl.u32 %v846, 7
        %v848 = vsub.s32 %v845, %v847
        %v849 = vrot.slane %v841, %v848
        %v851 = vunpack.c.l.s4 1983009808
        %v852 = vunpack.c.0.s8 %v851
        %v853 = vlaneseq
        %v854 = vshrl.u32 %v853, 7
        %v855 = vsub.s32 %v852, %v854
        %v856 = vrot.slane %v842, %v855
        %v857 = vcombine.low %v394, %v406
        %v858 = vcombine.high %v394, %v406
        %v860 = vunpack.c.l.s4 1983009808
        %v861 = vunpack.c.0.s8 %v860
        %v862 = vlaneseq
        %v863 = vshrl.u32 %v862, 7
        %v864 = vsub.s32 %v861, %v863
        %v865 = vrot.slane %v857, %v864
        %v867 = vunpack.c.l.s4 1983009808
        %v868 = vunpack.c.0.s8 %v867
        %v869 = vlaneseq
        %v870 = vshrl.u32 %v869, 7
        %v871 = vsub.s32 %v868, %v870
        %v872 = vrot.slane %v858, %v871
        %v873 = vcombine.low %v412, %v424
        %v874 = vcombine.high %v412, %v424
        %v876 = vunpack.c.l.s4 1983009808
        %v877 = vunpack.c.0.s8 %v876
        %v878 = vlaneseq
        %v879 = vshrl.u32 %v878, 7
        %v880 = vsub.s32 %v877, %v879
        %v881 = vrot.slane %v873, %v880
        %v883 = vunpack.c.l.s4 1983009808
        %v884 = vunpack.c.0.s8 %v883
        %v885 = vlaneseq
        %v886 = vshrl.u32 %v885, 7
        %v887 = vsub.s32 %v884, %v886
        %v888 = vrot.slane %v874, %v887
        %v889 = vcombine.low %v418, %v430
        %v890 = vcombine.high %v418, %v430
        %v892 = vunpack.c.l.s4 1983009808
        %v893 = vunpack.c.0.s8 %v892
        %v894 = vlaneseq
        %v895 = vshrl.u32 %v894, 7
        %v896 = vsub.s32 %v893, %v895
        %v897 = vrot.slane %v889, %v896
        %v899 = vunpack.c.l.s4 1983009808
        %v900 = vunpack.c.0.s8 %v899
        %v901 = vlaneseq
        %v902 = vshrl.u32 %v901, 7
        %v903 = vsub.s32 %v900, %v902
        %v904 = vrot.slane %v890, %v903
        %v905 = vcombine.low %v849, %v865
        %v906 = vcombine.high %v849, %v865
        %v908 = vunpack.c.l.s4 1934713408
        %v909 = vunpack.c.0.s8 %v908
        %v910 = vlaneseq
        %v911 = vshrl.u32 %v910, 7
        %v912 = vsub.s32 %v909, %v911
        %v913 = vrot.slane %v905, %v912
        %v915 = vunpack.c.l.s4 1934713408
        %v916 = vunpack.c.0.s8 %v915
        %v917 = vlaneseq
        %v918 = vshrl.u32 %v917, 7
        %v919 = vsub.s32 %v916, %v918
        %v920 = vrot.slane %v906, %v919
        %v921 = vcombine.low %v856, %v872
        %v922 = vcombine.high %v856, %v872
        %v924 = vunpack.c.l.s4 1934713408
        %v925 = vunpack.c.0.s8 %v924
        %v926 = vlaneseq
        %v927 = vshrl.u32 %v926, 7
        %v928 = vsub.s32 %v925, %v927
        %v929 = vrot.slane %v921, %v928
        %v931 = vunpack.c.l.s4 1934713408
        %v932 = vunpack.c.0.s8 %v931
        %v933 = vlaneseq
        %v934 = vshrl.u32 %v933, 7
        %v935 = vsub.s32 %v932, %v934
        %v936 = vrot.slane %v922, %v935
        %v937 = vcombine.low %v881, %v897
        %v938 = vcombine.high %v881, %v897
        %v940 = vunpack.c.l.s4 1934713408
        %v941 = vunpack.c.0.s8 %v940
        %v942 = vlaneseq
        %v943 = vshrl.u32 %v942, 7
        %v944 = vsub.s32 %v941, %v943
        %v945 = vrot.slane %v937, %v944
        %v947 = vunpack.c.l.s4 1934713408
        %v948 = vunpack.c.0.s8 %v947
        %v949 = vlaneseq
        %v950 = vshrl.u32 %v949, 7
        %v951 = vsub.s32 %v948, %v950
        %v952 = vrot.slane %v938, %v951
        %v953 = vcombine.low %v888, %v904
        %v954 = vcombine.high %v888, %v904
        %v956 = vunpack.c.l.s4 1934713408
        %v957 = vunpack.c.0.s8 %v956
        %v958 = vlaneseq
        %v959 = vshrl.u32 %v958, 7
        %v960 = vsub.s32 %v957, %v959
        %v961 = vrot.slane %v953, %v960
        %v963 = vunpack.c.l.s4 1934713408
        %v964 = vunpack.c.0.s8 %v963
        %v965 = vlaneseq
        %v966 = vshrl.u32 %v965, 7
        %v967 = vsub.s32 %v964, %v966
        %v968 = vrot.slane %v954, %v967
        %v969 = vcombine.low %v913, %v945
        %v970 = vcombine.high %v913, %v945
        %v971 = vcombine.low %v920, %v952
        %v972 = vcombine.high %v920, %v952
        %v973 = vcombine.low %v929, %v961
        %v974 = vcombine.high %v929, %v961
        %v975 = vcombine.low %v936, %v968
        %v976 = vcombine.high %v936, %v968
        %vm977 = vcmask 130048
        %v978 = vsel %vm977, %v561, -inf
        %979 = vmax.xlane.f32.xlu0 %v978
        %v980 = vpop.xlane.xlu0 %979
        %v981 = vsel %vm977, %v697, -inf
        %982 = vmax.xlane.f32.xlu0 %v981
        %v983 = vpop.xlane.xlu0 %982
        %v984 = vsel %vm977, %v562, -inf
        %985 = vmax.xlane.f32.xlu0 %v984
        %v986 = vpop.xlane.xlu0 %985
        %v987 = vsel %vm977, %v698, -inf
        %988 = vmax.xlane.f32.xlu0 %v987
        %v989 = vpop.xlane.xlu0 %988
        %v990 = vsel %vm977, %v563, -inf
        %991 = vmax.xlane.f32.xlu0 %v990
        %v992 = vpop.xlane.xlu0 %991
        %v993 = vsel %vm977, %v699, -inf
        %994 = vmax.xlane.f32.xlu0 %v993
        %v995 = vpop.xlane.xlu0 %994
        %v996 = vsel %vm977, %v564, -inf
        %997 = vmax.xlane.f32.xlu0 %v996
        %v998 = vpop.xlane.xlu0 %997
        %v999 = vsel %vm977, %v700, -inf
        %1000 = vmax.xlane.f32.xlu0 %v999
        %v1001 = vpop.xlane.xlu0 %1000
        %v1002 = vsel %vm977, %v565, -inf
        %1003 = vmax.xlane.f32.xlu0 %v1002
        %v1004 = vpop.xlane.xlu0 %1003
        %v1005 = vsel %vm977, %v701, -inf
        %1006 = vmax.xlane.f32.xlu0 %v1005
        %v1007 = vpop.xlane.xlu0 %1006
        %v1008 = vsel %vm977, %v566, -inf
        %1009 = vmax.xlane.f32.xlu0 %v1008
        %v1010 = vpop.xlane.xlu0 %1009
        %v1011 = vsel %vm977, %v702, -inf
        %1012 = vmax.xlane.f32.xlu0 %v1011
        %v1013 = vpop.xlane.xlu0 %1012
        %v1014 = vsel %vm977, %v567, -inf
        %1015 = vmax.xlane.f32.xlu0 %v1014
        %v1016 = vpop.xlane.xlu0 %1015
        %v1017 = vsel %vm977, %v703, -inf
        %1018 = vmax.xlane.f32.xlu0 %v1017
        %v1019 = vpop.xlane.xlu0 %1018
        %v1020 = vsel %vm977, %v568, -inf
        %1021 = vmax.xlane.f32.xlu0 %v1020
        %v1022 = vpop.xlane.xlu0 %1021
        %v1023 = vsel %vm977, %v704, -inf
        %1024 = vmax.xlane.f32.xlu0 %v1023
        %v1025 = vpop.xlane.xlu0 %1024
        %v1026 = vsel %vm977, %v833, -inf
        %1027 = vmax.xlane.f32.xlu0 %v1026
        %v1028 = vpop.xlane.xlu0 %1027
        %v1029 = vsel %vm977, %v969, -inf
        %1030 = vmax.xlane.f32.xlu0 %v1029
        %v1031 = vpop.xlane.xlu0 %1030
        %v1032 = vsel %vm977, %v834, -inf
        %1033 = vmax.xlane.f32.xlu0 %v1032
        %v1034 = vpop.xlane.xlu0 %1033
        %v1035 = vsel %vm977, %v970, -inf
        %1036 = vmax.xlane.f32.xlu0 %v1035
        %v1037 = vpop.xlane.xlu0 %1036
        %v1038 = vsel %vm977, %v835, -inf
        %1039 = vmax.xlane.f32.xlu0 %v1038
        %v1040 = vpop.xlane.xlu0 %1039
        %v1041 = vsel %vm977, %v971, -inf
        %1042 = vmax.xlane.f32.xlu0 %v1041
        %v1043 = vpop.xlane.xlu0 %1042
        %v1044 = vsel %vm977, %v836, -inf
        %1045 = vmax.xlane.f32.xlu0 %v1044
        %v1046 = vpop.xlane.xlu0 %1045
        %v1047 = vsel %vm977, %v972, -inf
        %1048 = vmax.xlane.f32.xlu0 %v1047
        %v1049 = vpop.xlane.xlu0 %1048
        %v1050 = vsel %vm977, %v837, -inf
        %1051 = vmax.xlane.f32.xlu0 %v1050
        %v1052 = vpop.xlane.xlu0 %1051
        %v1053 = vsel %vm977, %v973, -inf
        %1054 = vmax.xlane.f32.xlu0 %v1053
        %v1055 = vpop.xlane.xlu0 %1054
        %v1056 = vsel %vm977, %v838, -inf
        %1057 = vmax.xlane.f32.xlu0 %v1056
        %v1058 = vpop.xlane.xlu0 %1057
        %v1059 = vsel %vm977, %v974, -inf
        %1060 = vmax.xlane.f32.xlu0 %v1059
        %v1061 = vpop.xlane.xlu0 %1060
        %v1062 = vsel %vm977, %v839, -inf
        %1063 = vmax.xlane.f32.xlu0 %v1062
        %v1064 = vpop.xlane.xlu0 %1063
        %v1065 = vsel %vm977, %v975, -inf
        %1066 = vmax.xlane.f32.xlu0 %v1065
        %v1067 = vpop.xlane.xlu0 %1066
        %v1068 = vsel %vm977, %v840, -inf
        %1069 = vmax.xlane.f32.xlu0 %v1068
        %v1070 = vpop.xlane.xlu0 %1069
        %v1071 = vsel %vm977, %v976, -inf
        %1072 = vmax.xlane.f32.xlu0 %v1071
        %v1073 = vpop.xlane.xlu0 %1072
        %v1074 = vsub.f32 %v561, %v980
        %v1075 = vsub.f32 %v697, %v983
        %v1076 = vsub.f32 %v562, %v986
        %v1077 = vsub.f32 %v698, %v989
        %v1078 = vsub.f32 %v563, %v992
        %v1079 = vsub.f32 %v699, %v995
        %v1080 = vsub.f32 %v564, %v998
        %v1081 = vsub.f32 %v700, %v1001
        %v1082 = vsub.f32 %v565, %v1004
        %v1083 = vsub.f32 %v701, %v1007
        %v1084 = vsub.f32 %v566, %v1010
        %v1085 = vsub.f32 %v702, %v1013
        %v1086 = vsub.f32 %v567, %v1016
        %v1087 = vsub.f32 %v703, %v1019
        %v1088 = vsub.f32 %v568, %v1022
        %v1089 = vsub.f32 %v704, %v1025
        %v1090 = vsub.f32 %v833, %v1028
        %v1091 = vsub.f32 %v969, %v1031
        %v1092 = vsub.f32 %v834, %v1034
        %v1093 = vsub.f32 %v970, %v1037
        %v1094 = vsub.f32 %v835, %v1040
        %v1095 = vsub.f32 %v971, %v1043
        %v1096 = vsub.f32 %v836, %v1046
        %v1097 = vsub.f32 %v972, %v1049
        %v1098 = vsub.f32 %v837, %v1052
        %v1099 = vsub.f32 %v973, %v1055
        %v1100 = vsub.f32 %v838, %v1058
        %v1101 = vsub.f32 %v974, %v1061
        %v1102 = vsub.f32 %v839, %v1064
        %v1103 = vsub.f32 %v975, %v1067
        %v1104 = vsub.f32 %v840, %v1070
        %v1105 = vsub.f32 %v976, %v1073
        %v1106 = vmul.f32 %v1074, 1.442695
        %v1107 = vpow.pop %v1106
        %v1108 = vmul.f32 %v1075, 1.442695
        %v1109 = vpow.pop %v1108
        %v1110 = vmul.f32 %v1076, 1.442695
        %v1111 = vpow.pop %v1110
        %v1112 = vmul.f32 %v1077, 1.442695
        %v1113 = vpow.pop %v1112
        %v1114 = vmul.f32 %v1078, 1.442695
        %v1115 = vpow.pop %v1114
        %v1116 = vmul.f32 %v1079, 1.442695
        %v1117 = vpow.pop %v1116
        %v1118 = vmul.f32 %v1080, 1.442695
        %v1119 = vpow.pop %v1118
        %v1120 = vmul.f32 %v1081, 1.442695
        %v1121 = vpow.pop %v1120
        %v1122 = vmul.f32 %v1082, 1.442695
        %v1123 = vpow.pop %v1122
        %v1124 = vmul.f32 %v1083, 1.442695
        %v1125 = vpow.pop %v1124
        %v1126 = vmul.f32 %v1084, 1.442695
        %v1127 = vpow.pop %v1126
        %v1128 = vmul.f32 %v1085, 1.442695
        %v1129 = vpow.pop %v1128
        %v1130 = vmul.f32 %v1086, 1.442695
        %v1131 = vpow.pop %v1130
        %v1132 = vmul.f32 %v1087, 1.442695
        %v1133 = vpow.pop %v1132
        %v1134 = vmul.f32 %v1088, 1.442695
        %v1135 = vpow.pop %v1134
        %v1136 = vmul.f32 %v1089, 1.442695
        %v1137 = vpow.pop %v1136
        %v1138 = vmul.f32 %v1090, 1.442695
        %v1139 = vpow.pop %v1138
        %v1140 = vmul.f32 %v1091, 1.442695
        %v1141 = vpow.pop %v1140
        %v1142 = vmul.f32 %v1092, 1.442695
        %v1143 = vpow.pop %v1142
        %v1144 = vmul.f32 %v1093, 1.442695
        %v1145 = vpow.pop %v1144
        %v1146 = vmul.f32 %v1094, 1.442695
        %v1147 = vpow.pop %v1146
        %v1148 = vmul.f32 %v1095, 1.442695
        %v1149 = vpow.pop %v1148
        %v1150 = vmul.f32 %v1096, 1.442695
        %v1151 = vpow.pop %v1150
        %v1152 = vmul.f32 %v1097, 1.442695
        %v1153 = vpow.pop %v1152
        %v1154 = vmul.f32 %v1098, 1.442695
        %v1155 = vpow.pop %v1154
        %v1156 = vmul.f32 %v1099, 1.442695
        %v1157 = vpow.pop %v1156
        %v1158 = vmul.f32 %v1100, 1.442695
        %v1159 = vpow.pop %v1158
        %v1160 = vmul.f32 %v1101, 1.442695
        %v1161 = vpow.pop %v1160
        %v1162 = vmul.f32 %v1102, 1.442695
        %v1163 = vpow.pop %v1162
        %v1164 = vmul.f32 %v1103, 1.442695
        %v1165 = vpow.pop %v1164
        %v1166 = vmul.f32 %v1104, 1.442695
        %v1167 = vpow.pop %v1166
        %v1168 = vmul.f32 %v1105, 1.442695
        %v1169 = vpow.pop %v1168
        %v1170 = vsel %vm977, %v1107, 0.0
        %1171 = vadd.xlane.f32.xlu0 %v1170
        %v1172 = vpop.xlane.xlu0 %1171
        %v1173 = vsel %vm977, %v1109, 0.0
        %1174 = vadd.xlane.f32.xlu0 %v1173
        %v1175 = vpop.xlane.xlu0 %1174
        %v1176 = vsel %vm977, %v1111, 0.0
        %1177 = vadd.xlane.f32.xlu0 %v1176
        %v1178 = vpop.xlane.xlu0 %1177
        %v1179 = vsel %vm977, %v1113, 0.0
        %1180 = vadd.xlane.f32.xlu0 %v1179
        %v1181 = vpop.xlane.xlu0 %1180
        %v1182 = vsel %vm977, %v1115, 0.0
        %1183 = vadd.xlane.f32.xlu0 %v1182
        %v1184 = vpop.xlane.xlu0 %1183
        %v1185 = vsel %vm977, %v1117, 0.0
        %1186 = vadd.xlane.f32.xlu0 %v1185
        %v1187 = vpop.xlane.xlu0 %1186
        %v1188 = vsel %vm977, %v1119, 0.0
        %1189 = vadd.xlane.f32.xlu0 %v1188
        %v1190 = vpop.xlane.xlu0 %1189
        %v1191 = vsel %vm977, %v1121, 0.0
        %1192 = vadd.xlane.f32.xlu0 %v1191
        %v1193 = vpop.xlane.xlu0 %1192
        %v1194 = vsel %vm977, %v1123, 0.0
        %1195 = vadd.xlane.f32.xlu0 %v1194
        %v1196 = vpop.xlane.xlu0 %1195
        %v1197 = vsel %vm977, %v1125, 0.0
        %1198 = vadd.xlane.f32.xlu0 %v1197
        %v1199 = vpop.xlane.xlu0 %1198
        %v1200 = vsel %vm977, %v1127, 0.0
        %1201 = vadd.xlane.f32.xlu0 %v1200
        %v1202 = vpop.xlane.xlu0 %1201
        %v1203 = vsel %vm977, %v1129, 0.0
        %1204 = vadd.xlane.f32.xlu0 %v1203
        %v1205 = vpop.xlane.xlu0 %1204
        %v1206 = vsel %vm977, %v1131, 0.0
        %1207 = vadd.xlane.f32.xlu0 %v1206
        %v1208 = vpop.xlane.xlu0 %1207
        %v1209 = vsel %vm977, %v1133, 0.0
        %1210 = vadd.xlane.f32.xlu0 %v1209
        %v1211 = vpop.xlane.xlu0 %1210
        %v1212 = vsel %vm977, %v1135, 0.0
        %1213 = vadd.xlane.f32.xlu0 %v1212
        %v1214 = vpop.xlane.xlu0 %1213
        %v1215 = vsel %vm977, %v1137, 0.0
        %1216 = vadd.xlane.f32.xlu0 %v1215
        %v1217 = vpop.xlane.xlu0 %1216
        %v1218 = vsel %vm977, %v1139, 0.0
        %1219 = vadd.xlane.f32.xlu0 %v1218
        %v1220 = vpop.xlane.xlu0 %1219
        %v1221 = vsel %vm977, %v1141, 0.0
        %1222 = vadd.xlane.f32.xlu0 %v1221
        %v1223 = vpop.xlane.xlu0 %1222
        %v1224 = vsel %vm977, %v1143, 0.0
        %1225 = vadd.xlane.f32.xlu0 %v1224
        %v1226 = vpop.xlane.xlu0 %1225
        %v1227 = vsel %vm977, %v1145, 0.0
        %1228 = vadd.xlane.f32.xlu0 %v1227
        %v1229 = vpop.xlane.xlu0 %1228
        %v1230 = vsel %vm977, %v1147, 0.0
        %1231 = vadd.xlane.f32.xlu0 %v1230
        %v1232 = vpop.xlane.xlu0 %1231
        %v1233 = vsel %vm977, %v1149, 0.0
        %1234 = vadd.xlane.f32.xlu0 %v1233
        %v1235 = vpop.xlane.xlu0 %1234
        %v1236 = vsel %vm977, %v1151, 0.0
        %1237 = vadd.xlane.f32.xlu0 %v1236
        %v1238 = vpop.xlane.xlu0 %1237
        %v1239 = vsel %vm977, %v1153, 0.0
        %1240 = vadd.xlane.f32.xlu0 %v1239
        %v1241 = vpop.xlane.xlu0 %1240
        %v1242 = vsel %vm977, %v1155, 0.0
        %1243 = vadd.xlane.f32.xlu0 %v1242
        %v1244 = vpop.xlane.xlu0 %1243
        %v1245 = vsel %vm977, %v1157, 0.0
        %1246 = vadd.xlane.f32.xlu0 %v1245
        %v1247 = vpop.xlane.xlu0 %1246
        %v1248 = vsel %vm977, %v1159, 0.0
        %1249 = vadd.xlane.f32.xlu0 %v1248
        %v1250 = vpop.xlane.xlu0 %1249
        %v1251 = vsel %vm977, %v1161, 0.0
        %1252 = vadd.xlane.f32.xlu0 %v1251
        %v1253 = vpop.xlane.xlu0 %1252
        %v1254 = vsel %vm977, %v1163, 0.0
        %1255 = vadd.xlane.f32.xlu0 %v1254
        %v1256 = vpop.xlane.xlu0 %1255
        %v1257 = vsel %vm977, %v1165, 0.0
        %1258 = vadd.xlane.f32.xlu0 %v1257
        %v1259 = vpop.xlane.xlu0 %1258
        %v1260 = vsel %vm977, %v1167, 0.0
        %1261 = vadd.xlane.f32.xlu0 %v1260
        %v1262 = vpop.xlane.xlu0 %1261
        %v1263 = vsel %vm977, %v1169, 0.0
        %1264 = vadd.xlane.f32.xlu0 %v1263
        %v1265 = vpop.xlane.xlu0 %1264
        %1268 = vrot.lane.b32.xlu0 %v206, 120
        %v1269 = vpop.permute.xlu0 %1268
        %1270 = vrot.lane.b32.xlu0 %v207, 120
        %v1271 = vpop.permute.xlu0 %1270
        %1274 = vrot.lane.b32.xlu0 %v206, 112
        %v1275 = vpop.permute.xlu0 %1274
        %1276 = vrot.lane.b32.xlu0 %v207, 112
        %v1277 = vpop.permute.xlu0 %1276
        %1280 = vrot.lane.b32.xlu0 %v206, 104
        %v1281 = vpop.permute.xlu0 %1280
        %1282 = vrot.lane.b32.xlu0 %v207, 104
        %v1283 = vpop.permute.xlu0 %1282
        %1286 = vrot.lane.b32.xlu0 %v206, 96
        %v1287 = vpop.permute.xlu0 %1286
        %1288 = vrot.lane.b32.xlu0 %v207, 96
        %v1289 = vpop.permute.xlu0 %1288
        %1292 = vrot.lane.b32.xlu0 %v206, 88
        %v1293 = vpop.permute.xlu0 %1292
        %1294 = vrot.lane.b32.xlu0 %v207, 88
        %v1295 = vpop.permute.xlu0 %1294
        %1298 = vrot.lane.b32.xlu0 %v206, 80
        %v1299 = vpop.permute.xlu0 %1298
        %1300 = vrot.lane.b32.xlu0 %v207, 80
        %v1301 = vpop.permute.xlu0 %1300
        %1304 = vrot.lane.b32.xlu0 %v206, 72
        %v1305 = vpop.permute.xlu0 %1304
        %1306 = vrot.lane.b32.xlu0 %v207, 72
        %v1307 = vpop.permute.xlu0 %1306
        %1310 = vrot.lane.b32.xlu0 %v206, 64
        %v1311 = vpop.permute.xlu0 %1310
        %1312 = vrot.lane.b32.xlu0 %v207, 64
        %v1313 = vpop.permute.xlu0 %1312
        %1316 = vrot.lane.b32.xlu0 %v206, 56
        %v1317 = vpop.permute.xlu0 %1316
        %1318 = vrot.lane.b32.xlu0 %v207, 56
        %v1319 = vpop.permute.xlu0 %1318
        %1322 = vrot.lane.b32.xlu0 %v206, 48
        %v1323 = vpop.permute.xlu0 %1322
        %1324 = vrot.lane.b32.xlu0 %v207, 48
        %v1325 = vpop.permute.xlu0 %1324
        %1328 = vrot.lane.b32.xlu0 %v206, 40
        %v1329 = vpop.permute.xlu0 %1328
        %1330 = vrot.lane.b32.xlu0 %v207, 40
        %v1331 = vpop.permute.xlu0 %1330
        %1334 = vrot.lane.b32.xlu0 %v206, 32
        %v1335 = vpop.permute.xlu0 %1334
        %1336 = vrot.lane.b32.xlu0 %v207, 32
        %v1337 = vpop.permute.xlu0 %1336
        %1340 = vrot.lane.b32.xlu0 %v206, 24
        %v1341 = vpop.permute.xlu0 %1340
        %1342 = vrot.lane.b32.xlu0 %v207, 24
        %v1343 = vpop.permute.xlu0 %1342
        %1346 = vrot.lane.b32.xlu0 %v206, 16
        %v1347 = vpop.permute.xlu0 %1346
        %1348 = vrot.lane.b32.xlu0 %v207, 16
        %v1349 = vpop.permute.xlu0 %1348
        %1352 = vrot.lane.b32.xlu0 %v206, 8
        %v1353 = vpop.permute.xlu0 %1352
        %1354 = vrot.lane.b32.xlu0 %v207, 8
        %v1355 = vpop.permute.xlu0 %1354
        %v1358 = vcombine.low %v206, %v1275
        %v1359 = vcombine.high %v206, %v1275
        %v1361 = vunpack.c.l.s4 1983009808
        %v1362 = vunpack.c.0.s8 %v1361
        %v1363 = vlaneseq
        %v1364 = vshrl.u32 %v1363, 7
        %v1365 = vsub.s32 %v1362, %v1364
        %v1366 = vrot.slane %v1358, %v1365
        %v1368 = vunpack.c.l.s4 1983009808
        %v1369 = vunpack.c.0.s8 %v1368
        %v1370 = vlaneseq
        %v1371 = vshrl.u32 %v1370, 7
        %v1372 = vsub.s32 %v1369, %v1371
        %v1373 = vrot.slane %v1359, %v1372
        %v1374 = vcombine.low %v1269, %v1281
        %v1375 = vcombine.high %v1269, %v1281
        %v1377 = vunpack.c.l.s4 1983009808
        %v1378 = vunpack.c.0.s8 %v1377
        %v1379 = vlaneseq
        %v1380 = vshrl.u32 %v1379, 7
        %v1381 = vsub.s32 %v1378, %v1380
        %v1382 = vrot.slane %v1374, %v1381
        %v1384 = vunpack.c.l.s4 1983009808
        %v1385 = vunpack.c.0.s8 %v1384
        %v1386 = vlaneseq
        %v1387 = vshrl.u32 %v1386, 7
        %v1388 = vsub.s32 %v1385, %v1387
        %v1389 = vrot.slane %v1375, %v1388
        %v1390 = vcombine.low %v1287, %v1299
        %v1391 = vcombine.high %v1287, %v1299
        %v1393 = vunpack.c.l.s4 1983009808
        %v1394 = vunpack.c.0.s8 %v1393
        %v1395 = vlaneseq
        %v1396 = vshrl.u32 %v1395, 7
        %v1397 = vsub.s32 %v1394, %v1396
        %v1398 = vrot.slane %v1390, %v1397
        %v1400 = vunpack.c.l.s4 1983009808
        %v1401 = vunpack.c.0.s8 %v1400
        %v1402 = vlaneseq
        %v1403 = vshrl.u32 %v1402, 7
        %v1404 = vsub.s32 %v1401, %v1403
        %v1405 = vrot.slane %v1391, %v1404
        %v1406 = vcombine.low %v1293, %v1305
        %v1407 = vcombine.high %v1293, %v1305
        %v1409 = vunpack.c.l.s4 1983009808
        %v1410 = vunpack.c.0.s8 %v1409
        %v1411 = vlaneseq
        %v1412 = vshrl.u32 %v1411, 7
        %v1413 = vsub.s32 %v1410, %v1412
        %v1414 = vrot.slane %v1406, %v1413
        %v1416 = vunpack.c.l.s4 1983009808
        %v1417 = vunpack.c.0.s8 %v1416
        %v1418 = vlaneseq
        %v1419 = vshrl.u32 %v1418, 7
        %v1420 = vsub.s32 %v1417, %v1419
        %v1421 = vrot.slane %v1407, %v1420
        %v1422 = vcombine.low %v1366, %v1382
        %v1423 = vcombine.high %v1366, %v1382
        %v1425 = vunpack.c.l.s4 1934713408
        %v1426 = vunpack.c.0.s8 %v1425
        %v1427 = vlaneseq
        %v1428 = vshrl.u32 %v1427, 7
        %v1429 = vsub.s32 %v1426, %v1428
        %v1430 = vrot.slane %v1422, %v1429
        %v1432 = vunpack.c.l.s4 1934713408
        %v1433 = vunpack.c.0.s8 %v1432
        %v1434 = vlaneseq
        %v1435 = vshrl.u32 %v1434, 7
        %v1436 = vsub.s32 %v1433, %v1435
        %v1437 = vrot.slane %v1423, %v1436
        %v1438 = vcombine.low %v1373, %v1389
        %v1439 = vcombine.high %v1373, %v1389
        %v1441 = vunpack.c.l.s4 1934713408
        %v1442 = vunpack.c.0.s8 %v1441
        %v1443 = vlaneseq
        %v1444 = vshrl.u32 %v1443, 7
        %v1445 = vsub.s32 %v1442, %v1444
        %v1446 = vrot.slane %v1438, %v1445
        %v1448 = vunpack.c.l.s4 1934713408
        %v1449 = vunpack.c.0.s8 %v1448
        %v1450 = vlaneseq
        %v1451 = vshrl.u32 %v1450, 7
        %v1452 = vsub.s32 %v1449, %v1451
        %v1453 = vrot.slane %v1439, %v1452
        %v1454 = vcombine.low %v1398, %v1414
        %v1455 = vcombine.high %v1398, %v1414
        %v1457 = vunpack.c.l.s4 1934713408
        %v1458 = vunpack.c.0.s8 %v1457
        %v1459 = vlaneseq
        %v1460 = vshrl.u32 %v1459, 7
        %v1461 = vsub.s32 %v1458, %v1460
        %v1462 = vrot.slane %v1454, %v1461
        %v1464 = vunpack.c.l.s4 1934713408
        %v1465 = vunpack.c.0.s8 %v1464
        %v1466 = vlaneseq
        %v1467 = vshrl.u32 %v1466, 7
        %v1468 = vsub.s32 %v1465, %v1467
        %v1469 = vrot.slane %v1455, %v1468
        %v1470 = vcombine.low %v1405, %v1421
        %v1471 = vcombine.high %v1405, %v1421
        %v1473 = vunpack.c.l.s4 1934713408
        %v1474 = vunpack.c.0.s8 %v1473
        %v1475 = vlaneseq
        %v1476 = vshrl.u32 %v1475, 7
        %v1477 = vsub.s32 %v1474, %v1476
        %v1478 = vrot.slane %v1470, %v1477
        %v1480 = vunpack.c.l.s4 1934713408
        %v1481 = vunpack.c.0.s8 %v1480
        %v1482 = vlaneseq
        %v1483 = vshrl.u32 %v1482, 7
        %v1484 = vsub.s32 %v1481, %v1483
        %v1485 = vrot.slane %v1471, %v1484
        %v1486 = vcombine.low %v1430, %v1462
        %v1487 = vcombine.high %v1430, %v1462
        %v1488 = vcombine.low %v1437, %v1469
        %v1489 = vcombine.high %v1437, %v1469
        %v1490 = vcombine.low %v1446, %v1478
        %v1491 = vcombine.high %v1446, %v1478
        %v1492 = vcombine.low %v1453, %v1485
        %v1493 = vcombine.high %v1453, %v1485
        %v1494 = vcombine.low %v1311, %v1323
        %v1495 = vcombine.high %v1311, %v1323
        %v1497 = vunpack.c.l.s4 1983009808
        %v1498 = vunpack.c.0.s8 %v1497
        %v1499 = vlaneseq
        %v1500 = vshrl.u32 %v1499, 7
        %v1501 = vsub.s32 %v1498, %v1500
        %v1502 = vrot.slane %v1494, %v1501
        %v1504 = vunpack.c.l.s4 1983009808
        %v1505 = vunpack.c.0.s8 %v1504
        %v1506 = vlaneseq
        %v1507 = vshrl.u32 %v1506, 7
        %v1508 = vsub.s32 %v1505, %v1507
        %v1509 = vrot.slane %v1495, %v1508
        %v1510 = vcombine.low %v1317, %v1329
        %v1511 = vcombine.high %v1317, %v1329
        %v1513 = vunpack.c.l.s4 1983009808
        %v1514 = vunpack.c.0.s8 %v1513
        %v1515 = vlaneseq
        %v1516 = vshrl.u32 %v1515, 7
        %v1517 = vsub.s32 %v1514, %v1516
        %v1518 = vrot.slane %v1510, %v1517
        %v1520 = vunpack.c.l.s4 1983009808
        %v1521 = vunpack.c.0.s8 %v1520
        %v1522 = vlaneseq
        %v1523 = vshrl.u32 %v1522, 7
        %v1524 = vsub.s32 %v1521, %v1523
        %v1525 = vrot.slane %v1511, %v1524
        %v1526 = vcombine.low %v1335, %v1347
        %v1527 = vcombine.high %v1335, %v1347
        %v1529 = vunpack.c.l.s4 1983009808
        %v1530 = vunpack.c.0.s8 %v1529
        %v1531 = vlaneseq
        %v1532 = vshrl.u32 %v1531, 7
        %v1533 = vsub.s32 %v1530, %v1532
        %v1534 = vrot.slane %v1526, %v1533
        %v1536 = vunpack.c.l.s4 1983009808
        %v1537 = vunpack.c.0.s8 %v1536
        %v1538 = vlaneseq
        %v1539 = vshrl.u32 %v1538, 7
        %v1540 = vsub.s32 %v1537, %v1539
        %v1541 = vrot.slane %v1527, %v1540
        %v1542 = vcombine.low %v1341, %v1353
        %v1543 = vcombine.high %v1341, %v1353
        %v1545 = vunpack.c.l.s4 1983009808
        %v1546 = vunpack.c.0.s8 %v1545
        %v1547 = vlaneseq
        %v1548 = vshrl.u32 %v1547, 7
        %v1549 = vsub.s32 %v1546, %v1548
        %v1550 = vrot.slane %v1542, %v1549
        %v1552 = vunpack.c.l.s4 1983009808
        %v1553 = vunpack.c.0.s8 %v1552
        %v1554 = vlaneseq
        %v1555 = vshrl.u32 %v1554, 7
        %v1556 = vsub.s32 %v1553, %v1555
        %v1557 = vrot.slane %v1543, %v1556
        %v1558 = vcombine.low %v1502, %v1518
        %v1559 = vcombine.high %v1502, %v1518
        %v1561 = vunpack.c.l.s4 1934713408
        %v1562 = vunpack.c.0.s8 %v1561
        %v1563 = vlaneseq
        %v1564 = vshrl.u32 %v1563, 7
        %v1565 = vsub.s32 %v1562, %v1564
        %v1566 = vrot.slane %v1558, %v1565
        %v1568 = vunpack.c.l.s4 1934713408
        %v1569 = vunpack.c.0.s8 %v1568
        %v1570 = vlaneseq
        %v1571 = vshrl.u32 %v1570, 7
        %v1572 = vsub.s32 %v1569, %v1571
        %v1573 = vrot.slane %v1559, %v1572
        %v1574 = vcombine.low %v1509, %v1525
        %v1575 = vcombine.high %v1509, %v1525
        %v1577 = vunpack.c.l.s4 1934713408
        %v1578 = vunpack.c.0.s8 %v1577
        %v1579 = vlaneseq
        %v1580 = vshrl.u32 %v1579, 7
        %v1581 = vsub.s32 %v1578, %v1580
        %v1582 = vrot.slane %v1574, %v1581
        %v1584 = vunpack.c.l.s4 1934713408
        %v1585 = vunpack.c.0.s8 %v1584
        %v1586 = vlaneseq
        %v1587 = vshrl.u32 %v1586, 7
        %v1588 = vsub.s32 %v1585, %v1587
        %v1589 = vrot.slane %v1575, %v1588
        %v1590 = vcombine.low %v1534, %v1550
        %v1591 = vcombine.high %v1534, %v1550
        %v1593 = vunpack.c.l.s4 1934713408
        %v1594 = vunpack.c.0.s8 %v1593
        %v1595 = vlaneseq
        %v1596 = vshrl.u32 %v1595, 7
        %v1597 = vsub.s32 %v1594, %v1596
        %v1598 = vrot.slane %v1590, %v1597
        %v1600 = vunpack.c.l.s4 1934713408
        %v1601 = vunpack.c.0.s8 %v1600
        %v1602 = vlaneseq
        %v1603 = vshrl.u32 %v1602, 7
        %v1604 = vsub.s32 %v1601, %v1603
        %v1605 = vrot.slane %v1591, %v1604
        %v1606 = vcombine.low %v1541, %v1557
        %v1607 = vcombine.high %v1541, %v1557
        %v1609 = vunpack.c.l.s4 1934713408
        %v1610 = vunpack.c.0.s8 %v1609
        %v1611 = vlaneseq
        %v1612 = vshrl.u32 %v1611, 7
        %v1613 = vsub.s32 %v1610, %v1612
        %v1614 = vrot.slane %v1606, %v1613
        %v1616 = vunpack.c.l.s4 1934713408
        %v1617 = vunpack.c.0.s8 %v1616
        %v1618 = vlaneseq
        %v1619 = vshrl.u32 %v1618, 7
        %v1620 = vsub.s32 %v1617, %v1619
        %v1621 = vrot.slane %v1607, %v1620
        %v1622 = vcombine.low %v1566, %v1598
        %v1623 = vcombine.high %v1566, %v1598
        %v1624 = vcombine.low %v1573, %v1605
        %v1625 = vcombine.high %v1573, %v1605
        %v1626 = vcombine.low %v1582, %v1614
        %v1627 = vcombine.high %v1582, %v1614
        %v1628 = vcombine.low %v1589, %v1621
        %v1629 = vcombine.high %v1589, %v1621
        %v1630 = vcombine.low %v207, %v1277
        %v1631 = vcombine.high %v207, %v1277
        %v1633 = vunpack.c.l.s4 1983009808
        %v1634 = vunpack.c.0.s8 %v1633
        %v1635 = vlaneseq
        %v1636 = vshrl.u32 %v1635, 7
        %v1637 = vsub.s32 %v1634, %v1636
        %v1638 = vrot.slane %v1630, %v1637
        %v1640 = vunpack.c.l.s4 1983009808
        %v1641 = vunpack.c.0.s8 %v1640
        %v1642 = vlaneseq
        %v1643 = vshrl.u32 %v1642, 7
        %v1644 = vsub.s32 %v1641, %v1643
        %v1645 = vrot.slane %v1631, %v1644
        %v1646 = vcombine.low %v1271, %v1283
        %v1647 = vcombine.high %v1271, %v1283
        %v1649 = vunpack.c.l.s4 1983009808
        %v1650 = vunpack.c.0.s8 %v1649
        %v1651 = vlaneseq
        %v1652 = vshrl.u32 %v1651, 7
        %v1653 = vsub.s32 %v1650, %v1652
        %v1654 = vrot.slane %v1646, %v1653
        %v1656 = vunpack.c.l.s4 1983009808
        %v1657 = vunpack.c.0.s8 %v1656
        %v1658 = vlaneseq
        %v1659 = vshrl.u32 %v1658, 7
        %v1660 = vsub.s32 %v1657, %v1659
        %v1661 = vrot.slane %v1647, %v1660
        %v1662 = vcombine.low %v1289, %v1301
        %v1663 = vcombine.high %v1289, %v1301
        %v1665 = vunpack.c.l.s4 1983009808
        %v1666 = vunpack.c.0.s8 %v1665
        %v1667 = vlaneseq
        %v1668 = vshrl.u32 %v1667, 7
        %v1669 = vsub.s32 %v1666, %v1668
        %v1670 = vrot.slane %v1662, %v1669
        %v1672 = vunpack.c.l.s4 1983009808
        %v1673 = vunpack.c.0.s8 %v1672
        %v1674 = vlaneseq
        %v1675 = vshrl.u32 %v1674, 7
        %v1676 = vsub.s32 %v1673, %v1675
        %v1677 = vrot.slane %v1663, %v1676
        %v1678 = vcombine.low %v1295, %v1307
        %v1679 = vcombine.high %v1295, %v1307
        %v1681 = vunpack.c.l.s4 1983009808
        %v1682 = vunpack.c.0.s8 %v1681
        %v1683 = vlaneseq
        %v1684 = vshrl.u32 %v1683, 7
        %v1685 = vsub.s32 %v1682, %v1684
        %v1686 = vrot.slane %v1678, %v1685
        %v1688 = vunpack.c.l.s4 1983009808
        %v1689 = vunpack.c.0.s8 %v1688
        %v1690 = vlaneseq
        %v1691 = vshrl.u32 %v1690, 7
        %v1692 = vsub.s32 %v1689, %v1691
        %v1693 = vrot.slane %v1679, %v1692
        %v1694 = vcombine.low %v1638, %v1654
        %v1695 = vcombine.high %v1638, %v1654
        %v1697 = vunpack.c.l.s4 1934713408
        %v1698 = vunpack.c.0.s8 %v1697
        %v1699 = vlaneseq
        %v1700 = vshrl.u32 %v1699, 7
        %v1701 = vsub.s32 %v1698, %v1700
        %v1702 = vrot.slane %v1694, %v1701
        %v1704 = vunpack.c.l.s4 1934713408
        %v1705 = vunpack.c.0.s8 %v1704
        %v1706 = vlaneseq
        %v1707 = vshrl.u32 %v1706, 7
        %v1708 = vsub.s32 %v1705, %v1707
        %v1709 = vrot.slane %v1695, %v1708
        %v1710 = vcombine.low %v1645, %v1661
        %v1711 = vcombine.high %v1645, %v1661
        %v1713 = vunpack.c.l.s4 1934713408
        %v1714 = vunpack.c.0.s8 %v1713
        %v1715 = vlaneseq
        %v1716 = vshrl.u32 %v1715, 7
        %v1717 = vsub.s32 %v1714, %v1716
        %v1718 = vrot.slane %v1710, %v1717
        %v1720 = vunpack.c.l.s4 1934713408
        %v1721 = vunpack.c.0.s8 %v1720
        %v1722 = vlaneseq
        %v1723 = vshrl.u32 %v1722, 7
        %v1724 = vsub.s32 %v1721, %v1723
        %v1725 = vrot.slane %v1711, %v1724
        %v1726 = vcombine.low %v1670, %v1686
        %v1727 = vcombine.high %v1670, %v1686
        %v1729 = vunpack.c.l.s4 1934713408
        %v1730 = vunpack.c.0.s8 %v1729
        %v1731 = vlaneseq
        %v1732 = vshrl.u32 %v1731, 7
        %v1733 = vsub.s32 %v1730, %v1732
        %v1734 = vrot.slane %v1726, %v1733
        %v1736 = vunpack.c.l.s4 1934713408
        %v1737 = vunpack.c.0.s8 %v1736
        %v1738 = vlaneseq
        %v1739 = vshrl.u32 %v1738, 7
        %v1740 = vsub.s32 %v1737, %v1739
        %v1741 = vrot.slane %v1727, %v1740
        %v1742 = vcombine.low %v1677, %v1693
        %v1743 = vcombine.high %v1677, %v1693
        %v1745 = vunpack.c.l.s4 1934713408
        %v1746 = vunpack.c.0.s8 %v1745
        %v1747 = vlaneseq
        %v1748 = vshrl.u32 %v1747, 7
        %v1749 = vsub.s32 %v1746, %v1748
        %v1750 = vrot.slane %v1742, %v1749
        %v1752 = vunpack.c.l.s4 1934713408
        %v1753 = vunpack.c.0.s8 %v1752
        %v1754 = vlaneseq
        %v1755 = vshrl.u32 %v1754, 7
        %v1756 = vsub.s32 %v1753, %v1755
        %v1757 = vrot.slane %v1743, %v1756
        %v1758 = vcombine.low %v1702, %v1734
        %v1759 = vcombine.high %v1702, %v1734
        %v1760 = vcombine.low %v1709, %v1741
        %v1761 = vcombine.high %v1709, %v1741
        %v1762 = vcombine.low %v1718, %v1750
        %v1763 = vcombine.high %v1718, %v1750
        %v1764 = vcombine.low %v1725, %v1757
        %v1765 = vcombine.high %v1725, %v1757
        %v1766 = vcombine.low %v1313, %v1325
        %v1767 = vcombine.high %v1313, %v1325
        %v1769 = vunpack.c.l.s4 1983009808
        %v1770 = vunpack.c.0.s8 %v1769
        %v1771 = vlaneseq
        %v1772 = vshrl.u32 %v1771, 7
        %v1773 = vsub.s32 %v1770, %v1772
        %v1774 = vrot.slane %v1766, %v1773
        %v1776 = vunpack.c.l.s4 1983009808
        %v1777 = vunpack.c.0.s8 %v1776
        %v1778 = vlaneseq
        %v1779 = vshrl.u32 %v1778, 7
        %v1780 = vsub.s32 %v1777, %v1779
        %v1781 = vrot.slane %v1767, %v1780
        %v1782 = vcombine.low %v1319, %v1331
        %v1783 = vcombine.high %v1319, %v1331
        %v1785 = vunpack.c.l.s4 1983009808
        %v1786 = vunpack.c.0.s8 %v1785
        %v1787 = vlaneseq
        %v1788 = vshrl.u32 %v1787, 7
        %v1789 = vsub.s32 %v1786, %v1788
        %v1790 = vrot.slane %v1782, %v1789
        %v1792 = vunpack.c.l.s4 1983009808
        %v1793 = vunpack.c.0.s8 %v1792
        %v1794 = vlaneseq
        %v1795 = vshrl.u32 %v1794, 7
        %v1796 = vsub.s32 %v1793, %v1795
        %v1797 = vrot.slane %v1783, %v1796
        %v1798 = vcombine.low %v1337, %v1349
        %v1799 = vcombine.high %v1337, %v1349
        %v1801 = vunpack.c.l.s4 1983009808
        %v1802 = vunpack.c.0.s8 %v1801
        %v1803 = vlaneseq
        %v1804 = vshrl.u32 %v1803, 7
        %v1805 = vsub.s32 %v1802, %v1804
        %v1806 = vrot.slane %v1798, %v1805
        %v1808 = vunpack.c.l.s4 1983009808
        %v1809 = vunpack.c.0.s8 %v1808
        %v1810 = vlaneseq
        %v1811 = vshrl.u32 %v1810, 7
        %v1812 = vsub.s32 %v1809, %v1811
        %v1813 = vrot.slane %v1799, %v1812
        %v1814 = vcombine.low %v1343, %v1355
        %v1815 = vcombine.high %v1343, %v1355
        %v1817 = vunpack.c.l.s4 1983009808
        %v1818 = vunpack.c.0.s8 %v1817
        %v1819 = vlaneseq
        %v1820 = vshrl.u32 %v1819, 7
        %v1821 = vsub.s32 %v1818, %v1820
        %v1822 = vrot.slane %v1814, %v1821
        %v1824 = vunpack.c.l.s4 1983009808
        %v1825 = vunpack.c.0.s8 %v1824
        %v1826 = vlaneseq
        %v1827 = vshrl.u32 %v1826, 7
        %v1828 = vsub.s32 %v1825, %v1827
        %v1829 = vrot.slane %v1815, %v1828
        %v1830 = vcombine.low %v1774, %v1790
        %v1831 = vcombine.high %v1774, %v1790
        %v1833 = vunpack.c.l.s4 1934713408
        %v1834 = vunpack.c.0.s8 %v1833
        %v1835 = vlaneseq
        %v1836 = vshrl.u32 %v1835, 7
        %v1837 = vsub.s32 %v1834, %v1836
        %v1838 = vrot.slane %v1830, %v1837
        %v1840 = vunpack.c.l.s4 1934713408
        %v1841 = vunpack.c.0.s8 %v1840
        %v1842 = vlaneseq
        %v1843 = vshrl.u32 %v1842, 7
        %v1844 = vsub.s32 %v1841, %v1843
        %v1845 = vrot.slane %v1831, %v1844
        %v1846 = vcombine.low %v1781, %v1797
        %v1847 = vcombine.high %v1781, %v1797
        %v1849 = vunpack.c.l.s4 1934713408
        %v1850 = vunpack.c.0.s8 %v1849
        %v1851 = vlaneseq
        %v1852 = vshrl.u32 %v1851, 7
        %v1853 = vsub.s32 %v1850, %v1852
        %v1854 = vrot.slane %v1846, %v1853
        %v1856 = vunpack.c.l.s4 1934713408
        %v1857 = vunpack.c.0.s8 %v1856
        %v1858 = vlaneseq
        %v1859 = vshrl.u32 %v1858, 7
        %v1860 = vsub.s32 %v1857, %v1859
        %v1861 = vrot.slane %v1847, %v1860
        %v1862 = vcombine.low %v1806, %v1822
        %v1863 = vcombine.high %v1806, %v1822
        %v1865 = vunpack.c.l.s4 1934713408
        %v1866 = vunpack.c.0.s8 %v1865
        %v1867 = vlaneseq
        %v1868 = vshrl.u32 %v1867, 7
        %v1869 = vsub.s32 %v1866, %v1868
        %v1870 = vrot.slane %v1862, %v1869
        %v1872 = vunpack.c.l.s4 1934713408
        %v1873 = vunpack.c.0.s8 %v1872
        %v1874 = vlaneseq
        %v1875 = vshrl.u32 %v1874, 7
        %v1876 = vsub.s32 %v1873, %v1875
        %v1877 = vrot.slane %v1863, %v1876
        %v1878 = vcombine.low %v1813, %v1829
        %v1879 = vcombine.high %v1813, %v1829
        %v1881 = vunpack.c.l.s4 1934713408
        %v1882 = vunpack.c.0.s8 %v1881
        %v1883 = vlaneseq
        %v1884 = vshrl.u32 %v1883, 7
        %v1885 = vsub.s32 %v1882, %v1884
        %v1886 = vrot.slane %v1878, %v1885
        %v1888 = vunpack.c.l.s4 1934713408
        %v1889 = vunpack.c.0.s8 %v1888
        %v1890 = vlaneseq
        %v1891 = vshrl.u32 %v1890, 7
        %v1892 = vsub.s32 %v1889, %v1891
        %v1893 = vrot.slane %v1879, %v1892
        %v1894 = vcombine.low %v1838, %v1870
        %v1895 = vcombine.high %v1838, %v1870
        %v1896 = vcombine.low %v1845, %v1877
        %v1897 = vcombine.high %v1845, %v1877
        %v1898 = vcombine.low %v1854, %v1886
        %v1899 = vcombine.high %v1854, %v1886
        %v1900 = vcombine.low %v1861, %v1893
        %v1901 = vcombine.high %v1861, %v1893
        %v1903 = vsel %vm977, %v1107, 0
        %v1906 = vsel %vm977, %v1109, 0
        %1908 = vmatprep.subr.mxu0 0.0
        %1909 = vmatpush1.msra.mxu0 0.0
        %1910 = vmatprep.subr.mxu0 0.0
        %1911 = vmatpush1.msra.mxu0 0.0
        %1912 = vmatprep.subr.mxu0 0.0
        %1913 = vmatpush1.msra.mxu0 0.0
        %1914 = vmatprep.subr.mxu0 0.0
        %1915 = vmatpush1.msra.mxu0 0.0
        %1916 = vmatprep.subr.mxu0 0.0
        %1917 = vmatpush1.msra.mxu0 0.0
        %1918 = vmatprep.subr.mxu0 0.0
        %1919 = vmatpush1.msra.mxu0 0.0
        %1920 = vmatprep.subr.mxu0 0.0
        %1921 = vmatpush1.msra.mxu0 0.0
        %1922 = vmatprep.subr.mxu0 0.0
        %1923 = vmatpush1.msra.mxu0 0.0
        %1924 = vmatprep.subr.mxu0 0.0
        %1925 = vmatpush1.msra.mxu0 0.0
        %1926 = vmatprep.subr.mxu0 0.0
        %1927 = vmatpush1.msra.mxu0 0.0
        %1928 = vmatprep.subr.mxu0 0.0
        %1929 = vmatpush1.msra.mxu0 0.0
        %1930 = vmatprep.subr.mxu0 0.0
        %1931 = vmatpush1.msra.mxu0 0.0
        %1932 = vmatprep.subr.mxu0 0.0
        %1933 = vmatpush1.msra.mxu0 0.0
        %1934 = vmatprep.subr.mxu0 0.0
        %1935 = vmatpush1.msra.mxu0 0.0
        %1936 = vmatprep.subr.mxu0 0.0
        %1937 = vmatpush1.msra.mxu0 %v1622
        %1938 = vmatprep.subr.mxu0 0.0
        %1939 = vmatpush1.msra.mxu0 %v1486
        %1940 = vmatprep.subr.mxu0 0.0
        %1941 = vmatpush2.msra.mxu0 0.0
        %1942 = vmatprep.subr.mxu0 0.0
        %1943 = vmatpush2.msra.mxu0 0.0
        %1944 = vmatprep.subr.mxu0 0.0
        %1945 = vmatpush2.msra.mxu0 0.0
        %1946 = vmatprep.subr.mxu0 0.0
        %1947 = vmatpush2.msra.mxu0 0.0
        %1948 = vmatprep.subr.mxu0 0.0
        %1949 = vmatpush2.msra.mxu0 0.0
        %1950 = vmatprep.subr.mxu0 0.0
        %1951 = vmatpush2.msra.mxu0 0.0
        %1952 = vmatprep.subr.mxu0 0.0
        %1953 = vmatpush2.msra.mxu0 0.0
        %1954 = vmatprep.subr.mxu0 0.0
        %1955 = vmatpush2.msra.mxu0 0.0
        %1956 = vmatprep.subr.mxu0 0.0
        %1957 = vmatpush2.msra.mxu0 0.0
        %1958 = vmatprep.subr.mxu0 0.0
        %1959 = vmatpush2.msra.mxu0 0.0
        %1960 = vmatprep.subr.mxu0 0.0
        %1961 = vmatpush2.msra.mxu0 0.0
        %1962 = vmatprep.subr.mxu0 0.0
        %1963 = vmatpush2.msra.mxu0 0.0
        %1964 = vmatprep.subr.mxu0 0.0
        %1965 = vmatpush2.msra.mxu0 0.0
        %1966 = vmatprep.subr.mxu0 0.0
        %1967 = vmatpush2.msra.mxu0 0.0
        %1968 = vmatprep.subr.mxu0 0.0
        %1969 = vmatpush2.msra.mxu0 0.0
        %1970 = vmatprep.subr.mxu0 0.0
        %1971 = vmatpush2.msra.mxu0 0.0
        %1972 = vmatprep.mubr.f32.mxu0 0.0
        %1973 = vmatmul.mubr.f32.gmra.mxu0 %v1903
        %v1974 = vpop.f32.mrf.mxu0
        %v1975 = vadd.f32 0.0, %v1974
        %v1976 = vpop.f32.mrf.mxu0
        %1977 = vmatprep.mubr.f32.mxu0 0.0
        %1978 = vmatmul.mubr.f32.gmra.mxu0 %v1906
        %v1979 = vpop.f32.mrf.mxu0
        %v1980 = vadd.f32 0.0, %v1979
        %v1981 = vpop.f32.mrf.mxu0
        %1982 = vdwg.mxu0
        %v1984 = vsel %vm977, %v1111, 0
        %v1987 = vsel %vm977, %v1113, 0
        %1989 = vmatprep.subr.mxu0 0.0
        %1990 = vmatpush1.msra.mxu0 0.0
        %1991 = vmatprep.subr.mxu0 0.0
        %1992 = vmatpush1.msra.mxu0 0.0
        %1993 = vmatprep.subr.mxu0 0.0
        %1994 = vmatpush1.msra.mxu0 0.0
        %1995 = vmatprep.subr.mxu0 0.0
        %1996 = vmatpush1.msra.mxu0 0.0
        %1997 = vmatprep.subr.mxu0 0.0
        %1998 = vmatpush1.msra.mxu0 0.0
        %1999 = vmatprep.subr.mxu0 0.0
        %2000 = vmatpush1.msra.mxu0 0.0
        %2001 = vmatprep.subr.mxu0 0.0
        %2002 = vmatpush1.msra.mxu0 0.0
        %2003 = vmatprep.subr.mxu0 0.0
        %2004 = vmatpush1.msra.mxu0 0.0
        %2005 = vmatprep.subr.mxu0 0.0
        %2006 = vmatpush1.msra.mxu0 0.0
        %2007 = vmatprep.subr.mxu0 0.0
        %2008 = vmatpush1.msra.mxu0 0.0
        %2009 = vmatprep.subr.mxu0 0.0
        %2010 = vmatpush1.msra.mxu0 0.0
        %2011 = vmatprep.subr.mxu0 0.0
        %2012 = vmatpush1.msra.mxu0 0.0
        %2013 = vmatprep.subr.mxu0 0.0
        %2014 = vmatpush1.msra.mxu0 0.0
        %2015 = vmatprep.subr.mxu0 0.0
        %2016 = vmatpush1.msra.mxu0 0.0
        %2017 = vmatprep.subr.mxu0 0.0
        %2018 = vmatpush1.msra.mxu0 %v1623
        %2019 = vmatprep.subr.mxu0 0.0
        %2020 = vmatpush1.msra.mxu0 %v1487
        %2021 = vmatprep.subr.mxu0 0.0
        %2022 = vmatpush2.msra.mxu0 0.0
        %2023 = vmatprep.subr.mxu0 0.0
        %2024 = vmatpush2.msra.mxu0 0.0
        %2025 = vmatprep.subr.mxu0 0.0
        %2026 = vmatpush2.msra.mxu0 0.0
        %2027 = vmatprep.subr.mxu0 0.0
        %2028 = vmatpush2.msra.mxu0 0.0
        %2029 = vmatprep.subr.mxu0 0.0
        %2030 = vmatpush2.msra.mxu0 0.0
        %2031 = vmatprep.subr.mxu0 0.0
        %2032 = vmatpush2.msra.mxu0 0.0
        %2033 = vmatprep.subr.mxu0 0.0
        %2034 = vmatpush2.msra.mxu0 0.0
        %2035 = vmatprep.subr.mxu0 0.0
        %2036 = vmatpush2.msra.mxu0 0.0
        %2037 = vmatprep.subr.mxu0 0.0
        %2038 = vmatpush2.msra.mxu0 0.0
        %2039 = vmatprep.subr.mxu0 0.0
        %2040 = vmatpush2.msra.mxu0 0.0
        %2041 = vmatprep.subr.mxu0 0.0
        %2042 = vmatpush2.msra.mxu0 0.0
        %2043 = vmatprep.subr.mxu0 0.0
        %2044 = vmatpush2.msra.mxu0 0.0
        %2045 = vmatprep.subr.mxu0 0.0
        %2046 = vmatpush2.msra.mxu0 0.0
        %2047 = vmatprep.subr.mxu0 0.0
        %2048 = vmatpush2.msra.mxu0 0.0
        %2049 = vmatprep.subr.mxu0 0.0
        %2050 = vmatpush2.msra.mxu0 0.0
        %2051 = vmatprep.subr.mxu0 0.0
        %2052 = vmatpush2.msra.mxu0 0.0
        %2053 = vmatprep.mubr.f32.mxu0 0.0
        %2054 = vmatmul.mubr.f32.gmra.mxu0 %v1984
        %v2055 = vpop.f32.mrf.mxu0
        %v2056 = vadd.f32 0.0, %v2055
        %v2057 = vpop.f32.mrf.mxu0
        %2058 = vmatprep.mubr.f32.mxu0 0.0
        %2059 = vmatmul.mubr.f32.gmra.mxu0 %v1987
        %v2060 = vpop.f32.mrf.mxu0
        %v2061 = vadd.f32 0.0, %v2060
        %v2062 = vpop.f32.mrf.mxu0
        %2063 = vdwg.mxu0
        %v2065 = vsel %vm977, %v1115, 0
        %v2068 = vsel %vm977, %v1117, 0
        %2070 = vmatprep.subr.mxu0 0.0
        %2071 = vmatpush1.msra.mxu0 0.0
        %2072 = vmatprep.subr.mxu0 0.0
        %2073 = vmatpush1.msra.mxu0 0.0
        %2074 = vmatprep.subr.mxu0 0.0
        %2075 = vmatpush1.msra.mxu0 0.0
        %2076 = vmatprep.subr.mxu0 0.0
        %2077 = vmatpush1.msra.mxu0 0.0
        %2078 = vmatprep.subr.mxu0 0.0
        %2079 = vmatpush1.msra.mxu0 0.0
        %2080 = vmatprep.subr.mxu0 0.0
        %2081 = vmatpush1.msra.mxu0 0.0
        %2082 = vmatprep.subr.mxu0 0.0
        %2083 = vmatpush1.msra.mxu0 0.0
        %2084 = vmatprep.subr.mxu0 0.0
        %2085 = vmatpush1.msra.mxu0 0.0
        %2086 = vmatprep.subr.mxu0 0.0
        %2087 = vmatpush1.msra.mxu0 0.0
        %2088 = vmatprep.subr.mxu0 0.0
        %2089 = vmatpush1.msra.mxu0 0.0
        %2090 = vmatprep.subr.mxu0 0.0
        %2091 = vmatpush1.msra.mxu0 0.0
        %2092 = vmatprep.subr.mxu0 0.0
        %2093 = vmatpush1.msra.mxu0 0.0
        %2094 = vmatprep.subr.mxu0 0.0
        %2095 = vmatpush1.msra.mxu0 0.0
        %2096 = vmatprep.subr.mxu0 0.0
        %2097 = vmatpush1.msra.mxu0 0.0
        %2098 = vmatprep.subr.mxu0 0.0
        %2099 = vmatpush1.msra.mxu0 %v1624
        %2100 = vmatprep.subr.mxu0 0.0
        %2101 = vmatpush1.msra.mxu0 %v1488
        %2102 = vmatprep.subr.mxu0 0.0
        %2103 = vmatpush2.msra.mxu0 0.0
        %2104 = vmatprep.subr.mxu0 0.0
        %2105 = vmatpush2.msra.mxu0 0.0
        %2106 = vmatprep.subr.mxu0 0.0
        %2107 = vmatpush2.msra.mxu0 0.0
        %2108 = vmatprep.subr.mxu0 0.0
        %2109 = vmatpush2.msra.mxu0 0.0
        %2110 = vmatprep.subr.mxu0 0.0
        %2111 = vmatpush2.msra.mxu0 0.0
        %2112 = vmatprep.subr.mxu0 0.0
        %2113 = vmatpush2.msra.mxu0 0.0
        %2114 = vmatprep.subr.mxu0 0.0
        %2115 = vmatpush2.msra.mxu0 0.0
        %2116 = vmatprep.subr.mxu0 0.0
        %2117 = vmatpush2.msra.mxu0 0.0
        %2118 = vmatprep.subr.mxu0 0.0
        %2119 = vmatpush2.msra.mxu0 0.0
        %2120 = vmatprep.subr.mxu0 0.0
        %2121 = vmatpush2.msra.mxu0 0.0
        %2122 = vmatprep.subr.mxu0 0.0
        %2123 = vmatpush2.msra.mxu0 0.0
        %2124 = vmatprep.subr.mxu0 0.0
        %2125 = vmatpush2.msra.mxu0 0.0
        %2126 = vmatprep.subr.mxu0 0.0
        %2127 = vmatpush2.msra.mxu0 0.0
        %2128 = vmatprep.subr.mxu0 0.0
        %2129 = vmatpush2.msra.mxu0 0.0
        %2130 = vmatprep.subr.mxu0 0.0
        %2131 = vmatpush2.msra.mxu0 0.0
        %2132 = vmatprep.subr.mxu0 0.0
        %2133 = vmatpush2.msra.mxu0 0.0
        %2134 = vmatprep.mubr.f32.mxu0 0.0
        %2135 = vmatmul.mubr.f32.gmra.mxu0 %v2065
        %v2136 = vpop.f32.mrf.mxu0
        %v2137 = vadd.f32 0.0, %v2136
        %v2138 = vpop.f32.mrf.mxu0
        %2139 = vmatprep.mubr.f32.mxu0 0.0
        %2140 = vmatmul.mubr.f32.gmra.mxu0 %v2068
        %v2141 = vpop.f32.mrf.mxu0
        %v2142 = vadd.f32 0.0, %v2141
        %v2143 = vpop.f32.mrf.mxu0
        %2144 = vdwg.mxu0
        %v2146 = vsel %vm977, %v1119, 0
        %v2149 = vsel %vm977, %v1121, 0
        %2151 = vmatprep.subr.mxu0 0.0
        %2152 = vmatpush1.msra.mxu0 0.0
        %2153 = vmatprep.subr.mxu0 0.0
        %2154 = vmatpush1.msra.mxu0 0.0
        %2155 = vmatprep.subr.mxu0 0.0
        %2156 = vmatpush1.msra.mxu0 0.0
        %2157 = vmatprep.subr.mxu0 0.0
        %2158 = vmatpush1.msra.mxu0 0.0
        %2159 = vmatprep.subr.mxu0 0.0
        %2160 = vmatpush1.msra.mxu0 0.0
        %2161 = vmatprep.subr.mxu0 0.0
        %2162 = vmatpush1.msra.mxu0 0.0
        %2163 = vmatprep.subr.mxu0 0.0
        %2164 = vmatpush1.msra.mxu0 0.0
        %2165 = vmatprep.subr.mxu0 0.0
        %2166 = vmatpush1.msra.mxu0 0.0
        %2167 = vmatprep.subr.mxu0 0.0
        %2168 = vmatpush1.msra.mxu0 0.0
        %2169 = vmatprep.subr.mxu0 0.0
        %2170 = vmatpush1.msra.mxu0 0.0
        %2171 = vmatprep.subr.mxu0 0.0
        %2172 = vmatpush1.msra.mxu0 0.0
        %2173 = vmatprep.subr.mxu0 0.0
        %2174 = vmatpush1.msra.mxu0 0.0
        %2175 = vmatprep.subr.mxu0 0.0
        %2176 = vmatpush1.msra.mxu0 0.0
        %2177 = vmatprep.subr.mxu0 0.0
        %2178 = vmatpush1.msra.mxu0 0.0
        %2179 = vmatprep.subr.mxu0 0.0
        %2180 = vmatpush1.msra.mxu0 %v1625
        %2181 = vmatprep.subr.mxu0 0.0
        %2182 = vmatpush1.msra.mxu0 %v1489
        %2183 = vmatprep.subr.mxu0 0.0
        %2184 = vmatpush2.msra.mxu0 0.0
        %2185 = vmatprep.subr.mxu0 0.0
        %2186 = vmatpush2.msra.mxu0 0.0
        %2187 = vmatprep.subr.mxu0 0.0
        %2188 = vmatpush2.msra.mxu0 0.0
        %2189 = vmatprep.subr.mxu0 0.0
        %2190 = vmatpush2.msra.mxu0 0.0
        %2191 = vmatprep.subr.mxu0 0.0
        %2192 = vmatpush2.msra.mxu0 0.0
        %2193 = vmatprep.subr.mxu0 0.0
        %2194 = vmatpush2.msra.mxu0 0.0
        %2195 = vmatprep.subr.mxu0 0.0
        %2196 = vmatpush2.msra.mxu0 0.0
        %2197 = vmatprep.subr.mxu0 0.0
        %2198 = vmatpush2.msra.mxu0 0.0
        %2199 = vmatprep.subr.mxu0 0.0
        %2200 = vmatpush2.msra.mxu0 0.0
        %2201 = vmatprep.subr.mxu0 0.0
        %2202 = vmatpush2.msra.mxu0 0.0
        %2203 = vmatprep.subr.mxu0 0.0
        %2204 = vmatpush2.msra.mxu0 0.0
        %2205 = vmatprep.subr.mxu0 0.0
        %2206 = vmatpush2.msra.mxu0 0.0
        %2207 = vmatprep.subr.mxu0 0.0
        %2208 = vmatpush2.msra.mxu0 0.0
        %2209 = vmatprep.subr.mxu0 0.0
        %2210 = vmatpush2.msra.mxu0 0.0
        %2211 = vmatprep.subr.mxu0 0.0
        %2212 = vmatpush2.msra.mxu0 0.0
        %2213 = vmatprep.subr.mxu0 0.0
        %2214 = vmatpush2.msra.mxu0 0.0
        %2215 = vmatprep.mubr.f32.mxu0 0.0
        %2216 = vmatmul.mubr.f32.gmra.mxu0 %v2146
        %v2217 = vpop.f32.mrf.mxu0
        %v2218 = vadd.f32 0.0, %v2217
        %v2219 = vpop.f32.mrf.mxu0
        %2220 = vmatprep.mubr.f32.mxu0 0.0
        %2221 = vmatmul.mubr.f32.gmra.mxu0 %v2149
        %v2222 = vpop.f32.mrf.mxu0
        %v2223 = vadd.f32 0.0, %v2222
        %v2224 = vpop.f32.mrf.mxu0
        %2225 = vdwg.mxu0
        %v2227 = vsel %vm977, %v1123, 0
        %v2230 = vsel %vm977, %v1125, 0
        %2232 = vmatprep.subr.mxu0 0.0
        %2233 = vmatpush1.msra.mxu0 0.0
        %2234 = vmatprep.subr.mxu0 0.0
        %2235 = vmatpush1.msra.mxu0 0.0
        %2236 = vmatprep.subr.mxu0 0.0
        %2237 = vmatpush1.msra.mxu0 0.0
        %2238 = vmatprep.subr.mxu0 0.0
        %2239 = vmatpush1.msra.mxu0 0.0
        %2240 = vmatprep.subr.mxu0 0.0
        %2241 = vmatpush1.msra.mxu0 0.0
        %2242 = vmatprep.subr.mxu0 0.0
        %2243 = vmatpush1.msra.mxu0 0.0
        %2244 = vmatprep.subr.mxu0 0.0
        %2245 = vmatpush1.msra.mxu0 0.0
        %2246 = vmatprep.subr.mxu0 0.0
        %2247 = vmatpush1.msra.mxu0 0.0
        %2248 = vmatprep.subr.mxu0 0.0
        %2249 = vmatpush1.msra.mxu0 0.0
        %2250 = vmatprep.subr.mxu0 0.0
        %2251 = vmatpush1.msra.mxu0 0.0
        %2252 = vmatprep.subr.mxu0 0.0
        %2253 = vmatpush1.msra.mxu0 0.0
        %2254 = vmatprep.subr.mxu0 0.0
        %2255 = vmatpush1.msra.mxu0 0.0
        %2256 = vmatprep.subr.mxu0 0.0
        %2257 = vmatpush1.msra.mxu0 0.0
        %2258 = vmatprep.subr.mxu0 0.0
        %2259 = vmatpush1.msra.mxu0 0.0
        %2260 = vmatprep.subr.mxu0 0.0
        %2261 = vmatpush1.msra.mxu0 %v1626
        %2262 = vmatprep.subr.mxu0 0.0
        %2263 = vmatpush1.msra.mxu0 %v1490
        %2264 = vmatprep.subr.mxu0 0.0
        %2265 = vmatpush2.msra.mxu0 0.0
        %2266 = vmatprep.subr.mxu0 0.0
        %2267 = vmatpush2.msra.mxu0 0.0
        %2268 = vmatprep.subr.mxu0 0.0
        %2269 = vmatpush2.msra.mxu0 0.0
        %2270 = vmatprep.subr.mxu0 0.0
        %2271 = vmatpush2.msra.mxu0 0.0
        %2272 = vmatprep.subr.mxu0 0.0
        %2273 = vmatpush2.msra.mxu0 0.0
        %2274 = vmatprep.subr.mxu0 0.0
        %2275 = vmatpush2.msra.mxu0 0.0
        %2276 = vmatprep.subr.mxu0 0.0
        %2277 = vmatpush2.msra.mxu0 0.0
        %2278 = vmatprep.subr.mxu0 0.0
        %2279 = vmatpush2.msra.mxu0 0.0
        %2280 = vmatprep.subr.mxu0 0.0
        %2281 = vmatpush2.msra.mxu0 0.0
        %2282 = vmatprep.subr.mxu0 0.0
        %2283 = vmatpush2.msra.mxu0 0.0
        %2284 = vmatprep.subr.mxu0 0.0
        %2285 = vmatpush2.msra.mxu0 0.0
        %2286 = vmatprep.subr.mxu0 0.0
        %2287 = vmatpush2.msra.mxu0 0.0
        %2288 = vmatprep.subr.mxu0 0.0
        %2289 = vmatpush2.msra.mxu0 0.0
        %2290 = vmatprep.subr.mxu0 0.0
        %2291 = vmatpush2.msra.mxu0 0.0
        %2292 = vmatprep.subr.mxu0 0.0
        %2293 = vmatpush2.msra.mxu0 0.0
        %2294 = vmatprep.subr.mxu0 0.0
        %2295 = vmatpush2.msra.mxu0 0.0
        %2296 = vmatprep.mubr.f32.mxu0 0.0
        %2297 = vmatmul.mubr.f32.gmra.mxu0 %v2227
        %v2298 = vpop.f32.mrf.mxu0
        %v2299 = vadd.f32 0.0, %v2298
        %v2300 = vpop.f32.mrf.mxu0
        %2301 = vmatprep.mubr.f32.mxu0 0.0
        %2302 = vmatmul.mubr.f32.gmra.mxu0 %v2230
        %v2303 = vpop.f32.mrf.mxu0
        %v2304 = vadd.f32 0.0, %v2303
        %v2305 = vpop.f32.mrf.mxu0
        %2306 = vdwg.mxu0
        %v2308 = vsel %vm977, %v1127, 0
        %v2311 = vsel %vm977, %v1129, 0
        %2313 = vmatprep.subr.mxu0 0.0
        %2314 = vmatpush1.msra.mxu0 0.0
        %2315 = vmatprep.subr.mxu0 0.0
        %2316 = vmatpush1.msra.mxu0 0.0
        %2317 = vmatprep.subr.mxu0 0.0
        %2318 = vmatpush1.msra.mxu0 0.0
        %2319 = vmatprep.subr.mxu0 0.0
        %2320 = vmatpush1.msra.mxu0 0.0
        %2321 = vmatprep.subr.mxu0 0.0
        %2322 = vmatpush1.msra.mxu0 0.0
        %2323 = vmatprep.subr.mxu0 0.0
        %2324 = vmatpush1.msra.mxu0 0.0
        %2325 = vmatprep.subr.mxu0 0.0
        %2326 = vmatpush1.msra.mxu0 0.0
        %2327 = vmatprep.subr.mxu0 0.0
        %2328 = vmatpush1.msra.mxu0 0.0
        %2329 = vmatprep.subr.mxu0 0.0
        %2330 = vmatpush1.msra.mxu0 0.0
        %2331 = vmatprep.subr.mxu0 0.0
        %2332 = vmatpush1.msra.mxu0 0.0
        %2333 = vmatprep.subr.mxu0 0.0
        %2334 = vmatpush1.msra.mxu0 0.0
        %2335 = vmatprep.subr.mxu0 0.0
        %2336 = vmatpush1.msra.mxu0 0.0
        %2337 = vmatprep.subr.mxu0 0.0
        %2338 = vmatpush1.msra.mxu0 0.0
        %2339 = vmatprep.subr.mxu0 0.0
        %2340 = vmatpush1.msra.mxu0 0.0
        %2341 = vmatprep.subr.mxu0 0.0
        %2342 = vmatpush1.msra.mxu0 %v1627
        %2343 = vmatprep.subr.mxu0 0.0
        %2344 = vmatpush1.msra.mxu0 %v1491
        %2345 = vmatprep.subr.mxu0 0.0
        %2346 = vmatpush2.msra.mxu0 0.0
        %2347 = vmatprep.subr.mxu0 0.0
        %2348 = vmatpush2.msra.mxu0 0.0
        %2349 = vmatprep.subr.mxu0 0.0
        %2350 = vmatpush2.msra.mxu0 0.0
        %2351 = vmatprep.subr.mxu0 0.0
        %2352 = vmatpush2.msra.mxu0 0.0
        %2353 = vmatprep.subr.mxu0 0.0
        %2354 = vmatpush2.msra.mxu0 0.0
        %2355 = vmatprep.subr.mxu0 0.0
        %2356 = vmatpush2.msra.mxu0 0.0
        %2357 = vmatprep.subr.mxu0 0.0
        %2358 = vmatpush2.msra.mxu0 0.0
        %2359 = vmatprep.subr.mxu0 0.0
        %2360 = vmatpush2.msra.mxu0 0.0
        %2361 = vmatprep.subr.mxu0 0.0
        %2362 = vmatpush2.msra.mxu0 0.0
        %2363 = vmatprep.subr.mxu0 0.0
        %2364 = vmatpush2.msra.mxu0 0.0
        %2365 = vmatprep.subr.mxu0 0.0
        %2366 = vmatpush2.msra.mxu0 0.0
        %2367 = vmatprep.subr.mxu0 0.0
        %2368 = vmatpush2.msra.mxu0 0.0
        %2369 = vmatprep.subr.mxu0 0.0
        %2370 = vmatpush2.msra.mxu0 0.0
        %2371 = vmatprep.subr.mxu0 0.0
        %2372 = vmatpush2.msra.mxu0 0.0
        %2373 = vmatprep.subr.mxu0 0.0
        %2374 = vmatpush2.msra.mxu0 0.0
        %2375 = vmatprep.subr.mxu0 0.0
        %2376 = vmatpush2.msra.mxu0 0.0
        %2377 = vmatprep.mubr.f32.mxu0 0.0
        %2378 = vmatmul.mubr.f32.gmra.mxu0 %v2308
        %v2379 = vpop.f32.mrf.mxu0
        %v2380 = vadd.f32 0.0, %v2379
        %v2381 = vpop.f32.mrf.mxu0
        %2382 = vmatprep.mubr.f32.mxu0 0.0
        %2383 = vmatmul.mubr.f32.gmra.mxu0 %v2311
        %v2384 = vpop.f32.mrf.mxu0
        %v2385 = vadd.f32 0.0, %v2384
        %v2386 = vpop.f32.mrf.mxu0
        %2387 = vdwg.mxu0
        %v2389 = vsel %vm977, %v1131, 0
        %v2392 = vsel %vm977, %v1133, 0
        %2394 = vmatprep.subr.mxu0 0.0
        %2395 = vmatpush1.msra.mxu0 0.0
        %2396 = vmatprep.subr.mxu0 0.0
        %2397 = vmatpush1.msra.mxu0 0.0
        %2398 = vmatprep.subr.mxu0 0.0
        %2399 = vmatpush1.msra.mxu0 0.0
        %2400 = vmatprep.subr.mxu0 0.0
        %2401 = vmatpush1.msra.mxu0 0.0
        %2402 = vmatprep.subr.mxu0 0.0
        %2403 = vmatpush1.msra.mxu0 0.0
        %2404 = vmatprep.subr.mxu0 0.0
        %2405 = vmatpush1.msra.mxu0 0.0
        %2406 = vmatprep.subr.mxu0 0.0
        %2407 = vmatpush1.msra.mxu0 0.0
        %2408 = vmatprep.subr.mxu0 0.0
        %2409 = vmatpush1.msra.mxu0 0.0
        %2410 = vmatprep.subr.mxu0 0.0
        %2411 = vmatpush1.msra.mxu0 0.0
        %2412 = vmatprep.subr.mxu0 0.0
        %2413 = vmatpush1.msra.mxu0 0.0
        %2414 = vmatprep.subr.mxu0 0.0
        %2415 = vmatpush1.msra.mxu0 0.0
        %2416 = vmatprep.subr.mxu0 0.0
        %2417 = vmatpush1.msra.mxu0 0.0
        %2418 = vmatprep.subr.mxu0 0.0
        %2419 = vmatpush1.msra.mxu0 0.0
        %2420 = vmatprep.subr.mxu0 0.0
        %2421 = vmatpush1.msra.mxu0 0.0
        %2422 = vmatprep.subr.mxu0 0.0
        %2423 = vmatpush1.msra.mxu0 %v1628
        %2424 = vmatprep.subr.mxu0 0.0
        %2425 = vmatpush1.msra.mxu0 %v1492
        %2426 = vmatprep.subr.mxu0 0.0
        %2427 = vmatpush2.msra.mxu0 0.0
        %2428 = vmatprep.subr.mxu0 0.0
        %2429 = vmatpush2.msra.mxu0 0.0
        %2430 = vmatprep.subr.mxu0 0.0
        %2431 = vmatpush2.msra.mxu0 0.0
        %2432 = vmatprep.subr.mxu0 0.0
        %2433 = vmatpush2.msra.mxu0 0.0
        %2434 = vmatprep.subr.mxu0 0.0
        %2435 = vmatpush2.msra.mxu0 0.0
        %2436 = vmatprep.subr.mxu0 0.0
        %2437 = vmatpush2.msra.mxu0 0.0
        %2438 = vmatprep.subr.mxu0 0.0
        %2439 = vmatpush2.msra.mxu0 0.0
        %2440 = vmatprep.subr.mxu0 0.0
        %2441 = vmatpush2.msra.mxu0 0.0
        %2442 = vmatprep.subr.mxu0 0.0
        %2443 = vmatpush2.msra.mxu0 0.0
        %2444 = vmatprep.subr.mxu0 0.0
        %2445 = vmatpush2.msra.mxu0 0.0
        %2446 = vmatprep.subr.mxu0 0.0
        %2447 = vmatpush2.msra.mxu0 0.0
        %2448 = vmatprep.subr.mxu0 0.0
        %2449 = vmatpush2.msra.mxu0 0.0
        %2450 = vmatprep.subr.mxu0 0.0
        %2451 = vmatpush2.msra.mxu0 0.0
        %2452 = vmatprep.subr.mxu0 0.0
        %2453 = vmatpush2.msra.mxu0 0.0
        %2454 = vmatprep.subr.mxu0 0.0
        %2455 = vmatpush2.msra.mxu0 0.0
        %2456 = vmatprep.subr.mxu0 0.0
        %2457 = vmatpush2.msra.mxu0 0.0
        %2458 = vmatprep.mubr.f32.mxu0 0.0
        %2459 = vmatmul.mubr.f32.gmra.mxu0 %v2389
        %v2460 = vpop.f32.mrf.mxu0
        %v2461 = vadd.f32 0.0, %v2460
        %v2462 = vpop.f32.mrf.mxu0
        %2463 = vmatprep.mubr.f32.mxu0 0.0
        %2464 = vmatmul.mubr.f32.gmra.mxu0 %v2392
        %v2465 = vpop.f32.mrf.mxu0
        %v2466 = vadd.f32 0.0, %v2465
        %v2467 = vpop.f32.mrf.mxu0
        %2468 = vdwg.mxu0
        %v2470 = vsel %vm977, %v1135, 0
        %v2473 = vsel %vm977, %v1137, 0
        %2475 = vmatprep.subr.mxu0 0.0
        %2476 = vmatpush1.msra.mxu0 0.0
        %2477 = vmatprep.subr.mxu0 0.0
        %2478 = vmatpush1.msra.mxu0 0.0
        %2479 = vmatprep.subr.mxu0 0.0
        %2480 = vmatpush1.msra.mxu0 0.0
        %2481 = vmatprep.subr.mxu0 0.0
        %2482 = vmatpush1.msra.mxu0 0.0
        %2483 = vmatprep.subr.mxu0 0.0
        %2484 = vmatpush1.msra.mxu0 0.0
        %2485 = vmatprep.subr.mxu0 0.0
        %2486 = vmatpush1.msra.mxu0 0.0
        %2487 = vmatprep.subr.mxu0 0.0
        %2488 = vmatpush1.msra.mxu0 0.0
        %2489 = vmatprep.subr.mxu0 0.0
        %2490 = vmatpush1.msra.mxu0 0.0
        %2491 = vmatprep.subr.mxu0 0.0
        %2492 = vmatpush1.msra.mxu0 0.0
        %2493 = vmatprep.subr.mxu0 0.0
        %2494 = vmatpush1.msra.mxu0 0.0
        %2495 = vmatprep.subr.mxu0 0.0
        %2496 = vmatpush1.msra.mxu0 0.0
        %2497 = vmatprep.subr.mxu0 0.0
        %2498 = vmatpush1.msra.mxu0 0.0
        %2499 = vmatprep.subr.mxu0 0.0
        %2500 = vmatpush1.msra.mxu0 0.0
        %2501 = vmatprep.subr.mxu0 0.0
        %2502 = vmatpush1.msra.mxu0 0.0
        %2503 = vmatprep.subr.mxu0 0.0
        %2504 = vmatpush1.msra.mxu0 %v1629
        %2505 = vmatprep.subr.mxu0 0.0
        %2506 = vmatpush1.msra.mxu0 %v1493
        %2507 = vmatprep.subr.mxu0 0.0
        %2508 = vmatpush2.msra.mxu0 0.0
        %2509 = vmatprep.subr.mxu0 0.0
        %2510 = vmatpush2.msra.mxu0 0.0
        %2511 = vmatprep.subr.mxu0 0.0
        %2512 = vmatpush2.msra.mxu0 0.0
        %2513 = vmatprep.subr.mxu0 0.0
        %2514 = vmatpush2.msra.mxu0 0.0
        %2515 = vmatprep.subr.mxu0 0.0
        %2516 = vmatpush2.msra.mxu0 0.0
        %2517 = vmatprep.subr.mxu0 0.0
        %2518 = vmatpush2.msra.mxu0 0.0
        %2519 = vmatprep.subr.mxu0 0.0
        %2520 = vmatpush2.msra.mxu0 0.0
        %2521 = vmatprep.subr.mxu0 0.0
        %2522 = vmatpush2.msra.mxu0 0.0
        %2523 = vmatprep.subr.mxu0 0.0
        %2524 = vmatpush2.msra.mxu0 0.0
        %2525 = vmatprep.subr.mxu0 0.0
        %2526 = vmatpush2.msra.mxu0 0.0
        %2527 = vmatprep.subr.mxu0 0.0
        %2528 = vmatpush2.msra.mxu0 0.0
        %2529 = vmatprep.subr.mxu0 0.0
        %2530 = vmatpush2.msra.mxu0 0.0
        %2531 = vmatprep.subr.mxu0 0.0
        %2532 = vmatpush2.msra.mxu0 0.0
        %2533 = vmatprep.subr.mxu0 0.0
        %2534 = vmatpush2.msra.mxu0 0.0
        %2535 = vmatprep.subr.mxu0 0.0
        %2536 = vmatpush2.msra.mxu0 0.0
        %2537 = vmatprep.subr.mxu0 0.0
        %2538 = vmatpush2.msra.mxu0 0.0
        %2539 = vmatprep.mubr.f32.mxu0 0.0
        %2540 = vmatmul.mubr.f32.gmra.mxu0 %v2470
        %v2541 = vpop.f32.mrf.mxu0
        %v2542 = vadd.f32 0.0, %v2541
        %v2543 = vpop.f32.mrf.mxu0
        %2544 = vmatprep.mubr.f32.mxu0 0.0
        %2545 = vmatmul.mubr.f32.gmra.mxu0 %v2473
        %v2546 = vpop.f32.mrf.mxu0
        %v2547 = vadd.f32 0.0, %v2546
        %v2548 = vpop.f32.mrf.mxu0
        %2549 = vdwg.mxu0
        %v2551 = vsel %vm977, %v1139, 0
        %v2554 = vsel %vm977, %v1141, 0
        %2556 = vmatprep.subr.mxu0 0.0
        %2557 = vmatpush1.msra.mxu0 0.0
        %2558 = vmatprep.subr.mxu0 0.0
        %2559 = vmatpush1.msra.mxu0 0.0
        %2560 = vmatprep.subr.mxu0 0.0
        %2561 = vmatpush1.msra.mxu0 0.0
        %2562 = vmatprep.subr.mxu0 0.0
        %2563 = vmatpush1.msra.mxu0 0.0
        %2564 = vmatprep.subr.mxu0 0.0
        %2565 = vmatpush1.msra.mxu0 0.0
        %2566 = vmatprep.subr.mxu0 0.0
        %2567 = vmatpush1.msra.mxu0 0.0
        %2568 = vmatprep.subr.mxu0 0.0
        %2569 = vmatpush1.msra.mxu0 0.0
        %2570 = vmatprep.subr.mxu0 0.0
        %2571 = vmatpush1.msra.mxu0 0.0
        %2572 = vmatprep.subr.mxu0 0.0
        %2573 = vmatpush1.msra.mxu0 0.0
        %2574 = vmatprep.subr.mxu0 0.0
        %2575 = vmatpush1.msra.mxu0 0.0
        %2576 = vmatprep.subr.mxu0 0.0
        %2577 = vmatpush1.msra.mxu0 0.0
        %2578 = vmatprep.subr.mxu0 0.0
        %2579 = vmatpush1.msra.mxu0 0.0
        %2580 = vmatprep.subr.mxu0 0.0
        %2581 = vmatpush1.msra.mxu0 0.0
        %2582 = vmatprep.subr.mxu0 0.0
        %2583 = vmatpush1.msra.mxu0 0.0
        %2584 = vmatprep.subr.mxu0 0.0
        %2585 = vmatpush1.msra.mxu0 %v1894
        %2586 = vmatprep.subr.mxu0 0.0
        %2587 = vmatpush1.msra.mxu0 %v1758
        %2588 = vmatprep.subr.mxu0 0.0
        %2589 = vmatpush2.msra.mxu0 0.0
        %2590 = vmatprep.subr.mxu0 0.0
        %2591 = vmatpush2.msra.mxu0 0.0
        %2592 = vmatprep.subr.mxu0 0.0
        %2593 = vmatpush2.msra.mxu0 0.0
        %2594 = vmatprep.subr.mxu0 0.0
        %2595 = vmatpush2.msra.mxu0 0.0
        %2596 = vmatprep.subr.mxu0 0.0
        %2597 = vmatpush2.msra.mxu0 0.0
        %2598 = vmatprep.subr.mxu0 0.0
        %2599 = vmatpush2.msra.mxu0 0.0
        %2600 = vmatprep.subr.mxu0 0.0
        %2601 = vmatpush2.msra.mxu0 0.0
        %2602 = vmatprep.subr.mxu0 0.0
        %2603 = vmatpush2.msra.mxu0 0.0
        %2604 = vmatprep.subr.mxu0 0.0
        %2605 = vmatpush2.msra.mxu0 0.0
        %2606 = vmatprep.subr.mxu0 0.0
        %2607 = vmatpush2.msra.mxu0 0.0
        %2608 = vmatprep.subr.mxu0 0.0
        %2609 = vmatpush2.msra.mxu0 0.0
        %2610 = vmatprep.subr.mxu0 0.0
        %2611 = vmatpush2.msra.mxu0 0.0
        %2612 = vmatprep.subr.mxu0 0.0
        %2613 = vmatpush2.msra.mxu0 0.0
        %2614 = vmatprep.subr.mxu0 0.0
        %2615 = vmatpush2.msra.mxu0 0.0
        %2616 = vmatprep.subr.mxu0 0.0
        %2617 = vmatpush2.msra.mxu0 0.0
        %2618 = vmatprep.subr.mxu0 0.0
        %2619 = vmatpush2.msra.mxu0 0.0
        %2620 = vmatprep.mubr.f32.mxu0 0.0
        %2621 = vmatmul.mubr.f32.gmra.mxu0 %v2551
        %v2622 = vpop.f32.mrf.mxu0
        %v2623 = vadd.f32 0.0, %v2622
        %v2624 = vpop.f32.mrf.mxu0
        %2625 = vmatprep.mubr.f32.mxu0 0.0
        %2626 = vmatmul.mubr.f32.gmra.mxu0 %v2554
        %v2627 = vpop.f32.mrf.mxu0
        %v2628 = vadd.f32 0.0, %v2627
        %v2629 = vpop.f32.mrf.mxu0
        %2630 = vdwg.mxu0
        %v2632 = vsel %vm977, %v1143, 0
        %v2635 = vsel %vm977, %v1145, 0
        %2637 = vmatprep.subr.mxu0 0.0
        %2638 = vmatpush1.msra.mxu0 0.0
        %2639 = vmatprep.subr.mxu0 0.0
        %2640 = vmatpush1.msra.mxu0 0.0
        %2641 = vmatprep.subr.mxu0 0.0
        %2642 = vmatpush1.msra.mxu0 0.0
        %2643 = vmatprep.subr.mxu0 0.0
        %2644 = vmatpush1.msra.mxu0 0.0
        %2645 = vmatprep.subr.mxu0 0.0
        %2646 = vmatpush1.msra.mxu0 0.0
        %2647 = vmatprep.subr.mxu0 0.0
        %2648 = vmatpush1.msra.mxu0 0.0
        %2649 = vmatprep.subr.mxu0 0.0
        %2650 = vmatpush1.msra.mxu0 0.0
        %2651 = vmatprep.subr.mxu0 0.0
        %2652 = vmatpush1.msra.mxu0 0.0
        %2653 = vmatprep.subr.mxu0 0.0
        %2654 = vmatpush1.msra.mxu0 0.0
        %2655 = vmatprep.subr.mxu0 0.0
        %2656 = vmatpush1.msra.mxu0 0.0
        %2657 = vmatprep.subr.mxu0 0.0
        %2658 = vmatpush1.msra.mxu0 0.0
        %2659 = vmatprep.subr.mxu0 0.0
        %2660 = vmatpush1.msra.mxu0 0.0
        %2661 = vmatprep.subr.mxu0 0.0
        %2662 = vmatpush1.msra.mxu0 0.0
        %2663 = vmatprep.subr.mxu0 0.0
        %2664 = vmatpush1.msra.mxu0 0.0
        %2665 = vmatprep.subr.mxu0 0.0
        %2666 = vmatpush1.msra.mxu0 %v1895
        %2667 = vmatprep.subr.mxu0 0.0
        %2668 = vmatpush1.msra.mxu0 %v1759
        %2669 = vmatprep.subr.mxu0 0.0
        %2670 = vmatpush2.msra.mxu0 0.0
        %2671 = vmatprep.subr.mxu0 0.0
        %2672 = vmatpush2.msra.mxu0 0.0
        %2673 = vmatprep.subr.mxu0 0.0
        %2674 = vmatpush2.msra.mxu0 0.0
        %2675 = vmatprep.subr.mxu0 0.0
        %2676 = vmatpush2.msra.mxu0 0.0
        %2677 = vmatprep.subr.mxu0 0.0
        %2678 = vmatpush2.msra.mxu0 0.0
        %2679 = vmatprep.subr.mxu0 0.0
        %2680 = vmatpush2.msra.mxu0 0.0
        %2681 = vmatprep.subr.mxu0 0.0
        %2682 = vmatpush2.msra.mxu0 0.0
        %2683 = vmatprep.subr.mxu0 0.0
        %2684 = vmatpush2.msra.mxu0 0.0
        %2685 = vmatprep.subr.mxu0 0.0
        %2686 = vmatpush2.msra.mxu0 0.0
        %2687 = vmatprep.subr.mxu0 0.0
        %2688 = vmatpush2.msra.mxu0 0.0
        %2689 = vmatprep.subr.mxu0 0.0
        %2690 = vmatpush2.msra.mxu0 0.0
        %2691 = vmatprep.subr.mxu0 0.0
        %2692 = vmatpush2.msra.mxu0 0.0
        %2693 = vmatprep.subr.mxu0 0.0
        %2694 = vmatpush2.msra.mxu0 0.0
        %2695 = vmatprep.subr.mxu0 0.0
        %2696 = vmatpush2.msra.mxu0 0.0
        %2697 = vmatprep.subr.mxu0 0.0
        %2698 = vmatpush2.msra.mxu0 0.0
        %2699 = vmatprep.subr.mxu0 0.0
        %2700 = vmatpush2.msra.mxu0 0.0
        %2701 = vmatprep.mubr.f32.mxu0 0.0
        %2702 = vmatmul.mubr.f32.gmra.mxu0 %v2632
        %v2703 = vpop.f32.mrf.mxu0
        %v2704 = vadd.f32 0.0, %v2703
        %v2705 = vpop.f32.mrf.mxu0
        %2706 = vmatprep.mubr.f32.mxu0 0.0
        %2707 = vmatmul.mubr.f32.gmra.mxu0 %v2635
        %v2708 = vpop.f32.mrf.mxu0
        %v2709 = vadd.f32 0.0, %v2708
        %v2710 = vpop.f32.mrf.mxu0
        %2711 = vdwg.mxu0
        %v2713 = vsel %vm977, %v1147, 0
        %v2716 = vsel %vm977, %v1149, 0
        %2718 = vmatprep.subr.mxu0 0.0
        %2719 = vmatpush1.msra.mxu0 0.0
        %2720 = vmatprep.subr.mxu0 0.0
        %2721 = vmatpush1.msra.mxu0 0.0
        %2722 = vmatprep.subr.mxu0 0.0
        %2723 = vmatpush1.msra.mxu0 0.0
        %2724 = vmatprep.subr.mxu0 0.0
        %2725 = vmatpush1.msra.mxu0 0.0
        %2726 = vmatprep.subr.mxu0 0.0
        %2727 = vmatpush1.msra.mxu0 0.0
        %2728 = vmatprep.subr.mxu0 0.0
        %2729 = vmatpush1.msra.mxu0 0.0
        %2730 = vmatprep.subr.mxu0 0.0
        %2731 = vmatpush1.msra.mxu0 0.0
        %2732 = vmatprep.subr.mxu0 0.0
        %2733 = vmatpush1.msra.mxu0 0.0
        %2734 = vmatprep.subr.mxu0 0.0
        %2735 = vmatpush1.msra.mxu0 0.0
        %2736 = vmatprep.subr.mxu0 0.0
        %2737 = vmatpush1.msra.mxu0 0.0
        %2738 = vmatprep.subr.mxu0 0.0
        %2739 = vmatpush1.msra.mxu0 0.0
        %2740 = vmatprep.subr.mxu0 0.0
        %2741 = vmatpush1.msra.mxu0 0.0
        %2742 = vmatprep.subr.mxu0 0.0
        %2743 = vmatpush1.msra.mxu0 0.0
        %2744 = vmatprep.subr.mxu0 0.0
        %2745 = vmatpush1.msra.mxu0 0.0
        %2746 = vmatprep.subr.mxu0 0.0
        %2747 = vmatpush1.msra.mxu0 %v1896
        %2748 = vmatprep.subr.mxu0 0.0
        %2749 = vmatpush1.msra.mxu0 %v1760
        %2750 = vmatprep.subr.mxu0 0.0
        %2751 = vmatpush2.msra.mxu0 0.0
        %2752 = vmatprep.subr.mxu0 0.0
        %2753 = vmatpush2.msra.mxu0 0.0
        %2754 = vmatprep.subr.mxu0 0.0
        %2755 = vmatpush2.msra.mxu0 0.0
        %2756 = vmatprep.subr.mxu0 0.0
        %2757 = vmatpush2.msra.mxu0 0.0
        %2758 = vmatprep.subr.mxu0 0.0
        %2759 = vmatpush2.msra.mxu0 0.0
        %2760 = vmatprep.subr.mxu0 0.0
        %2761 = vmatpush2.msra.mxu0 0.0
        %2762 = vmatprep.subr.mxu0 0.0
        %2763 = vmatpush2.msra.mxu0 0.0
        %2764 = vmatprep.subr.mxu0 0.0
        %2765 = vmatpush2.msra.mxu0 0.0
        %2766 = vmatprep.subr.mxu0 0.0
        %2767 = vmatpush2.msra.mxu0 0.0
        %2768 = vmatprep.subr.mxu0 0.0
        %2769 = vmatpush2.msra.mxu0 0.0
        %2770 = vmatprep.subr.mxu0 0.0
        %2771 = vmatpush2.msra.mxu0 0.0
        %2772 = vmatprep.subr.mxu0 0.0
        %2773 = vmatpush2.msra.mxu0 0.0
        %2774 = vmatprep.subr.mxu0 0.0
        %2775 = vmatpush2.msra.mxu0 0.0
        %2776 = vmatprep.subr.mxu0 0.0
        %2777 = vmatpush2.msra.mxu0 0.0
        %2778 = vmatprep.subr.mxu0 0.0
        %2779 = vmatpush2.msra.mxu0 0.0
        %2780 = vmatprep.subr.mxu0 0.0
        %2781 = vmatpush2.msra.mxu0 0.0
        %2782 = vmatprep.mubr.f32.mxu0 0.0
        %2783 = vmatmul.mubr.f32.gmra.mxu0 %v2713
        %v2784 = vpop.f32.mrf.mxu0
        %v2785 = vadd.f32 0.0, %v2784
        %v2786 = vpop.f32.mrf.mxu0
        %2787 = vmatprep.mubr.f32.mxu0 0.0
        %2788 = vmatmul.mubr.f32.gmra.mxu0 %v2716
        %v2789 = vpop.f32.mrf.mxu0
        %v2790 = vadd.f32 0.0, %v2789
        %v2791 = vpop.f32.mrf.mxu0
        %2792 = vdwg.mxu0
        %v2794 = vsel %vm977, %v1151, 0
        %v2797 = vsel %vm977, %v1153, 0
        %2799 = vmatprep.subr.mxu0 0.0
        %2800 = vmatpush1.msra.mxu0 0.0
        %2801 = vmatprep.subr.mxu0 0.0
        %2802 = vmatpush1.msra.mxu0 0.0
        %2803 = vmatprep.subr.mxu0 0.0
        %2804 = vmatpush1.msra.mxu0 0.0
        %2805 = vmatprep.subr.mxu0 0.0
        %2806 = vmatpush1.msra.mxu0 0.0
        %2807 = vmatprep.subr.mxu0 0.0
        %2808 = vmatpush1.msra.mxu0 0.0
        %2809 = vmatprep.subr.mxu0 0.0
        %2810 = vmatpush1.msra.mxu0 0.0
        %2811 = vmatprep.subr.mxu0 0.0
        %2812 = vmatpush1.msra.mxu0 0.0
        %2813 = vmatprep.subr.mxu0 0.0
        %2814 = vmatpush1.msra.mxu0 0.0
        %2815 = vmatprep.subr.mxu0 0.0
        %2816 = vmatpush1.msra.mxu0 0.0
        %2817 = vmatprep.subr.mxu0 0.0
        %2818 = vmatpush1.msra.mxu0 0.0
        %2819 = vmatprep.subr.mxu0 0.0
        %2820 = vmatpush1.msra.mxu0 0.0
        %2821 = vmatprep.subr.mxu0 0.0
        %2822 = vmatpush1.msra.mxu0 0.0
        %2823 = vmatprep.subr.mxu0 0.0
        %2824 = vmatpush1.msra.mxu0 0.0
        %2825 = vmatprep.subr.mxu0 0.0
        %2826 = vmatpush1.msra.mxu0 0.0
        %2827 = vmatprep.subr.mxu0 0.0
        %2828 = vmatpush1.msra.mxu0 %v1897
        %2829 = vmatprep.subr.mxu0 0.0
        %2830 = vmatpush1.msra.mxu0 %v1761
        %2831 = vmatprep.subr.mxu0 0.0
        %2832 = vmatpush2.msra.mxu0 0.0
        %2833 = vmatprep.subr.mxu0 0.0
        %2834 = vmatpush2.msra.mxu0 0.0
        %2835 = vmatprep.subr.mxu0 0.0
        %2836 = vmatpush2.msra.mxu0 0.0
        %2837 = vmatprep.subr.mxu0 0.0
        %2838 = vmatpush2.msra.mxu0 0.0
        %2839 = vmatprep.subr.mxu0 0.0
        %2840 = vmatpush2.msra.mxu0 0.0
        %2841 = vmatprep.subr.mxu0 0.0
        %2842 = vmatpush2.msra.mxu0 0.0
        %2843 = vmatprep.subr.mxu0 0.0
        %2844 = vmatpush2.msra.mxu0 0.0
        %2845 = vmatprep.subr.mxu0 0.0
        %2846 = vmatpush2.msra.mxu0 0.0
        %2847 = vmatprep.subr.mxu0 0.0
        %2848 = vmatpush2.msra.mxu0 0.0
        %2849 = vmatprep.subr.mxu0 0.0
        %2850 = vmatpush2.msra.mxu0 0.0
        %2851 = vmatprep.subr.mxu0 0.0
        %2852 = vmatpush2.msra.mxu0 0.0
        %2853 = vmatprep.subr.mxu0 0.0
        %2854 = vmatpush2.msra.mxu0 0.0
        %2855 = vmatprep.subr.mxu0 0.0
        %2856 = vmatpush2.msra.mxu0 0.0
        %2857 = vmatprep.subr.mxu0 0.0
        %2858 = vmatpush2.msra.mxu0 0.0
        %2859 = vmatprep.subr.mxu0 0.0
        %2860 = vmatpush2.msra.mxu0 0.0
        %2861 = vmatprep.subr.mxu0 0.0
        %2862 = vmatpush2.msra.mxu0 0.0
        %2863 = vmatprep.mubr.f32.mxu0 0.0
        %2864 = vmatmul.mubr.f32.gmra.mxu0 %v2794
        %v2865 = vpop.f32.mrf.mxu0
        %v2866 = vadd.f32 0.0, %v2865
        %v2867 = vpop.f32.mrf.mxu0
        %2868 = vmatprep.mubr.f32.mxu0 0.0
        %2869 = vmatmul.mubr.f32.gmra.mxu0 %v2797
        %v2870 = vpop.f32.mrf.mxu0
        %v2871 = vadd.f32 0.0, %v2870
        %v2872 = vpop.f32.mrf.mxu0
        %2873 = vdwg.mxu0
        %v2875 = vsel %vm977, %v1155, 0
        %v2878 = vsel %vm977, %v1157, 0
        %2880 = vmatprep.subr.mxu0 0.0
        %2881 = vmatpush1.msra.mxu0 0.0
        %2882 = vmatprep.subr.mxu0 0.0
        %2883 = vmatpush1.msra.mxu0 0.0
        %2884 = vmatprep.subr.mxu0 0.0
        %2885 = vmatpush1.msra.mxu0 0.0
        %2886 = vmatprep.subr.mxu0 0.0
        %2887 = vmatpush1.msra.mxu0 0.0
        %2888 = vmatprep.subr.mxu0 0.0
        %2889 = vmatpush1.msra.mxu0 0.0
        %2890 = vmatprep.subr.mxu0 0.0
        %2891 = vmatpush1.msra.mxu0 0.0
        %2892 = vmatprep.subr.mxu0 0.0
        %2893 = vmatpush1.msra.mxu0 0.0
        %2894 = vmatprep.subr.mxu0 0.0
        %2895 = vmatpush1.msra.mxu0 0.0
        %2896 = vmatprep.subr.mxu0 0.0
        %2897 = vmatpush1.msra.mxu0 0.0
        %2898 = vmatprep.subr.mxu0 0.0
        %2899 = vmatpush1.msra.mxu0 0.0
        %2900 = vmatprep.subr.mxu0 0.0
        %2901 = vmatpush1.msra.mxu0 0.0
        %2902 = vmatprep.subr.mxu0 0.0
        %2903 = vmatpush1.msra.mxu0 0.0
        %2904 = vmatprep.subr.mxu0 0.0
        %2905 = vmatpush1.msra.mxu0 0.0
        %2906 = vmatprep.subr.mxu0 0.0
        %2907 = vmatpush1.msra.mxu0 0.0
        %2908 = vmatprep.subr.mxu0 0.0
        %2909 = vmatpush1.msra.mxu0 %v1898
        %2910 = vmatprep.subr.mxu0 0.0
        %2911 = vmatpush1.msra.mxu0 %v1762
        %2912 = vmatprep.subr.mxu0 0.0
        %2913 = vmatpush2.msra.mxu0 0.0
        %2914 = vmatprep.subr.mxu0 0.0
        %2915 = vmatpush2.msra.mxu0 0.0
        %2916 = vmatprep.subr.mxu0 0.0
        %2917 = vmatpush2.msra.mxu0 0.0
        %2918 = vmatprep.subr.mxu0 0.0
        %2919 = vmatpush2.msra.mxu0 0.0
        %2920 = vmatprep.subr.mxu0 0.0
        %2921 = vmatpush2.msra.mxu0 0.0
        %2922 = vmatprep.subr.mxu0 0.0
        %2923 = vmatpush2.msra.mxu0 0.0
        %2924 = vmatprep.subr.mxu0 0.0
        %2925 = vmatpush2.msra.mxu0 0.0
        %2926 = vmatprep.subr.mxu0 0.0
        %2927 = vmatpush2.msra.mxu0 0.0
        %2928 = vmatprep.subr.mxu0 0.0
        %2929 = vmatpush2.msra.mxu0 0.0
        %2930 = vmatprep.subr.mxu0 0.0
        %2931 = vmatpush2.msra.mxu0 0.0
        %2932 = vmatprep.subr.mxu0 0.0
        %2933 = vmatpush2.msra.mxu0 0.0
        %2934 = vmatprep.subr.mxu0 0.0
        %2935 = vmatpush2.msra.mxu0 0.0
        %2936 = vmatprep.subr.mxu0 0.0
        %2937 = vmatpush2.msra.mxu0 0.0
        %2938 = vmatprep.subr.mxu0 0.0
        %2939 = vmatpush2.msra.mxu0 0.0
        %2940 = vmatprep.subr.mxu0 0.0
        %2941 = vmatpush2.msra.mxu0 0.0
        %2942 = vmatprep.subr.mxu0 0.0
        %2943 = vmatpush2.msra.mxu0 0.0
        %2944 = vmatprep.mubr.f32.mxu0 0.0
        %2945 = vmatmul.mubr.f32.gmra.mxu0 %v2875
        %v2946 = vpop.f32.mrf.mxu0
        %v2947 = vadd.f32 0.0, %v2946
        %v2948 = vpop.f32.mrf.mxu0
        %2949 = vmatprep.mubr.f32.mxu0 0.0
        %2950 = vmatmul.mubr.f32.gmra.mxu0 %v2878
        %v2951 = vpop.f32.mrf.mxu0
        %v2952 = vadd.f32 0.0, %v2951
        %v2953 = vpop.f32.mrf.mxu0
        %2954 = vdwg.mxu0
        %v2956 = vsel %vm977, %v1159, 0
        %v2959 = vsel %vm977, %v1161, 0
        %2961 = vmatprep.subr.mxu0 0.0
        %2962 = vmatpush1.msra.mxu0 0.0
        %2963 = vmatprep.subr.mxu0 0.0
        %2964 = vmatpush1.msra.mxu0 0.0
        %2965 = vmatprep.subr.mxu0 0.0
        %2966 = vmatpush1.msra.mxu0 0.0
        %2967 = vmatprep.subr.mxu0 0.0
        %2968 = vmatpush1.msra.mxu0 0.0
        %2969 = vmatprep.subr.mxu0 0.0
        %2970 = vmatpush1.msra.mxu0 0.0
        %2971 = vmatprep.subr.mxu0 0.0
        %2972 = vmatpush1.msra.mxu0 0.0
        %2973 = vmatprep.subr.mxu0 0.0
        %2974 = vmatpush1.msra.mxu0 0.0
        %2975 = vmatprep.subr.mxu0 0.0
        %2976 = vmatpush1.msra.mxu0 0.0
        %2977 = vmatprep.subr.mxu0 0.0
        %2978 = vmatpush1.msra.mxu0 0.0
        %2979 = vmatprep.subr.mxu0 0.0
        %2980 = vmatpush1.msra.mxu0 0.0
        %2981 = vmatprep.subr.mxu0 0.0
        %2982 = vmatpush1.msra.mxu0 0.0
        %2983 = vmatprep.subr.mxu0 0.0
        %2984 = vmatpush1.msra.mxu0 0.0
        %2985 = vmatprep.subr.mxu0 0.0
        %2986 = vmatpush1.msra.mxu0 0.0
        %2987 = vmatprep.subr.mxu0 0.0
        %2988 = vmatpush1.msra.mxu0 0.0
        %2989 = vmatprep.subr.mxu0 0.0
        %2990 = vmatpush1.msra.mxu0 %v1899
        %2991 = vmatprep.subr.mxu0 0.0
        %2992 = vmatpush1.msra.mxu0 %v1763
        %2993 = vmatprep.subr.mxu0 0.0
        %2994 = vmatpush2.msra.mxu0 0.0
        %2995 = vmatprep.subr.mxu0 0.0
        %2996 = vmatpush2.msra.mxu0 0.0
        %2997 = vmatprep.subr.mxu0 0.0
        %2998 = vmatpush2.msra.mxu0 0.0
        %2999 = vmatprep.subr.mxu0 0.0
        %3000 = vmatpush2.msra.mxu0 0.0
        %3001 = vmatprep.subr.mxu0 0.0
        %3002 = vmatpush2.msra.mxu0 0.0
        %3003 = vmatprep.subr.mxu0 0.0
        %3004 = vmatpush2.msra.mxu0 0.0
        %3005 = vmatprep.subr.mxu0 0.0
        %3006 = vmatpush2.msra.mxu0 0.0
        %3007 = vmatprep.subr.mxu0 0.0
        %3008 = vmatpush2.msra.mxu0 0.0
        %3009 = vmatprep.subr.mxu0 0.0
        %3010 = vmatpush2.msra.mxu0 0.0
        %3011 = vmatprep.subr.mxu0 0.0
        %3012 = vmatpush2.msra.mxu0 0.0
        %3013 = vmatprep.subr.mxu0 0.0
        %3014 = vmatpush2.msra.mxu0 0.0
        %3015 = vmatprep.subr.mxu0 0.0
        %3016 = vmatpush2.msra.mxu0 0.0
        %3017 = vmatprep.subr.mxu0 0.0
        %3018 = vmatpush2.msra.mxu0 0.0
        %3019 = vmatprep.subr.mxu0 0.0
        %3020 = vmatpush2.msra.mxu0 0.0
        %3021 = vmatprep.subr.mxu0 0.0
        %3022 = vmatpush2.msra.mxu0 0.0
        %3023 = vmatprep.subr.mxu0 0.0
        %3024 = vmatpush2.msra.mxu0 0.0
        %3025 = vmatprep.mubr.f32.mxu0 0.0
        %3026 = vmatmul.mubr.f32.gmra.mxu0 %v2956
        %v3027 = vpop.f32.mrf.mxu0
        %v3028 = vadd.f32 0.0, %v3027
        %v3029 = vpop.f32.mrf.mxu0
        %3030 = vmatprep.mubr.f32.mxu0 0.0
        %3031 = vmatmul.mubr.f32.gmra.mxu0 %v2959
        %v3032 = vpop.f32.mrf.mxu0
        %v3033 = vadd.f32 0.0, %v3032
        %v3034 = vpop.f32.mrf.mxu0
        %3035 = vdwg.mxu0
        %v3037 = vsel %vm977, %v1163, 0
        %v3040 = vsel %vm977, %v1165, 0
        %3042 = vmatprep.subr.mxu0 0.0
        %3043 = vmatpush1.msra.mxu0 0.0
        %3044 = vmatprep.subr.mxu0 0.0
        %3045 = vmatpush1.msra.mxu0 0.0
        %3046 = vmatprep.subr.mxu0 0.0
        %3047 = vmatpush1.msra.mxu0 0.0
        %3048 = vmatprep.subr.mxu0 0.0
        %3049 = vmatpush1.msra.mxu0 0.0
        %3050 = vmatprep.subr.mxu0 0.0
        %3051 = vmatpush1.msra.mxu0 0.0
        %3052 = vmatprep.subr.mxu0 0.0
        %3053 = vmatpush1.msra.mxu0 0.0
        %3054 = vmatprep.subr.mxu0 0.0
        %3055 = vmatpush1.msra.mxu0 0.0
        %3056 = vmatprep.subr.mxu0 0.0
        %3057 = vmatpush1.msra.mxu0 0.0
        %3058 = vmatprep.subr.mxu0 0.0
        %3059 = vmatpush1.msra.mxu0 0.0
        %3060 = vmatprep.subr.mxu0 0.0
        %3061 = vmatpush1.msra.mxu0 0.0
        %3062 = vmatprep.subr.mxu0 0.0
        %3063 = vmatpush1.msra.mxu0 0.0
        %3064 = vmatprep.subr.mxu0 0.0
        %3065 = vmatpush1.msra.mxu0 0.0
        %3066 = vmatprep.subr.mxu0 0.0
        %3067 = vmatpush1.msra.mxu0 0.0
        %3068 = vmatprep.subr.mxu0 0.0
        %3069 = vmatpush1.msra.mxu0 0.0
        %3070 = vmatprep.subr.mxu0 0.0
        %3071 = vmatpush1.msra.mxu0 %v1900
        %3072 = vmatprep.subr.mxu0 0.0
        %3073 = vmatpush1.msra.mxu0 %v1764
        %3074 = vmatprep.subr.mxu0 0.0
        %3075 = vmatpush2.msra.mxu0 0.0
        %3076 = vmatprep.subr.mxu0 0.0
        %3077 = vmatpush2.msra.mxu0 0.0
        %3078 = vmatprep.subr.mxu0 0.0
        %3079 = vmatpush2.msra.mxu0 0.0
        %3080 = vmatprep.subr.mxu0 0.0
        %3081 = vmatpush2.msra.mxu0 0.0
        %3082 = vmatprep.subr.mxu0 0.0
        %3083 = vmatpush2.msra.mxu0 0.0
        %3084 = vmatprep.subr.mxu0 0.0
        %3085 = vmatpush2.msra.mxu0 0.0
        %3086 = vmatprep.subr.mxu0 0.0
        %3087 = vmatpush2.msra.mxu0 0.0
        %3088 = vmatprep.subr.mxu0 0.0
        %3089 = vmatpush2.msra.mxu0 0.0
        %3090 = vmatprep.subr.mxu0 0.0
        %3091 = vmatpush2.msra.mxu0 0.0
        %3092 = vmatprep.subr.mxu0 0.0
        %3093 = vmatpush2.msra.mxu0 0.0
        %3094 = vmatprep.subr.mxu0 0.0
        %3095 = vmatpush2.msra.mxu0 0.0
        %3096 = vmatprep.subr.mxu0 0.0
        %3097 = vmatpush2.msra.mxu0 0.0
        %3098 = vmatprep.subr.mxu0 0.0
        %3099 = vmatpush2.msra.mxu0 0.0
        %3100 = vmatprep.subr.mxu0 0.0
        %3101 = vmatpush2.msra.mxu0 0.0
        %3102 = vmatprep.subr.mxu0 0.0
        %3103 = vmatpush2.msra.mxu0 0.0
        %3104 = vmatprep.subr.mxu0 0.0
        %3105 = vmatpush2.msra.mxu0 0.0
        %3106 = vmatprep.mubr.f32.mxu0 0.0
        %3107 = vmatmul.mubr.f32.gmra.mxu0 %v3037
        %v3108 = vpop.f32.mrf.mxu0
        %v3109 = vadd.f32 0.0, %v3108
        %v3110 = vpop.f32.mrf.mxu0
        %3111 = vmatprep.mubr.f32.mxu0 0.0
        %3112 = vmatmul.mubr.f32.gmra.mxu0 %v3040
        %v3113 = vpop.f32.mrf.mxu0
        %v3114 = vadd.f32 0.0, %v3113
        %v3115 = vpop.f32.mrf.mxu0
        %3116 = vdwg.mxu0
        %v3118 = vsel %vm977, %v1167, 0
        %v3121 = vsel %vm977, %v1169, 0
        %3123 = vmatprep.subr.mxu0 0.0
        %3124 = vmatpush1.msra.mxu0 0.0
        %3125 = vmatprep.subr.mxu0 0.0
        %3126 = vmatpush1.msra.mxu0 0.0
        %3127 = vmatprep.subr.mxu0 0.0
        %3128 = vmatpush1.msra.mxu0 0.0
        %3129 = vmatprep.subr.mxu0 0.0
        %3130 = vmatpush1.msra.mxu0 0.0
        %3131 = vmatprep.subr.mxu0 0.0
        %3132 = vmatpush1.msra.mxu0 0.0
        %3133 = vmatprep.subr.mxu0 0.0
        %3134 = vmatpush1.msra.mxu0 0.0
        %3135 = vmatprep.subr.mxu0 0.0
        %3136 = vmatpush1.msra.mxu0 0.0
        %3137 = vmatprep.subr.mxu0 0.0
        %3138 = vmatpush1.msra.mxu0 0.0
        %3139 = vmatprep.subr.mxu0 0.0
        %3140 = vmatpush1.msra.mxu0 0.0
        %3141 = vmatprep.subr.mxu0 0.0
        %3142 = vmatpush1.msra.mxu0 0.0
        %3143 = vmatprep.subr.mxu0 0.0
        %3144 = vmatpush1.msra.mxu0 0.0
        %3145 = vmatprep.subr.mxu0 0.0
        %3146 = vmatpush1.msra.mxu0 0.0
        %3147 = vmatprep.subr.mxu0 0.0
        %3148 = vmatpush1.msra.mxu0 0.0
        %3149 = vmatprep.subr.mxu0 0.0
        %3150 = vmatpush1.msra.mxu0 0.0
        %3151 = vmatprep.subr.mxu0 0.0
        %3152 = vmatpush1.msra.mxu0 %v1901
        %3153 = vmatprep.subr.mxu0 0.0
        %3154 = vmatpush1.msra.mxu0 %v1765
        %3155 = vmatprep.subr.mxu0 0.0
        %3156 = vmatpush2.msra.mxu0 0.0
        %3157 = vmatprep.subr.mxu0 0.0
        %3158 = vmatpush2.msra.mxu0 0.0
        %3159 = vmatprep.subr.mxu0 0.0
        %3160 = vmatpush2.msra.mxu0 0.0
        %3161 = vmatprep.subr.mxu0 0.0
        %3162 = vmatpush2.msra.mxu0 0.0
        %3163 = vmatprep.subr.mxu0 0.0
        %3164 = vmatpush2.msra.mxu0 0.0
        %3165 = vmatprep.subr.mxu0 0.0
        %3166 = vmatpush2.msra.mxu0 0.0
        %3167 = vmatprep.subr.mxu0 0.0
        %3168 = vmatpush2.msra.mxu0 0.0
        %3169 = vmatprep.subr.mxu0 0.0
        %3170 = vmatpush2.msra.mxu0 0.0
        %3171 = vmatprep.subr.mxu0 0.0
        %3172 = vmatpush2.msra.mxu0 0.0
        %3173 = vmatprep.subr.mxu0 0.0
        %3174 = vmatpush2.msra.mxu0 0.0
        %3175 = vmatprep.subr.mxu0 0.0
        %3176 = vmatpush2.msra.mxu0 0.0
        %3177 = vmatprep.subr.mxu0 0.0
        %3178 = vmatpush2.msra.mxu0 0.0
        %3179 = vmatprep.subr.mxu0 0.0
        %3180 = vmatpush2.msra.mxu0 0.0
        %3181 = vmatprep.subr.mxu0 0.0
        %3182 = vmatpush2.msra.mxu0 0.0
        %3183 = vmatprep.subr.mxu0 0.0
        %3184 = vmatpush2.msra.mxu0 0.0
        %3185 = vmatprep.subr.mxu0 0.0
        %3186 = vmatpush2.msra.mxu0 0.0
        %3187 = vmatprep.mubr.f32.mxu0 0.0
        %3188 = vmatmul.mubr.f32.gmra.mxu0 %v3118
        %v3189 = vpop.f32.mrf.mxu0
        %v3190 = vadd.f32 0.0, %v3189
        %v3191 = vpop.f32.mrf.mxu0
        %3192 = vmatprep.mubr.f32.mxu0 0.0
        %3193 = vmatmul.mubr.f32.gmra.mxu0 %v3121
        %v3194 = vpop.f32.mrf.mxu0
        %v3195 = vadd.f32 0.0, %v3194
        %v3196 = vpop.f32.mrf.mxu0
        %3197 = vdwg.mxu0
        %v3198 = vrcp.pop %v1172
        %v3199 = vrcp.pop %v1175
        %v3200 = vrcp.pop %v1178
        %v3201 = vrcp.pop %v1181
        %v3202 = vrcp.pop %v1184
        %v3203 = vrcp.pop %v1187
        %v3204 = vrcp.pop %v1190
        %v3205 = vrcp.pop %v1193
        %v3206 = vrcp.pop %v1196
        %v3207 = vrcp.pop %v1199
        %v3208 = vrcp.pop %v1202
        %v3209 = vrcp.pop %v1205
        %v3210 = vrcp.pop %v1208
        %v3211 = vrcp.pop %v1211
        %v3212 = vrcp.pop %v1214
        %v3213 = vrcp.pop %v1217
        %v3214 = vrcp.pop %v1220
        %v3215 = vrcp.pop %v1223
        %v3216 = vrcp.pop %v1226
        %v3217 = vrcp.pop %v1229
        %v3218 = vrcp.pop %v1232
        %v3219 = vrcp.pop %v1235
        %v3220 = vrcp.pop %v1238
        %v3221 = vrcp.pop %v1241
        %v3222 = vrcp.pop %v1244
        %v3223 = vrcp.pop %v1247
        %v3224 = vrcp.pop %v1250
        %v3225 = vrcp.pop %v1253
        %v3226 = vrcp.pop %v1256
        %v3227 = vrcp.pop %v1259
        %v3228 = vrcp.pop %v1262
        %v3229 = vrcp.pop %v1265
        %v3230 = vmul.f32 %v1975, %v3198
        %v3231 = vmul.f32 %v1980, %v3199
        %v3232 = vmul.f32 %v2056, %v3200
        %v3233 = vmul.f32 %v2061, %v3201
        %v3234 = vmul.f32 %v2137, %v3202
        %v3235 = vmul.f32 %v2142, %v3203
        %v3236 = vmul.f32 %v2218, %v3204
        %v3237 = vmul.f32 %v2223, %v3205
        %v3238 = vmul.f32 %v2299, %v3206
        %v3239 = vmul.f32 %v2304, %v3207
        %v3240 = vmul.f32 %v2380, %v3208
        %v3241 = vmul.f32 %v2385, %v3209
        %v3242 = vmul.f32 %v2461, %v3210
        %v3243 = vmul.f32 %v2466, %v3211
        %v3244 = vmul.f32 %v2542, %v3212
        %v3245 = vmul.f32 %v2547, %v3213
        %v3246 = vmul.f32 %v2623, %v3214
        %v3247 = vmul.f32 %v2628, %v3215
        %v3248 = vmul.f32 %v2704, %v3216
        %v3249 = vmul.f32 %v2709, %v3217
        %v3250 = vmul.f32 %v2785, %v3218
        %v3251 = vmul.f32 %v2790, %v3219
        %v3252 = vmul.f32 %v2866, %v3220
        %v3253 = vmul.f32 %v2871, %v3221
        %v3254 = vmul.f32 %v2947, %v3222
        %v3255 = vmul.f32 %v2952, %v3223
        %v3256 = vmul.f32 %v3028, %v3224
        %v3257 = vmul.f32 %v3033, %v3225
        %v3258 = vmul.f32 %v3109, %v3226
        %v3259 = vmul.f32 %v3114, %v3227
        %v3260 = vmul.f32 %v3190, %v3228
        %v3261 = vmul.f32 %v3195, %v3229
        %v3262 = vcombine.low %v3230, %v3234
        %v3263 = vcombine.high %v3230, %v3234
        %v3265 = vunpack.c.l.s4 1983009808
        %v3266 = vunpack.c.0.s8 %v3265
        %v3267 = vlaneseq
        %v3268 = vshrl.u32 %v3267, 7
        %v3269 = vsub.s32 %v3266, %v3268
        %v3270 = vrot.slane %v3262, %v3269
        %v3272 = vunpack.c.l.s4 1983009808
        %v3273 = vunpack.c.0.s8 %v3272
        %v3274 = vlaneseq
        %v3275 = vshrl.u32 %v3274, 7
        %v3276 = vsub.s32 %v3273, %v3275
        %v3277 = vrot.slane %v3263, %v3276
        %v3278 = vcombine.low %v3232, %v3236
        %v3279 = vcombine.high %v3232, %v3236
        %v3281 = vunpack.c.l.s4 1983009808
        %v3282 = vunpack.c.0.s8 %v3281
        %v3283 = vlaneseq
        %v3284 = vshrl.u32 %v3283, 7
        %v3285 = vsub.s32 %v3282, %v3284
        %v3286 = vrot.slane %v3278, %v3285
        %v3288 = vunpack.c.l.s4 1983009808
        %v3289 = vunpack.c.0.s8 %v3288
        %v3290 = vlaneseq
        %v3291 = vshrl.u32 %v3290, 7
        %v3292 = vsub.s32 %v3289, %v3291
        %v3293 = vrot.slane %v3279, %v3292
        %v3294 = vcombine.low %v3238, %v3242
        %v3295 = vcombine.high %v3238, %v3242
        %v3297 = vunpack.c.l.s4 1983009808
        %v3298 = vunpack.c.0.s8 %v3297
        %v3299 = vlaneseq
        %v3300 = vshrl.u32 %v3299, 7
        %v3301 = vsub.s32 %v3298, %v3300
        %v3302 = vrot.slane %v3294, %v3301
        %v3304 = vunpack.c.l.s4 1983009808
        %v3305 = vunpack.c.0.s8 %v3304
        %v3306 = vlaneseq
        %v3307 = vshrl.u32 %v3306, 7
        %v3308 = vsub.s32 %v3305, %v3307
        %v3309 = vrot.slane %v3295, %v3308
        %v3310 = vcombine.low %v3240, %v3244
        %v3311 = vcombine.high %v3240, %v3244
        %v3313 = vunpack.c.l.s4 1983009808
        %v3314 = vunpack.c.0.s8 %v3313
        %v3315 = vlaneseq
        %v3316 = vshrl.u32 %v3315, 7
        %v3317 = vsub.s32 %v3314, %v3316
        %v3318 = vrot.slane %v3310, %v3317
        %v3320 = vunpack.c.l.s4 1983009808
        %v3321 = vunpack.c.0.s8 %v3320
        %v3322 = vlaneseq
        %v3323 = vshrl.u32 %v3322, 7
        %v3324 = vsub.s32 %v3321, %v3323
        %v3325 = vrot.slane %v3311, %v3324
        %v3326 = vcombine.low %v3270, %v3286
        %v3327 = vcombine.high %v3270, %v3286
        %v3329 = vunpack.c.l.s4 1934713408
        %v3330 = vunpack.c.0.s8 %v3329
        %v3331 = vlaneseq
        %v3332 = vshrl.u32 %v3331, 7
        %v3333 = vsub.s32 %v3330, %v3332
        %v3334 = vrot.slane %v3326, %v3333
        %v3336 = vunpack.c.l.s4 1934713408
        %v3337 = vunpack.c.0.s8 %v3336
        %v3338 = vlaneseq
        %v3339 = vshrl.u32 %v3338, 7
        %v3340 = vsub.s32 %v3337, %v3339
        %v3341 = vrot.slane %v3327, %v3340
        %v3342 = vcombine.low %v3277, %v3293
        %v3343 = vcombine.high %v3277, %v3293
        %v3345 = vunpack.c.l.s4 1934713408
        %v3346 = vunpack.c.0.s8 %v3345
        %v3347 = vlaneseq
        %v3348 = vshrl.u32 %v3347, 7
        %v3349 = vsub.s32 %v3346, %v3348
        %v3350 = vrot.slane %v3342, %v3349
        %v3352 = vunpack.c.l.s4 1934713408
        %v3353 = vunpack.c.0.s8 %v3352
        %v3354 = vlaneseq
        %v3355 = vshrl.u32 %v3354, 7
        %v3356 = vsub.s32 %v3353, %v3355
        %v3357 = vrot.slane %v3343, %v3356
        %v3358 = vcombine.low %v3302, %v3318
        %v3359 = vcombine.high %v3302, %v3318
        %v3361 = vunpack.c.l.s4 1934713408
        %v3362 = vunpack.c.0.s8 %v3361
        %v3363 = vlaneseq
        %v3364 = vshrl.u32 %v3363, 7
        %v3365 = vsub.s32 %v3362, %v3364
        %v3366 = vrot.slane %v3358, %v3365
        %v3368 = vunpack.c.l.s4 1934713408
        %v3369 = vunpack.c.0.s8 %v3368
        %v3370 = vlaneseq
        %v3371 = vshrl.u32 %v3370, 7
        %v3372 = vsub.s32 %v3369, %v3371
        %v3373 = vrot.slane %v3359, %v3372
        %v3374 = vcombine.low %v3309, %v3325
        %v3375 = vcombine.high %v3309, %v3325
        %v3377 = vunpack.c.l.s4 1934713408
        %v3378 = vunpack.c.0.s8 %v3377
        %v3379 = vlaneseq
        %v3380 = vshrl.u32 %v3379, 7
        %v3381 = vsub.s32 %v3378, %v3380
        %v3382 = vrot.slane %v3374, %v3381
        %v3384 = vunpack.c.l.s4 1934713408
        %v3385 = vunpack.c.0.s8 %v3384
        %v3386 = vlaneseq
        %v3387 = vshrl.u32 %v3386, 7
        %v3388 = vsub.s32 %v3385, %v3387
        %v3389 = vrot.slane %v3375, %v3388
        %v3390 = vcombine.low %v3334, %v3366
        %v3391 = vcombine.high %v3334, %v3366
        %v3392 = vcombine.low %v3341, %v3373
        %v3393 = vcombine.high %v3341, %v3373
        %v3394 = vcombine.low %v3350, %v3382
        %v3395 = vcombine.high %v3350, %v3382
        %v3396 = vcombine.low %v3357, %v3389
        %v3397 = vcombine.high %v3357, %v3389
        %v3398 = vcombine.low %v3246, %v3250
        %v3399 = vcombine.high %v3246, %v3250
        %v3401 = vunpack.c.l.s4 1983009808
        %v3402 = vunpack.c.0.s8 %v3401
        %v3403 = vlaneseq
        %v3404 = vshrl.u32 %v3403, 7
        %v3405 = vsub.s32 %v3402, %v3404
        %v3406 = vrot.slane %v3398, %v3405
        %v3408 = vunpack.c.l.s4 1983009808
        %v3409 = vunpack.c.0.s8 %v3408
        %v3410 = vlaneseq
        %v3411 = vshrl.u32 %v3410, 7
        %v3412 = vsub.s32 %v3409, %v3411
        %v3413 = vrot.slane %v3399, %v3412
        %v3414 = vcombine.low %v3248, %v3252
        %v3415 = vcombine.high %v3248, %v3252
        %v3417 = vunpack.c.l.s4 1983009808
        %v3418 = vunpack.c.0.s8 %v3417
        %v3419 = vlaneseq
        %v3420 = vshrl.u32 %v3419, 7
        %v3421 = vsub.s32 %v3418, %v3420
        %v3422 = vrot.slane %v3414, %v3421
        %v3424 = vunpack.c.l.s4 1983009808
        %v3425 = vunpack.c.0.s8 %v3424
        %v3426 = vlaneseq
        %v3427 = vshrl.u32 %v3426, 7
        %v3428 = vsub.s32 %v3425, %v3427
        %v3429 = vrot.slane %v3415, %v3428
        %v3430 = vcombine.low %v3254, %v3258
        %v3431 = vcombine.high %v3254, %v3258
        %v3433 = vunpack.c.l.s4 1983009808
        %v3434 = vunpack.c.0.s8 %v3433
        %v3435 = vlaneseq
        %v3436 = vshrl.u32 %v3435, 7
        %v3437 = vsub.s32 %v3434, %v3436
        %v3438 = vrot.slane %v3430, %v3437
        %v3440 = vunpack.c.l.s4 1983009808
        %v3441 = vunpack.c.0.s8 %v3440
        %v3442 = vlaneseq
        %v3443 = vshrl.u32 %v3442, 7
        %v3444 = vsub.s32 %v3441, %v3443
        %v3445 = vrot.slane %v3431, %v3444
        %v3446 = vcombine.low %v3256, %v3260
        %v3447 = vcombine.high %v3256, %v3260
        %v3449 = vunpack.c.l.s4 1983009808
        %v3450 = vunpack.c.0.s8 %v3449
        %v3451 = vlaneseq
        %v3452 = vshrl.u32 %v3451, 7
        %v3453 = vsub.s32 %v3450, %v3452
        %v3454 = vrot.slane %v3446, %v3453
        %v3456 = vunpack.c.l.s4 1983009808
        %v3457 = vunpack.c.0.s8 %v3456
        %v3458 = vlaneseq
        %v3459 = vshrl.u32 %v3458, 7
        %v3460 = vsub.s32 %v3457, %v3459
        %v3461 = vrot.slane %v3447, %v3460
        %v3462 = vcombine.low %v3406, %v3422
        %v3463 = vcombine.high %v3406, %v3422
        %v3465 = vunpack.c.l.s4 1934713408
        %v3466 = vunpack.c.0.s8 %v3465
        %v3467 = vlaneseq
        %v3468 = vshrl.u32 %v3467, 7
        %v3469 = vsub.s32 %v3466, %v3468
        %v3470 = vrot.slane %v3462, %v3469
        %v3472 = vunpack.c.l.s4 1934713408
        %v3473 = vunpack.c.0.s8 %v3472
        %v3474 = vlaneseq
        %v3475 = vshrl.u32 %v3474, 7
        %v3476 = vsub.s32 %v3473, %v3475
        %v3477 = vrot.slane %v3463, %v3476
        %v3478 = vcombine.low %v3413, %v3429
        %v3479 = vcombine.high %v3413, %v3429
        %v3481 = vunpack.c.l.s4 1934713408
        %v3482 = vunpack.c.0.s8 %v3481
        %v3483 = vlaneseq
        %v3484 = vshrl.u32 %v3483, 7
        %v3485 = vsub.s32 %v3482, %v3484
        %v3486 = vrot.slane %v3478, %v3485
        %v3488 = vunpack.c.l.s4 1934713408
        %v3489 = vunpack.c.0.s8 %v3488
        %v3490 = vlaneseq
        %v3491 = vshrl.u32 %v3490, 7
        %v3492 = vsub.s32 %v3489, %v3491
        %v3493 = vrot.slane %v3479, %v3492
        %v3494 = vcombine.low %v3438, %v3454
        %v3495 = vcombine.high %v3438, %v3454
        %v3497 = vunpack.c.l.s4 1934713408
        %v3498 = vunpack.c.0.s8 %v3497
        %v3499 = vlaneseq
        %v3500 = vshrl.u32 %v3499, 7
        %v3501 = vsub.s32 %v3498, %v3500
        %v3502 = vrot.slane %v3494, %v3501
        %v3504 = vunpack.c.l.s4 1934713408
        %v3505 = vunpack.c.0.s8 %v3504
        %v3506 = vlaneseq
        %v3507 = vshrl.u32 %v3506, 7
        %v3508 = vsub.s32 %v3505, %v3507
        %v3509 = vrot.slane %v3495, %v3508
        %v3510 = vcombine.low %v3445, %v3461
        %v3511 = vcombine.high %v3445, %v3461
        %v3513 = vunpack.c.l.s4 1934713408
        %v3514 = vunpack.c.0.s8 %v3513
        %v3515 = vlaneseq
        %v3516 = vshrl.u32 %v3515, 7
        %v3517 = vsub.s32 %v3514, %v3516
        %v3518 = vrot.slane %v3510, %v3517
        %v3520 = vunpack.c.l.s4 1934713408
        %v3521 = vunpack.c.0.s8 %v3520
        %v3522 = vlaneseq
        %v3523 = vshrl.u32 %v3522, 7
        %v3524 = vsub.s32 %v3521, %v3523
        %v3525 = vrot.slane %v3511, %v3524
        %v3526 = vcombine.low %v3470, %v3502
        %v3527 = vcombine.high %v3470, %v3502
        %v3528 = vcombine.low %v3477, %v3509
        %v3529 = vcombine.high %v3477, %v3509
        %v3530 = vcombine.low %v3486, %v3518
        %v3531 = vcombine.high %v3486, %v3518
        %v3532 = vcombine.low %v3493, %v3525
        %v3533 = vcombine.high %v3493, %v3525
        %v3534 = vcombine.low %v3231, %v3235
        %v3535 = vcombine.high %v3231, %v3235
        %v3537 = vunpack.c.l.s4 1983009808
        %v3538 = vunpack.c.0.s8 %v3537
        %v3539 = vlaneseq
        %v3540 = vshrl.u32 %v3539, 7
        %v3541 = vsub.s32 %v3538, %v3540
        %v3542 = vrot.slane %v3534, %v3541
        %v3544 = vunpack.c.l.s4 1983009808
        %v3545 = vunpack.c.0.s8 %v3544
        %v3546 = vlaneseq
        %v3547 = vshrl.u32 %v3546, 7
        %v3548 = vsub.s32 %v3545, %v3547
        %v3549 = vrot.slane %v3535, %v3548
        %v3550 = vcombine.low %v3233, %v3237
        %v3551 = vcombine.high %v3233, %v3237
        %v3553 = vunpack.c.l.s4 1983009808
        %v3554 = vunpack.c.0.s8 %v3553
        %v3555 = vlaneseq
        %v3556 = vshrl.u32 %v3555, 7
        %v3557 = vsub.s32 %v3554, %v3556
        %v3558 = vrot.slane %v3550, %v3557
        %v3560 = vunpack.c.l.s4 1983009808
        %v3561 = vunpack.c.0.s8 %v3560
        %v3562 = vlaneseq
        %v3563 = vshrl.u32 %v3562, 7
        %v3564 = vsub.s32 %v3561, %v3563
        %v3565 = vrot.slane %v3551, %v3564
        %v3566 = vcombine.low %v3239, %v3243
        %v3567 = vcombine.high %v3239, %v3243
        %v3569 = vunpack.c.l.s4 1983009808
        %v3570 = vunpack.c.0.s8 %v3569
        %v3571 = vlaneseq
        %v3572 = vshrl.u32 %v3571, 7
        %v3573 = vsub.s32 %v3570, %v3572
        %v3574 = vrot.slane %v3566, %v3573
        %v3576 = vunpack.c.l.s4 1983009808
        %v3577 = vunpack.c.0.s8 %v3576
        %v3578 = vlaneseq
        %v3579 = vshrl.u32 %v3578, 7
        %v3580 = vsub.s32 %v3577, %v3579
        %v3581 = vrot.slane %v3567, %v3580
        %v3582 = vcombine.low %v3241, %v3245
        %v3583 = vcombine.high %v3241, %v3245
        %v3585 = vunpack.c.l.s4 1983009808
        %v3586 = vunpack.c.0.s8 %v3585
        %v3587 = vlaneseq
        %v3588 = vshrl.u32 %v3587, 7
        %v3589 = vsub.s32 %v3586, %v3588
        %v3590 = vrot.slane %v3582, %v3589
        %v3592 = vunpack.c.l.s4 1983009808
        %v3593 = vunpack.c.0.s8 %v3592
        %v3594 = vlaneseq
        %v3595 = vshrl.u32 %v3594, 7
        %v3596 = vsub.s32 %v3593, %v3595
        %v3597 = vrot.slane %v3583, %v3596
        %v3598 = vcombine.low %v3542, %v3558
        %v3599 = vcombine.high %v3542, %v3558
        %v3601 = vunpack.c.l.s4 1934713408
        %v3602 = vunpack.c.0.s8 %v3601
        %v3603 = vlaneseq
        %v3604 = vshrl.u32 %v3603, 7
        %v3605 = vsub.s32 %v3602, %v3604
        %v3606 = vrot.slane %v3598, %v3605
        %v3608 = vunpack.c.l.s4 1934713408
        %v3609 = vunpack.c.0.s8 %v3608
        %v3610 = vlaneseq
        %v3611 = vshrl.u32 %v3610, 7
        %v3612 = vsub.s32 %v3609, %v3611
        %v3613 = vrot.slane %v3599, %v3612
        %v3614 = vcombine.low %v3549, %v3565
        %v3615 = vcombine.high %v3549, %v3565
        %v3617 = vunpack.c.l.s4 1934713408
        %v3618 = vunpack.c.0.s8 %v3617
        %v3619 = vlaneseq
        %v3620 = vshrl.u32 %v3619, 7
        %v3621 = vsub.s32 %v3618, %v3620
        %v3622 = vrot.slane %v3614, %v3621
        %v3624 = vunpack.c.l.s4 1934713408
        %v3625 = vunpack.c.0.s8 %v3624
        %v3626 = vlaneseq
        %v3627 = vshrl.u32 %v3626, 7
        %v3628 = vsub.s32 %v3625, %v3627
        %v3629 = vrot.slane %v3615, %v3628
        %v3630 = vcombine.low %v3574, %v3590
        %v3631 = vcombine.high %v3574, %v3590
        %v3633 = vunpack.c.l.s4 1934713408
        %v3634 = vunpack.c.0.s8 %v3633
        %v3635 = vlaneseq
        %v3636 = vshrl.u32 %v3635, 7
        %v3637 = vsub.s32 %v3634, %v3636
        %v3638 = vrot.slane %v3630, %v3637
        %v3640 = vunpack.c.l.s4 1934713408
        %v3641 = vunpack.c.0.s8 %v3640
        %v3642 = vlaneseq
        %v3643 = vshrl.u32 %v3642, 7
        %v3644 = vsub.s32 %v3641, %v3643
        %v3645 = vrot.slane %v3631, %v3644
        %v3646 = vcombine.low %v3581, %v3597
        %v3647 = vcombine.high %v3581, %v3597
        %v3649 = vunpack.c.l.s4 1934713408
        %v3650 = vunpack.c.0.s8 %v3649
        %v3651 = vlaneseq
        %v3652 = vshrl.u32 %v3651, 7
        %v3653 = vsub.s32 %v3650, %v3652
        %v3654 = vrot.slane %v3646, %v3653
        %v3656 = vunpack.c.l.s4 1934713408
        %v3657 = vunpack.c.0.s8 %v3656
        %v3658 = vlaneseq
        %v3659 = vshrl.u32 %v3658, 7
        %v3660 = vsub.s32 %v3657, %v3659
        %v3661 = vrot.slane %v3647, %v3660
        %v3662 = vcombine.low %v3606, %v3638
        %v3663 = vcombine.high %v3606, %v3638
        %v3664 = vcombine.low %v3613, %v3645
        %v3665 = vcombine.high %v3613, %v3645
        %v3666 = vcombine.low %v3622, %v3654
        %v3667 = vcombine.high %v3622, %v3654
        %v3668 = vcombine.low %v3629, %v3661
        %v3669 = vcombine.high %v3629, %v3661
        %v3670 = vcombine.low %v3247, %v3251
        %v3671 = vcombine.high %v3247, %v3251
        %v3673 = vunpack.c.l.s4 1983009808
        %v3674 = vunpack.c.0.s8 %v3673
        %v3675 = vlaneseq
        %v3676 = vshrl.u32 %v3675, 7
        %v3677 = vsub.s32 %v3674, %v3676
        %v3678 = vrot.slane %v3670, %v3677
        %v3680 = vunpack.c.l.s4 1983009808
        %v3681 = vunpack.c.0.s8 %v3680
        %v3682 = vlaneseq
        %v3683 = vshrl.u32 %v3682, 7
        %v3684 = vsub.s32 %v3681, %v3683
        %v3685 = vrot.slane %v3671, %v3684
        %v3686 = vcombine.low %v3249, %v3253
        %v3687 = vcombine.high %v3249, %v3253
        %v3689 = vunpack.c.l.s4 1983009808
        %v3690 = vunpack.c.0.s8 %v3689
        %v3691 = vlaneseq
        %v3692 = vshrl.u32 %v3691, 7
        %v3693 = vsub.s32 %v3690, %v3692
        %v3694 = vrot.slane %v3686, %v3693
        %v3696 = vunpack.c.l.s4 1983009808
        %v3697 = vunpack.c.0.s8 %v3696
        %v3698 = vlaneseq
        %v3699 = vshrl.u32 %v3698, 7
        %v3700 = vsub.s32 %v3697, %v3699
        %v3701 = vrot.slane %v3687, %v3700
        %v3702 = vcombine.low %v3255, %v3259
        %v3703 = vcombine.high %v3255, %v3259
        %v3705 = vunpack.c.l.s4 1983009808
        %v3706 = vunpack.c.0.s8 %v3705
        %v3707 = vlaneseq
        %v3708 = vshrl.u32 %v3707, 7
        %v3709 = vsub.s32 %v3706, %v3708
        %v3710 = vrot.slane %v3702, %v3709
        %v3712 = vunpack.c.l.s4 1983009808
        %v3713 = vunpack.c.0.s8 %v3712
        %v3714 = vlaneseq
        %v3715 = vshrl.u32 %v3714, 7
        %v3716 = vsub.s32 %v3713, %v3715
        %v3717 = vrot.slane %v3703, %v3716
        %v3718 = vcombine.low %v3257, %v3261
        %v3719 = vcombine.high %v3257, %v3261
        %v3721 = vunpack.c.l.s4 1983009808
        %v3722 = vunpack.c.0.s8 %v3721
        %v3723 = vlaneseq
        %v3724 = vshrl.u32 %v3723, 7
        %v3725 = vsub.s32 %v3722, %v3724
        %v3726 = vrot.slane %v3718, %v3725
        %v3728 = vunpack.c.l.s4 1983009808
        %v3729 = vunpack.c.0.s8 %v3728
        %v3730 = vlaneseq
        %v3731 = vshrl.u32 %v3730, 7
        %v3732 = vsub.s32 %v3729, %v3731
        %v3733 = vrot.slane %v3719, %v3732
        %v3734 = vcombine.low %v3678, %v3694
        %v3735 = vcombine.high %v3678, %v3694
        %v3737 = vunpack.c.l.s4 1934713408
        %v3738 = vunpack.c.0.s8 %v3737
        %v3739 = vlaneseq
        %v3740 = vshrl.u32 %v3739, 7
        %v3741 = vsub.s32 %v3738, %v3740
        %v3742 = vrot.slane %v3734, %v3741
        %v3744 = vunpack.c.l.s4 1934713408
        %v3745 = vunpack.c.0.s8 %v3744
        %v3746 = vlaneseq
        %v3747 = vshrl.u32 %v3746, 7
        %v3748 = vsub.s32 %v3745, %v3747
        %v3749 = vrot.slane %v3735, %v3748
        %v3750 = vcombine.low %v3685, %v3701
        %v3751 = vcombine.high %v3685, %v3701
        %v3753 = vunpack.c.l.s4 1934713408
        %v3754 = vunpack.c.0.s8 %v3753
        %v3755 = vlaneseq
        %v3756 = vshrl.u32 %v3755, 7
        %v3757 = vsub.s32 %v3754, %v3756
        %v3758 = vrot.slane %v3750, %v3757
        %v3760 = vunpack.c.l.s4 1934713408
        %v3761 = vunpack.c.0.s8 %v3760
        %v3762 = vlaneseq
        %v3763 = vshrl.u32 %v3762, 7
        %v3764 = vsub.s32 %v3761, %v3763
        %v3765 = vrot.slane %v3751, %v3764
        %v3766 = vcombine.low %v3710, %v3726
        %v3767 = vcombine.high %v3710, %v3726
        %v3769 = vunpack.c.l.s4 1934713408
        %v3770 = vunpack.c.0.s8 %v3769
        %v3771 = vlaneseq
        %v3772 = vshrl.u32 %v3771, 7
        %v3773 = vsub.s32 %v3770, %v3772
        %v3774 = vrot.slane %v3766, %v3773
        %v3776 = vunpack.c.l.s4 1934713408
        %v3777 = vunpack.c.0.s8 %v3776
        %v3778 = vlaneseq
        %v3779 = vshrl.u32 %v3778, 7
        %v3780 = vsub.s32 %v3777, %v3779
        %v3781 = vrot.slane %v3767, %v3780
        %v3782 = vcombine.low %v3717, %v3733
        %v3783 = vcombine.high %v3717, %v3733
        %v3785 = vunpack.c.l.s4 1934713408
        %v3786 = vunpack.c.0.s8 %v3785
        %v3787 = vlaneseq
        %v3788 = vshrl.u32 %v3787, 7
        %v3789 = vsub.s32 %v3786, %v3788
        %v3790 = vrot.slane %v3782, %v3789
        %v3792 = vunpack.c.l.s4 1934713408
        %v3793 = vunpack.c.0.s8 %v3792
        %v3794 = vlaneseq
        %v3795 = vshrl.u32 %v3794, 7
        %v3796 = vsub.s32 %v3793, %v3795
        %v3797 = vrot.slane %v3783, %v3796
        %v3798 = vcombine.low %v3742, %v3774
        %v3799 = vcombine.high %v3742, %v3774
        %v3800 = vcombine.low %v3749, %v3781
        %v3801 = vcombine.high %v3749, %v3781
        %v3802 = vcombine.low %v3758, %v3790
        %v3803 = vcombine.high %v3758, %v3790
        %v3804 = vcombine.low %v3765, %v3797
        %v3805 = vcombine.high %v3765, %v3797
        %3808 = vrot.lane.b32.xlu0 %v3391, 8
        %v3809 = vpop.permute.xlu0 %3808
        %3810 = vrot.lane.b32.xlu0 %v3527, 8
        %v3811 = vpop.permute.xlu0 %3810
        %3816 = vrot.lane.b32.xlu0 %v3392, 16
        %v3817 = vpop.permute.xlu0 %3816
        %3818 = vrot.lane.b32.xlu0 %v3528, 16
        %v3819 = vpop.permute.xlu0 %3818
        %3824 = vrot.lane.b32.xlu0 %v3393, 24
        %v3825 = vpop.permute.xlu0 %3824
        %3826 = vrot.lane.b32.xlu0 %v3529, 24
        %v3827 = vpop.permute.xlu0 %3826
        %3832 = vrot.lane.b32.xlu0 %v3394, 32
        %v3833 = vpop.permute.xlu0 %3832
        %3834 = vrot.lane.b32.xlu0 %v3530, 32
        %v3835 = vpop.permute.xlu0 %3834
        %3840 = vrot.lane.b32.xlu0 %v3395, 40
        %v3841 = vpop.permute.xlu0 %3840
        %3842 = vrot.lane.b32.xlu0 %v3531, 40
        %v3843 = vpop.permute.xlu0 %3842
        %3848 = vrot.lane.b32.xlu0 %v3396, 48
        %v3849 = vpop.permute.xlu0 %3848
        %3850 = vrot.lane.b32.xlu0 %v3532, 48
        %v3851 = vpop.permute.xlu0 %3850
        %3856 = vrot.lane.b32.xlu0 %v3397, 56
        %v3857 = vpop.permute.xlu0 %3856
        %3858 = vrot.lane.b32.xlu0 %v3533, 56
        %v3859 = vpop.permute.xlu0 %3858
        %3864 = vrot.lane.b32.xlu0 %v3662, 64
        %v3865 = vpop.permute.xlu0 %3864
        %3866 = vrot.lane.b32.xlu0 %v3798, 64
        %v3867 = vpop.permute.xlu0 %3866
        %3872 = vrot.lane.b32.xlu0 %v3663, 72
        %v3873 = vpop.permute.xlu0 %3872
        %3874 = vrot.lane.b32.xlu0 %v3799, 72
        %v3875 = vpop.permute.xlu0 %3874
        %3880 = vrot.lane.b32.xlu0 %v3664, 80
        %v3881 = vpop.permute.xlu0 %3880
        %3882 = vrot.lane.b32.xlu0 %v3800, 80
        %v3883 = vpop.permute.xlu0 %3882
        %3888 = vrot.lane.b32.xlu0 %v3665, 88
        %v3889 = vpop.permute.xlu0 %3888
        %3890 = vrot.lane.b32.xlu0 %v3801, 88
        %v3891 = vpop.permute.xlu0 %3890
        %3896 = vrot.lane.b32.xlu0 %v3666, 96
        %v3897 = vpop.permute.xlu0 %3896
        %3898 = vrot.lane.b32.xlu0 %v3802, 96
        %v3899 = vpop.permute.xlu0 %3898
        %3904 = vrot.lane.b32.xlu0 %v3667, 104
        %v3905 = vpop.permute.xlu0 %3904
        %3906 = vrot.lane.b32.xlu0 %v3803, 104
        %v3907 = vpop.permute.xlu0 %3906
        %3912 = vrot.lane.b32.xlu0 %v3668, 112
        %v3913 = vpop.permute.xlu0 %3912
        %3914 = vrot.lane.b32.xlu0 %v3804, 112
        %v3915 = vpop.permute.xlu0 %3914
        %3920 = vrot.lane.b32.xlu0 %v3669, 120
        %v3921 = vpop.permute.xlu0 %3920
        %3922 = vrot.lane.b32.xlu0 %v3805, 120
        %v3923 = vpop.permute.xlu0 %3922
        %vm3926 = vcmask 64512
        %v3927 = vsel %vm3926, %v3390, %v3809
        %v3928 = vsel %vm3926, %v3526, %v3811
        %v3929 = vsel %vm977, %v3927, %v3817
        %v3930 = vsel %vm977, %v3928, %v3819
        %vm3931 = vcmask 195584
        %v3932 = vsel %vm3931, %v3929, %v3825
        %v3933 = vsel %vm3931, %v3930, %v3827
        %vm3934 = vcmask 261120
        %v3935 = vsel %vm3934, %v3932, %v3833
        %v3936 = vsel %vm3934, %v3933, %v3835
        %vm3937 = vcmask 326656
        %v3938 = vsel %vm3937, %v3935, %v3841
        %v3939 = vsel %vm3937, %v3936, %v3843
        %vm3940 = vcmask 392192
        %v3941 = vsel %vm3940, %v3938, %v3849
        %v3942 = vsel %vm3940, %v3939, %v3851
        %vm3943 = vcmask 457728
        %v3944 = vsel %vm3943, %v3941, %v3857
        %v3945 = vsel %vm3943, %v3942, %v3859
        %vm3946 = vcmask 523264
        %v3947 = vsel %vm3946, %v3944, %v3865
        %v3948 = vsel %vm3946, %v3945, %v3867
        %vm3949 = vcmask 588800
        %v3950 = vsel %vm3949, %v3947, %v3873
        %v3951 = vsel %vm3949, %v3948, %v3875
        %vm3952 = vcmask 654336
        %v3953 = vsel %vm3952, %v3950, %v3881
        %v3954 = vsel %vm3952, %v3951, %v3883
        %vm3955 = vcmask 719872
        %v3956 = vsel %vm3955, %v3953, %v3889
        %v3957 = vsel %vm3955, %v3954, %v3891
        %vm3958 = vcmask 785408
        %v3959 = vsel %vm3958, %v3956, %v3897
        %v3960 = vsel %vm3958, %v3957, %v3899
        %vm3961 = vcmask 850944
        %v3962 = vsel %vm3961, %v3959, %v3905
        %v3963 = vsel %vm3961, %v3960, %v3907
        %vm3964 = vcmask 916480
        %v3965 = vsel %vm3964, %v3962, %v3913
        %v3966 = vsel %vm3964, %v3963, %v3915
        %vm3967 = vcmask 982016
        %v3968 = vsel %vm3967, %v3965, %v3921
        %v3969 = vsel %vm3967, %v3966, %v3923
        %3970 = vst [vmem:[%s203] sm:$0xff] %v3968
        %3971 = vst [vmem:[%s203 + $0x8] sm:$0xff] %v3969
        %s3972 = sand.u32 %s97, 1
        %s3973 = scalar_lea.sflag [#allocation4], %s3972
        %s3974 = sand.u32 %s97, 1
        %s3975 = smul.addr %s3974, 16
        %s3976 = scalar_lea.vmem [#allocation7], %s3975
        // Predicated region
        $region41: #{tpu_custom_call.1} parent=31 // pred_check
          %p3977 = pneg %p107
        $region42: #{tpu_custom_call.1} parent=31 // pred_check_branch
          %3979 = sbr.rel (%p3977) target = $region44
        $region43: #{tpu_custom_call.1} parent=31 // pred_region
          %s3980 = smul.u32 2, %s21
          %s3982 = ssub.s32 256, 256
          %3983 = vsyncadd %s3973, %s3982
          %s3984 = smul.addr %s3980, 128
          %s3985 = scalar_lea.hbm %s3, %s3984
          %s3986 = sshll.u32 %s3976, 4
          %s3987 = int_to_ptr.vmem [resolvable:$true] %s3986
          %3992 = dma.vmem_to_hbm [thread:$0]  %s3987, 256, %s3985, %s3973, 128, 128, 8
        $region44: #{tpu_custom_call.1} parent=31 // pred_fallthru
          _
      $region32: #{tpu_custom_call.1} parent=5 // pred_fallthru
        _
      %p3993 = scmp.le.s32.totalorder 2, %s16
      // Predicated region
      $region45: #{tpu_custom_call.1} parent=5 // pred_check
        %p3994 = pneg %p3993
      $region46: #{tpu_custom_call.1} parent=5 // pred_check_branch
        %3996 = sbr.rel (%p3994) target = $region48
      $region47: #{tpu_custom_call.1} parent=5 // pred_region
        %s3997 = ssub.s32 %s16, 2
        // Predicated region
        $region49: #{tpu_custom_call.1} parent=47 // pred_check
          %p3998 = pneg %p113
        $region50: #{tpu_custom_call.1} parent=47 // pred_check_branch
          %4000 = sbr.rel (%p3998) target = $region52
        $region51: #{tpu_custom_call.1} parent=47 // pred_region
          %s4001 = sand.u32 %s98, 1
          %s4002 = scalar_lea.sflag [#allocation4], %s4001
          %s4003 = sand.u32 %s98, 1
          %s4004 = smul.addr %s4003, 16
          %s4005 = scalar_lea.vmem [#allocation7], %s4004
          %4006 = dma.done %s4002, 256
        $region52: #{tpu_custom_call.1} parent=47 // pred_fallthru
          _
      $region48: #{tpu_custom_call.1} parent=5 // pred_fallthru
        _
    $region6: #{tpu_custom_call.1} parent=1 // loop_footer
      %s20 = sadd.s32 1, %s16
    $region7: #{tpu_custom_call.1} parent=1 // loop_footer_branch
      %15 = sbr.rel target = $region3
    $region8: #{tpu_custom_call.1} parent=1 // loop_exit
      _
    %4007 = vsyncpa [#allocation3], 1
    %s4008 = scalar_lea.sflag [#allocation3], 1
    %4009 = vsyncpa %s4008, 1
    %4010 = vsyncpa [#allocation6], 1
    %4011 = vsyncpa [#allocation4], 1
    %s4012 = scalar_lea.sflag [#allocation4], 1
    %4013 = vsyncpa %s4012, 1

</llo_original>
